<compile_context>
chip_gen: v5e
topology: v5e:2x2
jax: 0.10.0
libtpu: 0.0.40
codegen_flags: <defaults>
</compile_context>

<pallas_src>
import functools

import jax
import jax.numpy as jnp
from jax.experimental import pallas as pl
from jax.experimental.pallas import tpu as pltpu

EPS = 1e-5
LANES = 128


def _round_up(x, m):
    return (x + m - 1) // m * m


def _pad_to(a, size, axis):
    if a.shape[axis] == size:
        return a
    pad = [(0, 0)] * a.ndim
    pad[axis] = (0, size - a.shape[axis])
    return jnp.pad(a, pad)


@functools.lru_cache(maxsize=None)
def _vmem_limit_bytes():
    # Generation-aware scoped-VMEM budget: ~half of physical (v5e/v6e -> 64 MiB of 128,
    # v7x -> 32 MiB of 64).  Falls back to 32 MiB if the query is unavailable.
    try:
        cap = getattr(pltpu.get_tpu_info(), "vmem_capacity_bytes", None)
        if cap:
            return int(max(32 * 1024 * 1024, min(int(cap) // 2, 96 * 1024 * 1024)))
    except Exception:
        pass
    return 32 * 1024 * 1024


def _compiler_params():
    return pltpu.CompilerParams(dimension_semantics=("parallel",),
                                vmem_limit_bytes=_vmem_limit_bytes())


# ---------------------------------------------------------------------------
# XLA glue: spatial pad + stride-phase decomposition (so the kernel only needs
# contiguous, fully static slices for every tap at any stride).
# ---------------------------------------------------------------------------
def _phase_decompose(x_bf, stride):
    """(N,H,W,C) -> (N, s*s, Hq, Wq, C) with xph[:, ry*s+rx, i, j] = pad(x)[:, i*s+ry, j*s+rx]."""
    n, h, w, c = x_bf.shape
    hq = -(-(h + 2) // stride)
    wq = -(-(w + 2) // stride)
    xp = jnp.pad(x_bf, ((0, 0), (1, hq * stride - h - 1), (1, wq * stride - w - 1), (0, 0)))
    xph = xp.reshape(n, hq, stride, wq, stride, c).transpose(0, 2, 4, 1, 3, 5)
    return xph.reshape(n, stride * stride, hq, wq, c), hq, wq


def _scale_shift(st, gamma, beta, count, c_pad):
    """Reduce per-image (sum, sumsq) partials into folded BN scale/shift (2, c_pad)."""
    ssum = jnp.sum(st[:, 0, :], axis=0)
    ssq = jnp.sum(st[:, 1, :], axis=0)
    mean = ssum / count
    var = jnp.maximum(ssq / count - mean * mean, 0.0)
    g = _pad_to(gamma.astype(jnp.float32), c_pad, 0)   # zero-padded channels -> scale 0
    b = _pad_to(beta.astype(jnp.float32), c_pad, 0)
    scale = g * jax.lax.rsqrt(var + EPS)
    shift = b - mean * scale
    return jnp.stack([scale, shift], axis=0)


# ---------------------------------------------------------------------------
# Pallas kernels
# ---------------------------------------------------------------------------
def _make_conv1_kernel(stride, cin, cpad, ho, wo, has_proj):
    """conv1 (3x3, stride s) [+ fused 1x1 projection shortcut], in-kernel tap extraction."""
    def kernel(*refs):
        if has_proj:
            x_ref, w1_ref, ws_ref, y1_ref, st1_ref, s_ref, sts_ref = refs
        else:
            x_ref, w1_ref, y1_ref, st1_ref = refs
        acc = jnp.zeros((ho * wo, cpad), jnp.float32)
        for dy in range(3):
            for dx in range(3):
                p = (dy % stride) * stride + (dx % stride)
                qy, qx = dy // stride, dx // stride
                k = 3 * dy + dx
                tap = x_ref[p, qy:qy + ho, qx:qx + wo, :].reshape(ho * wo, cin)
                acc = acc + jnp.dot(tap, w1_ref[k * cin:(k + 1) * cin, :],
                                    preferred_element_type=jnp.float32)
        y1_ref[...] = acc.reshape(ho, wo, cpad).astype(y1_ref.dtype)
        st1_ref[0:1, :] = jnp.sum(acc, axis=0, keepdims=True)
        st1_ref[1:2, :] = jnp.sum(acc * acc, axis=0, keepdims=True)
        if has_proj:
            p = (1 % stride) * stride + (1 % stride)
            q = 1 // stride
            xs = x_ref[p, q:q + ho, q:q + wo, :].reshape(ho * wo, cin)
            sacc = jnp.dot(xs, ws_ref[...], preferred_element_type=jnp.float32)
            s_ref[...] = sacc.reshape(ho, wo, cpad).astype(s_ref.dtype)
            sts_ref[0:1, :] = jnp.sum(sacc, axis=0, keepdims=True)
            sts_ref[1:2, :] = jnp.sum(sacc * sacc, axis=0, keepdims=True)
    return kernel


def _make_conv2_kernel(cpad, ho, wo):
    """conv2 (3x3, stride 1); BN1+ReLU and the zero halo are fused into the input slab."""
    hp, wp = ho + 2, wo + 2

    def kernel(y1_ref, w2_ref, scsh1_ref, y2_ref, st2_ref, slab_ref):
        sc = scsh1_ref[0:1, :].reshape(1, 1, cpad)
        sh = scsh1_ref[1:2, :].reshape(1, 1, cpad)
        slab_ref[...] = jnp.zeros((hp, wp, cpad), jnp.bfloat16)          # zero halo
        slab_ref[1:ho + 1, 1:wo + 1, :] = jnp.maximum(
            y1_ref[...].astype(jnp.float32) * sc + sh, 0.0).astype(jnp.bfloat16)
        acc = jnp.zeros((ho * wo, cpad), jnp.float32)
        for dy in range(3):
            for dx in range(3):
                k = 3 * dy + dx
                tap = slab_ref[dy:dy + ho, dx:dx + wo, :].reshape(ho * wo, cpad)
                acc = acc + jnp.dot(tap, w2_ref[k * cpad:(k + 1) * cpad, :],
                                    preferred_element_type=jnp.float32)
        y2_ref[...] = acc.reshape(ho, wo, cpad).astype(y2_ref.dtype)
        st2_ref[0:1, :] = jnp.sum(acc, axis=0, keepdims=True)
        st2_ref[1:2, :] = jnp.sum(acc * acc, axis=0, keepdims=True)
    return kernel


def _make_add_proj_kernel(cpad):
    """BN2(left) + BN_s(projection shortcut) + add + ReLU."""
    def kernel(y2_ref, s_ref, a_ref, b_ref, o_ref):
        asc = a_ref[0:1, :].reshape(1, 1, cpad)
        ash = a_ref[1:2, :].reshape(1, 1, cpad)
        bsc = b_ref[0:1, :].reshape(1, 1, cpad)
        bsh = b_ref[1:2, :].reshape(1, 1, cpad)
        left = y2_ref[...].astype(jnp.float32) * asc + ash
        right = s_ref[...].astype(jnp.float32) * bsc + bsh
        o_ref[...] = jnp.maximum(left + right, 0.0)
    return kernel


def _make_add_identity_kernel(cout):
    """BN2(left) + identity shortcut (raw bf16 x, no channel padding) + add + ReLU."""
    def kernel(y2_ref, x_ref, a_ref, o_ref):
        asc = a_ref[0:1, :].reshape(1, 1, cout)
        ash = a_ref[1:2, :].reshape(1, 1, cout)
        left = y2_ref[:, :, :cout].astype(jnp.float32) * asc + ash
        o_ref[...] = jnp.maximum(left + x_ref[...].astype(jnp.float32), 0.0)
    return kernel


# ---------------------------------------------------------------------------
# pallas_call wrappers (grid over images; weights / scale-shift stay resident)
# ---------------------------------------------------------------------------
def _conv1_call(xph, w1, ws, stride, cin, cpad, ho, wo, n):
    has_proj = ws is not None
    hq, wq = xph.shape[2], xph.shape[3]
    rows = n * ho * wo
    in_specs = [
        pl.BlockSpec((None, stride * stride, hq, wq, cin), lambda i: (i, 0, 0, 0, 0)),
        pl.BlockSpec((9 * cin, cpad), lambda i: (0, 0)),          # grid-invariant weights
    ]
    operands = [xph, w1]
    out_shape = [jax.ShapeDtypeStruct((n, ho, wo, cpad), jnp.bfloat16),
                 jax.ShapeDtypeStruct((n, 2, cpad), jnp.float32)]
    out_specs = [pl.BlockSpec((None, ho, wo, cpad), lambda i: (i, 0, 0, 0)),
                 pl.BlockSpec((None, 2, cpad), lambda i: (i, 0, 0))]
    flops = 2 * rows * 9 * cin * cpad
    nbytes = xph.size * 2 + w1.size * 2 + rows * cpad * 2 + n * 2 * cpad * 4
    if has_proj:
        in_specs.append(pl.BlockSpec((cin, cpad), lambda i: (0, 0)))
        operands.append(ws)
        out_shape += [jax.ShapeDtypeStruct((n, ho, wo, cpad), jnp.bfloat16),
                      jax.ShapeDtypeStruct((n, 2, cpad), jnp.float32)]
        out_specs += [pl.BlockSpec((None, ho, wo, cpad), lambda i: (i, 0, 0, 0)),
                      pl.BlockSpec((None, 2, cpad), lambda i: (i, 0, 0))]
        flops += 2 * rows * cin * cpad
        nbytes += ws.size * 2 + rows * cpad * 2 + n * 2 * cpad * 4
    return pl.pallas_call(
        _make_conv1_kernel(stride, cin, cpad, ho, wo, has_proj),
        grid=(n,), in_specs=in_specs, out_specs=out_specs, out_shape=out_shape,
        compiler_params=_compiler_params(),
        cost_estimate=pl.CostEstimate(flops=int(flops), transcendentals=0,
                                      bytes_accessed=int(nbytes)),
    )(*operands)


def _conv2_call(y1_raw, w2, scsh1, cpad, ho, wo, n):
    hp, wp = ho + 2, wo + 2
    rows = n * ho * wo
    nbytes = rows * cpad * 2 + 9 * cpad * cpad * 2 + 2 * cpad * 4 + rows * cpad * 2 + n * 2 * cpad * 4
    return pl.pallas_call(
        _make_conv2_kernel(cpad, ho, wo),
        grid=(n,),
        in_specs=[pl.BlockSpec((None, ho, wo, cpad), lambda i: (i, 0, 0, 0)),
                  pl.BlockSpec((9 * cpad, cpad), lambda i: (0, 0)),
                  pl.BlockSpec((2, cpad), lambda i: (0, 0))],
        out_specs=[pl.BlockSpec((None, ho, wo, cpad), lambda i: (i, 0, 0, 0)),
                   pl.BlockSpec((None, 2, cpad), lambda i: (i, 0, 0))],
        out_shape=[jax.ShapeDtypeStruct((n, ho, wo, cpad), jnp.bfloat16),
                   jax.ShapeDtypeStruct((n, 2, cpad), jnp.float32)],
        scratch_shapes=[pltpu.VMEM((hp, wp, cpad), jnp.bfloat16)],
        compiler_params=_compiler_params(),
        cost_estimate=pl.CostEstimate(flops=int(2 * rows * 9 * cpad * cpad),
                                      transcendentals=0, bytes_accessed=int(nbytes)),
    )(y1_raw, w2, scsh1)


def _add_proj_call(y2_raw, s_raw, scsh2, scsh_s, cpad, ho, wo, n):
    return pl.pallas_call(
        _make_add_proj_kernel(cpad),
        grid=(n,),
        in_specs=[pl.BlockSpec((None, ho, wo, cpad), lambda i: (i, 0, 0, 0)),
                  pl.BlockSpec((None, ho, wo, cpad), lambda i: (i, 0, 0, 0)),
                  pl.BlockSpec((2, cpad), lambda i: (0, 0)),
                  pl.BlockSpec((2, cpad), lambda i: (0, 0))],
        out_specs=pl.BlockSpec((None, ho, wo, cpad), lambda i: (i, 0, 0, 0)),
        out_shape=jax.ShapeDtypeStruct((n, ho, wo, cpad), jnp.float32),
        compiler_params=_compiler_params(),
    )(y2_raw, s_raw, scsh2, scsh_s)


def _add_identity_call(y2_raw, x_bf, scsh2c, cpad, cout, ho, wo, n):
    return pl.pallas_call(
        _make_add_identity_kernel(cout),
        grid=(n,),
        in_specs=[pl.BlockSpec((None, ho, wo, cpad), lambda i: (i, 0, 0, 0)),
                  pl.BlockSpec((None, ho, wo, cout), lambda i: (i, 0, 0, 0)),
                  pl.BlockSpec((2, cout), lambda i: (0, 0))],
        out_specs=pl.BlockSpec((None, ho, wo, cout), lambda i: (i, 0, 0, 0)),
        out_shape=jax.ShapeDtypeStruct((n, ho, wo, cout), jnp.float32),
        compiler_params=_compiler_params(),
    )(y2_raw, x_bf, scsh2c)


# ---------------------------------------------------------------------------
# Parameters + forward
# ---------------------------------------------------------------------------
def init_resblock_params(key, inchannel, outchannel, stride=1):
    ks = jax.random.split(key, 9)

    def conv_w(k, cout, cin, kh, kw):
        fan_in = cin * kh * kw
        return jax.random.normal(k, (cout, cin, kh, kw), jnp.float32) * jnp.sqrt(2.0 / fan_in)

    p = {
        "w1": conv_w(ks[0], outchannel, inchannel, 3, 3),
        "g1": 1.0 + 0.1 * jax.random.normal(ks[1], (outchannel,), jnp.float32),
        "b1": 0.1 * jax.random.normal(ks[2], (outchannel,), jnp.float32),
        "w2": conv_w(ks[3], outchannel, outchannel, 3, 3),
        "g2": 1.0 + 0.1 * jax.random.normal(ks[4], (outchannel,), jnp.float32),
        "b2": 0.1 * jax.random.normal(ks[5], (outchannel,), jnp.float32),
    }
    if stride != 1 or inchannel != outchannel:
        p["ws"] = conv_w(ks[6], outchannel, inchannel, 1, 1)
        p["gs"] = 1.0 + 0.1 * jax.random.normal(ks[7], (outchannel,), jnp.float32)
        p["bs"] = 0.1 * jax.random.normal(ks[8], (outchannel,), jnp.float32)
    return p


def resblock_forward(params, x_nchw, stride=1):
    """Pallas ResBlock forward.  NCHW in/out (PyTorch convention), training-mode BN."""
    x = jnp.transpose(x_nchw, (0, 2, 3, 1)).astype(jnp.float32)      # -> NHWC
    n, h, w, cin = x.shape
    cout = params["w1"].shape[0]
    ho = (h + 2 - 3) // stride + 1
    wo = (w + 2 - 3) // stride + 1
    rows = n * ho * wo
    cpad = _round_up(cout, LANES)
    has_proj = "ws" in params

    x_bf = x.astype(jnp.bfloat16)                  # bf16 MXU inputs; acc/BN stats stay f32
    xph, _, _ = _phase_decompose(x_bf, stride)     # (n, s*s, hq, wq, cin)

    # Weight layouts: tap-major / cin-minor rows x lane-dense cpad columns, bf16.
    w1 = jnp.transpose(params["w1"], (2, 3, 1, 0)).reshape(9 * cin, cout)
    w1 = _pad_to(w1, cpad, 1).astype(jnp.bfloat16)
    w2 = jnp.transpose(params["w2"], (2, 3, 1, 0)).reshape(9, cout, cout)
    w2 = _pad_to(_pad_to(w2, cpad, 2), cpad, 1).reshape(9 * cpad, cpad).astype(jnp.bfloat16)
    ws = None
    if has_proj:
        ws = _pad_to(params["ws"].reshape(cout, cin).T, cpad, 1).astype(jnp.bfloat16)

    # ---- Pass A: conv1 (3x3, stride s) + fused 1x1 projection shortcut + BN partials ----
    outs = _conv1_call(xph, w1, ws, stride, cin, cpad, ho, wo, n)
    if has_proj:
        y1_raw, st1, s_raw, sts = outs
    else:
        y1_raw, st1 = outs
    scsh1 = _scale_shift(st1, params["g1"], params["b1"], rows, cpad)

    # ---- Pass B: conv2 (3x3, stride 1); BN1+ReLU fused into its input slab ----
    y2_raw, st2 = _conv2_call(y1_raw, w2, scsh1, cpad, ho, wo, n)
    scsh2 = _scale_shift(st2, params["g2"], params["b2"], rows, cpad)

    # ---- Pass C: BN2 + shortcut(-BN or identity) + add + ReLU ----
    if has_proj:
        scsh_s = _scale_shift(sts, params["gs"], params["bs"], rows, cpad)
        out = _add_proj_call(y2_raw, s_raw, scsh2, scsh_s, cpad, ho, wo, n)
        out = out[:, :, :, :cout]
    else:
        out = _add_identity_call(y2_raw, x_bf, scsh2[:, :cout], cpad, cout, ho, wo, n)

    # TODO(synk): for stacked blocks keep NHWC (and bf16) between blocks; NCHW f32 is
    # returned only to match the PyTorch module interface.
    return jnp.transpose(out, (0, 3, 1, 2))


# ---------------------------------------------------------------------------
# Pure-JAX reference (for correctness check)
# ---------------------------------------------------------------------------
def resblock_reference(params, x_nchw, stride=1):
    x = x_nchw.astype(jnp.float32)

    def conv(inp, wgt, s, pad):
        return jax.lax.conv_general_dilated(
            inp, wgt, window_strides=(s, s), padding=[(pad, pad), (pad, pad)],
            dimension_numbers=("NCHW", "OIHW", "NCHW"))

    def bn(inp, g, b):
        mean = jnp.mean(inp, axis=(0, 2, 3), keepdims=True)
        var = jnp.mean(jnp.square(inp - mean), axis=(0, 2, 3), keepdims=True)
        return ((inp - mean) * jax.lax.rsqrt(var + EPS)
                * g.reshape(1, -1, 1, 1) + b.reshape(1, -1, 1, 1))

    y = jnp.maximum(bn(conv(x, params["w1"], stride, 1), params["g1"], params["b1"]), 0.0)
    y = bn(conv(y, params["w2"], 1, 1), params["g2"], params["b2"])
    if "ws" in params:
        s = bn(conv(x, params["ws"], stride, 0), params["gs"], params["bs"])
    else:
        s = x
    return jnp.maximum(y + s, 0.0)


if __name__ == "__main__":
    key = jax.random.PRNGKey(0)
    kx, kp, kp2, kp3 = jax.random.split(key, 4)
    # bf16 MXU inputs + bf16 intermediates (f32 accumulation/BN stats) -> loose tolerance.
    TOL = dict(atol=3e-2, rtol=3e-2)

    B, Cin, Cout, H, W = 2, 4, 8, 16, 16
    x = jax.random.normal(kx, (B, Cin, H, W), jnp.float32)

    # Case 1: projection shortcut (inchannel != outchannel), stride=1
    params = init_resblock_params(kp, Cin, Cout, 1)
    out = jax.block_until_ready(resblock_forward(params, x, 1))
    ref = resblock_reference(params, x, 1)
    assert out.shape == (B, Cout, H, W), out.shape
    assert jnp.allclose(out, ref, **TOL), float(jnp.max(jnp.abs(out - ref)))

    # Case 2: identity shortcut (inchannel == outchannel, stride=1)
    params2 = init_resblock_params(kp2, Cout, Cout, 1)
    x2 = jax.random.normal(kx, (B, Cout, H, W), jnp.float32)
    out2 = jax.block_until_ready(resblock_forward(params2, x2, 1))
    ref2 = resblock_reference(params2, x2, 1)
    assert out2.shape == (B, Cout, H, W), out2.shape
    assert jnp.allclose(out2, ref2, **TOL), float(jnp.max(jnp.abs(out2 - ref2)))

    # Case 3: projection shortcut with stride=2 (downsampling block)
    params3 = init_resblock_params(kp3, Cin, Cout, 2)
    out3 = jax.block_until_ready(resblock_forward(params3, x, 2))
    ref3 = resblock_reference(params3, x, 2)
    assert out3.shape == (B, Cout, H // 2, W // 2), out3.shape
    assert jnp.allclose(out3, ref3, **TOL), float(jnp.max(jnp.abs(out3 - ref3)))

    print("KERNEL_OK")
</pallas_src>

<mosaic_0001>
module attributes {stable_mosaic.version = 11 : i64} {
  func.func @kernel(%arg0: i32, %arg1: memref<1x1x18x18x4xbf16, #tpu.memory_space<vmem>>, %arg2: memref<36x128xbf16, #tpu.memory_space<vmem>>, %arg3: memref<4x128xbf16, #tpu.memory_space<vmem>>, %arg4: memref<1x16x16x128xbf16, #tpu.memory_space<vmem>>, %arg5: memref<1x2x128xf32, #tpu.memory_space<vmem>>, %arg6: memref<1x16x16x128xbf16, #tpu.memory_space<vmem>>, %arg7: memref<1x2x128xf32, #tpu.memory_space<vmem>>) attributes {dimension_semantics = [#tpu.dimension_semantics<parallel>], iteration_bounds = array<i64: 2>, scalar_prefetch = 0 : i64, scratch_operands = 0 : i64, tpu.core_type = #tpu.core_type<tc>, window_params = [{transform_indices = @transform_0, window_bounds = array<i64: 1, 1, 18, 18, 4>}, {pipeline_mode = #tpu.pipeline_mode<synchronous>, transform_indices = @transform_1, window_bounds = array<i64: 36, 128>}, {pipeline_mode = #tpu.pipeline_mode<synchronous>, transform_indices = @transform_2, window_bounds = array<i64: 4, 128>}, {transform_indices = @transform_3, window_bounds = array<i64: 1, 16, 16, 128>}, {transform_indices = @transform_4, window_bounds = array<i64: 1, 2, 128>}, {transform_indices = @transform_5, window_bounds = array<i64: 1, 16, 16, 128>}, {transform_indices = @transform_6, window_bounds = array<i64: 1, 2, 128>}]} {
    %cst = arith.constant 0.000000e+00 : f32
    %0 = vector.broadcast %cst : f32 to vector<256x128xf32>
    %c0 = arith.constant 0 : index
    %c0_0 = arith.constant 0 : index
    %c0_1 = arith.constant 0 : index
    %c0_2 = arith.constant 0 : index
    %c0_3 = arith.constant 0 : index
    %1 = vector.load %arg1[%c0, %c0_0, %c0_1, %c0_2, %c0_3] : memref<1x1x18x18x4xbf16, #tpu.memory_space<vmem>>, vector<1x1x16x16x4xbf16>
    %2 = vector.shape_cast %1 : vector<1x1x16x16x4xbf16> to vector<16x16x4xbf16>
    %3 = vector.shape_cast %2 : vector<16x16x4xbf16> to vector<256x4xbf16>
    %c0_4 = arith.constant 0 : index
    %c0_5 = arith.constant 0 : index
    %4 = vector.load %arg2[%c0_4, %c0_5] : memref<36x128xbf16, #tpu.memory_space<vmem>>, vector<4x128xbf16>
    %cst_6 = arith.constant dense<0.000000e+00> : vector<256x128xf32>
    %5 = tpu.matmul %3, %4, %cst_6 {dimension_numbers = #tpu.dot_dimension_numbers<[1], [0], [0], [1], [0, 0, 1, 1], [], []>} : vector<256x4xbf16>, vector<4x128xbf16>, vector<256x128xf32> -> vector<256x128xf32>
    %6 = arith.addf %0, %5 : vector<256x128xf32>
    %c0_7 = arith.constant 0 : index
    %c0_8 = arith.constant 0 : index
    %c0_9 = arith.constant 0 : index
    %c1 = arith.constant 1 : index
    %c0_10 = arith.constant 0 : index
    %7 = vector.load %arg1[%c0_7, %c0_8, %c0_9, %c1, %c0_10] : memref<1x1x18x18x4xbf16, #tpu.memory_space<vmem>>, vector<1x1x16x16x4xbf16>
    %8 = vector.shape_cast %7 : vector<1x1x16x16x4xbf16> to vector<16x16x4xbf16>
    %9 = vector.shape_cast %8 : vector<16x16x4xbf16> to vector<256x4xbf16>
    %c4 = arith.constant 4 : index
    %c0_11 = arith.constant 0 : index
    %10 = vector.load %arg2[%c4, %c0_11] : memref<36x128xbf16, #tpu.memory_space<vmem>>, vector<4x128xbf16>
    %cst_12 = arith.constant dense<0.000000e+00> : vector<256x128xf32>
    %11 = tpu.matmul %9, %10, %cst_12 {dimension_numbers = #tpu.dot_dimension_numbers<[1], [0], [0], [1], [0, 0, 1, 1], [], []>} : vector<256x4xbf16>, vector<4x128xbf16>, vector<256x128xf32> -> vector<256x128xf32>
    %12 = arith.addf %6, %11 : vector<256x128xf32>
    %c0_13 = arith.constant 0 : index
    %c0_14 = arith.constant 0 : index
    %c0_15 = arith.constant 0 : index
    %c2 = arith.constant 2 : index
    %c0_16 = arith.constant 0 : index
    %13 = vector.load %arg1[%c0_13, %c0_14, %c0_15, %c2, %c0_16] : memref<1x1x18x18x4xbf16, #tpu.memory_space<vmem>>, vector<1x1x16x16x4xbf16>
    %14 = vector.shape_cast %13 : vector<1x1x16x16x4xbf16> to vector<16x16x4xbf16>
    %15 = vector.shape_cast %14 : vector<16x16x4xbf16> to vector<256x4xbf16>
    %c8 = arith.constant 8 : index
    %c0_17 = arith.constant 0 : index
    %16 = vector.load %arg2[%c8, %c0_17] : memref<36x128xbf16, #tpu.memory_space<vmem>>, vector<4x128xbf16>
    %cst_18 = arith.constant dense<0.000000e+00> : vector<256x128xf32>
    %17 = tpu.matmul %15, %16, %cst_18 {dimension_numbers = #tpu.dot_dimension_numbers<[1], [0], [0], [1], [0, 0, 1, 1], [], []>} : vector<256x4xbf16>, vector<4x128xbf16>, vector<256x128xf32> -> vector<256x128xf32>
    %18 = arith.addf %12, %17 : vector<256x128xf32>
    %c0_19 = arith.constant 0 : index
    %c0_20 = arith.constant 0 : index
    %c1_21 = arith.constant 1 : index
    %c0_22 = arith.constant 0 : index
    %c0_23 = arith.constant 0 : index
    %19 = vector.load %arg1[%c0_19, %c0_20, %c1_21, %c0_22, %c0_23] : memref<1x1x18x18x4xbf16, #tpu.memory_space<vmem>>, vector<1x1x16x16x4xbf16>
    %20 = vector.shape_cast %19 : vector<1x1x16x16x4xbf16> to vector<16x16x4xbf16>
    %21 = vector.shape_cast %20 : vector<16x16x4xbf16> to vector<256x4xbf16>
    %c12 = arith.constant 12 : index
    %c0_24 = arith.constant 0 : index
    %22 = vector.load %arg2[%c12, %c0_24] : memref<36x128xbf16, #tpu.memory_space<vmem>>, vector<4x128xbf16>
    %cst_25 = arith.constant dense<0.000000e+00> : vector<256x128xf32>
    %23 = tpu.matmul %21, %22, %cst_25 {dimension_numbers = #tpu.dot_dimension_numbers<[1], [0], [0], [1], [0, 0, 1, 1], [], []>} : vector<256x4xbf16>, vector<4x128xbf16>, vector<256x128xf32> -> vector<256x128xf32>
    %24 = arith.addf %18, %23 : vector<256x128xf32>
    %c0_26 = arith.constant 0 : index
    %c0_27 = arith.constant 0 : index
    %c1_28 = arith.constant 1 : index
    %c1_29 = arith.constant 1 : index
    %c0_30 = arith.constant 0 : index
    %25 = vector.load %arg1[%c0_26, %c0_27, %c1_28, %c1_29, %c0_30] : memref<1x1x18x18x4xbf16, #tpu.memory_space<vmem>>, vector<1x1x16x16x4xbf16>
    %26 = vector.shape_cast %25 : vector<1x1x16x16x4xbf16> to vector<16x16x4xbf16>
    %27 = vector.shape_cast %26 : vector<16x16x4xbf16> to vector<256x4xbf16>
    %c16 = arith.constant 16 : index
    %c0_31 = arith.constant 0 : index
    %28 = vector.load %arg2[%c16, %c0_31] : memref<36x128xbf16, #tpu.memory_space<vmem>>, vector<4x128xbf16>
    %cst_32 = arith.constant dense<0.000000e+00> : vector<256x128xf32>
    %29 = tpu.matmul %27, %28, %cst_32 {dimension_numbers = #tpu.dot_dimension_numbers<[1], [0], [0], [1], [0, 0, 1, 1], [], []>} : vector<256x4xbf16>, vector<4x128xbf16>, vector<256x128xf32> -> vector<256x128xf32>
    %30 = arith.addf %24, %29 : vector<256x128xf32>
    %c0_33 = arith.constant 0 : index
    %c0_34 = arith.constant 0 : index
    %c1_35 = arith.constant 1 : index
    %c2_36 = arith.constant 2 : index
    %c0_37 = arith.constant 0 : index
    %31 = vector.load %arg1[%c0_33, %c0_34, %c1_35, %c2_36, %c0_37] : memref<1x1x18x18x4xbf16, #tpu.memory_space<vmem>>, vector<1x1x16x16x4xbf16>
    %32 = vector.shape_cast %31 : vector<1x1x16x16x4xbf16> to vector<16x16x4xbf16>
    %33 = vector.shape_cast %32 : vector<16x16x4xbf16> to vector<256x4xbf16>
    %c20 = arith.constant 20 : index
    %c0_38 = arith.constant 0 : index
    %34 = vector.load %arg2[%c20, %c0_38] : memref<36x128xbf16, #tpu.memory_space<vmem>>, vector<4x128xbf16>
    %cst_39 = arith.constant dense<0.000000e+00> : vector<256x128xf32>
    %35 = tpu.matmul %33, %34, %cst_39 {dimension_numbers = #tpu.dot_dimension_numbers<[1], [0], [0], [1], [0, 0, 1, 1], [], []>} : vector<256x4xbf16>, vector<4x128xbf16>, vector<256x128xf32> -> vector<256x128xf32>
    %36 = arith.addf %30, %35 : vector<256x128xf32>
    %c0_40 = arith.constant 0 : index
    %c0_41 = arith.constant 0 : index
    %c2_42 = arith.constant 2 : index
    %c0_43 = arith.constant 0 : index
    %c0_44 = arith.constant 0 : index
    %37 = vector.load %arg1[%c0_40, %c0_41, %c2_42, %c0_43, %c0_44] : memref<1x1x18x18x4xbf16, #tpu.memory_space<vmem>>, vector<1x1x16x16x4xbf16>
    %38 = vector.shape_cast %37 : vector<1x1x16x16x4xbf16> to vector<16x16x4xbf16>
    %39 = vector.shape_cast %38 : vector<16x16x4xbf16> to vector<256x4xbf16>
    %c24 = arith.constant 24 : index
    %c0_45 = arith.constant 0 : index
    %40 = vector.load %arg2[%c24, %c0_45] : memref<36x128xbf16, #tpu.memory_space<vmem>>, vector<4x128xbf16>
    %cst_46 = arith.constant dense<0.000000e+00> : vector<256x128xf32>
    %41 = tpu.matmul %39, %40, %cst_46 {dimension_numbers = #tpu.dot_dimension_numbers<[1], [0], [0], [1], [0, 0, 1, 1], [], []>} : vector<256x4xbf16>, vector<4x128xbf16>, vector<256x128xf32> -> vector<256x128xf32>
    %42 = arith.addf %36, %41 : vector<256x128xf32>
    %c0_47 = arith.constant 0 : index
    %c0_48 = arith.constant 0 : index
    %c2_49 = arith.constant 2 : index
    %c1_50 = arith.constant 1 : index
    %c0_51 = arith.constant 0 : index
    %43 = vector.load %arg1[%c0_47, %c0_48, %c2_49, %c1_50, %c0_51] : memref<1x1x18x18x4xbf16, #tpu.memory_space<vmem>>, vector<1x1x16x16x4xbf16>
    %44 = vector.shape_cast %43 : vector<1x1x16x16x4xbf16> to vector<16x16x4xbf16>
    %45 = vector.shape_cast %44 : vector<16x16x4xbf16> to vector<256x4xbf16>
    %c28 = arith.constant 28 : index
    %c0_52 = arith.constant 0 : index
    %46 = vector.load %arg2[%c28, %c0_52] : memref<36x128xbf16, #tpu.memory_space<vmem>>, vector<4x128xbf16>
    %cst_53 = arith.constant dense<0.000000e+00> : vector<256x128xf32>
    %47 = tpu.matmul %45, %46, %cst_53 {dimension_numbers = #tpu.dot_dimension_numbers<[1], [0], [0], [1], [0, 0, 1, 1], [], []>} : vector<256x4xbf16>, vector<4x128xbf16>, vector<256x128xf32> -> vector<256x128xf32>
    %48 = arith.addf %42, %47 : vector<256x128xf32>
    %c0_54 = arith.constant 0 : index
    %c0_55 = arith.constant 0 : index
    %c2_56 = arith.constant 2 : index
    %c2_57 = arith.constant 2 : index
    %c0_58 = arith.constant 0 : index
    %49 = vector.load %arg1[%c0_54, %c0_55, %c2_56, %c2_57, %c0_58] : memref<1x1x18x18x4xbf16, #tpu.memory_space<vmem>>, vector<1x1x16x16x4xbf16>
    %50 = vector.shape_cast %49 : vector<1x1x16x16x4xbf16> to vector<16x16x4xbf16>
    %51 = vector.shape_cast %50 : vector<16x16x4xbf16> to vector<256x4xbf16>
    %c32 = arith.constant 32 : index
    %c0_59 = arith.constant 0 : index
    %52 = vector.load %arg2[%c32, %c0_59] : memref<36x128xbf16, #tpu.memory_space<vmem>>, vector<4x128xbf16>
    %cst_60 = arith.constant dense<0.000000e+00> : vector<256x128xf32>
    %53 = tpu.matmul %51, %52, %cst_60 {dimension_numbers = #tpu.dot_dimension_numbers<[1], [0], [0], [1], [0, 0, 1, 1], [], []>} : vector<256x4xbf16>, vector<4x128xbf16>, vector<256x128xf32> -> vector<256x128xf32>
    %54 = arith.addf %48, %53 : vector<256x128xf32>
    %55 = vector.shape_cast %54 : vector<256x128xf32> to vector<16x16x128xf32>
    %56 = arith.truncf %55 : vector<16x16x128xf32> to vector<16x16x128xbf16>
    %c0_61 = arith.constant 0 : index
    %c0_62 = arith.constant 0 : index
    %c0_63 = arith.constant 0 : index
    %c0_64 = arith.constant 0 : index
    %57 = vector.load %arg4[%c0_61, %c0_62, %c0_63, %c0_64] : memref<1x16x16x128xbf16, #tpu.memory_space<vmem>>, vector<1x16x16x128xbf16>
    %58 = vector.shape_cast %57 : vector<1x16x16x128xbf16> to vector<16x16x128xbf16>
    %59 = vector.shape_cast %56 : vector<16x16x128xbf16> to vector<1x16x16x128xbf16>
    tpu.vector_store %arg4[%c0_61, %c0_62, %c0_63, %c0_64], %59 {strides = array<i32>} : memref<1x16x16x128xbf16, #tpu.memory_space<vmem>>, vector<1x16x16x128xbf16>,
    %cst_65 = arith.constant dense<0.000000e+00> : vector<128xf32>
    %60 = vector.multi_reduction <add>, %54, %cst_65 [0] : vector<256x128xf32> to vector<128xf32>
    %61 = vector.shape_cast %60 : vector<128xf32> to vector<1x128xf32>
    %c0_66 = arith.constant 0 : index
    %c0_67 = arith.constant 0 : index
    %c0_68 = arith.constant 0 : index
    %62 = vector.load %arg5[%c0_66, %c0_67, %c0_68] : memref<1x2x128xf32, #tpu.memory_space<vmem>>, vector<1x1x128xf32>
    %63 = vector.shape_cast %62 : vector<1x1x128xf32> to vector<1x128xf32>
    %64 = vector.shape_cast %61 : vector<1x128xf32> to vector<1x1x128xf32>
    tpu.vector_store %arg5[%c0_66, %c0_67, %c0_68], %64 {strides = array<i32>} : memref<1x2x128xf32, #tpu.memory_space<vmem>>, vector<1x1x128xf32>,
    %65 = arith.mulf %54, %54 : vector<256x128xf32>
    %cst_69 = arith.constant dense<0.000000e+00> : vector<128xf32>
    %66 = vector.multi_reduction <add>, %65, %cst_69 [0] : vector<256x128xf32> to vector<128xf32>
    %67 = vector.shape_cast %66 : vector<128xf32> to vector<1x128xf32>
    %c0_70 = arith.constant 0 : index
    %c1_71 = arith.constant 1 : index
    %c0_72 = arith.constant 0 : index
    %68 = vector.load %arg5[%c0_70, %c1_71, %c0_72] : memref<1x2x128xf32, #tpu.memory_space<vmem>>, vector<1x1x128xf32>
    %69 = vector.shape_cast %68 : vector<1x1x128xf32> to vector<1x128xf32>
    %70 = vector.shape_cast %67 : vector<1x128xf32> to vector<1x1x128xf32>
    tpu.vector_store %arg5[%c0_70, %c1_71, %c0_72], %70 {strides = array<i32>} : memref<1x2x128xf32, #tpu.memory_space<vmem>>, vector<1x1x128xf32>,
    %c0_73 = arith.constant 0 : index
    %c0_74 = arith.constant 0 : index
    %c1_75 = arith.constant 1 : index
    %c1_76 = arith.constant 1 : index
    %c0_77 = arith.constant 0 : index
    %71 = vector.load %arg1[%c0_73, %c0_74, %c1_75, %c1_76, %c0_77] : memref<1x1x18x18x4xbf16, #tpu.memory_space<vmem>>, vector<1x1x16x16x4xbf16>
    %72 = vector.shape_cast %71 : vector<1x1x16x16x4xbf16> to vector<16x16x4xbf16>
    %73 = vector.shape_cast %72 : vector<16x16x4xbf16> to vector<256x4xbf16>
    %c0_78 = arith.constant 0 : index
    %c0_79 = arith.constant 0 : index
    %74 = vector.load %arg3[%c0_78, %c0_79] : memref<4x128xbf16, #tpu.memory_space<vmem>>, vector<4x128xbf16>
    %cst_80 = arith.constant dense<0.000000e+00> : vector<256x128xf32>
    %75 = tpu.matmul %73, %74, %cst_80 {dimension_numbers = #tpu.dot_dimension_numbers<[1], [0], [0], [1], [0, 0, 1, 1], [], []>} : vector<256x4xbf16>, vector<4x128xbf16>, vector<256x128xf32> -> vector<256x128xf32>
    %76 = vector.shape_cast %75 : vector<256x128xf32> to vector<16x16x128xf32>
    %77 = arith.truncf %76 : vector<16x16x128xf32> to vector<16x16x128xbf16>
    %c0_81 = arith.constant 0 : index
    %c0_82 = arith.constant 0 : index
    %c0_83 = arith.constant 0 : index
    %c0_84 = arith.constant 0 : index
    %78 = vector.load %arg6[%c0_81, %c0_82, %c0_83, %c0_84] : memref<1x16x16x128xbf16, #tpu.memory_space<vmem>>, vector<1x16x16x128xbf16>
    %79 = vector.shape_cast %78 : vector<1x16x16x128xbf16> to vector<16x16x128xbf16>
    %80 = vector.shape_cast %77 : vector<16x16x128xbf16> to vector<1x16x16x128xbf16>
    tpu.vector_store %arg6[%c0_81, %c0_82, %c0_83, %c0_84], %80 {strides = array<i32>} : memref<1x16x16x128xbf16, #tpu.memory_space<vmem>>, vector<1x16x16x128xbf16>,
    %cst_85 = arith.constant dense<0.000000e+00> : vector<128xf32>
    %81 = vector.multi_reduction <add>, %75, %cst_85 [0] : vector<256x128xf32> to vector<128xf32>
    %82 = vector.shape_cast %81 : vector<128xf32> to vector<1x128xf32>
    %c0_86 = arith.constant 0 : index
    %c0_87 = arith.constant 0 : index
    %c0_88 = arith.constant 0 : index
    %83 = vector.load %arg7[%c0_86, %c0_87, %c0_88] : memref<1x2x128xf32, #tpu.memory_space<vmem>>, vector<1x1x128xf32>
    %84 = vector.shape_cast %83 : vector<1x1x128xf32> to vector<1x128xf32>
    %85 = vector.shape_cast %82 : vector<1x128xf32> to vector<1x1x128xf32>
    tpu.vector_store %arg7[%c0_86, %c0_87, %c0_88], %85 {strides = array<i32>} : memref<1x2x128xf32, #tpu.memory_space<vmem>>, vector<1x1x128xf32>,
    %86 = arith.mulf %75, %75 : vector<256x128xf32>
    %cst_89 = arith.constant dense<0.000000e+00> : vector<128xf32>
    %87 = vector.multi_reduction <add>, %86, %cst_89 [0] : vector<256x128xf32> to vector<128xf32>
    %88 = vector.shape_cast %87 : vector<128xf32> to vector<1x128xf32>
    %c0_90 = arith.constant 0 : index
    %c1_91 = arith.constant 1 : index
    %c0_92 = arith.constant 0 : index
    %89 = vector.load %arg7[%c0_90, %c1_91, %c0_92] : memref<1x2x128xf32, #tpu.memory_space<vmem>>, vector<1x1x128xf32>
    %90 = vector.shape_cast %89 : vector<1x1x128xf32> to vector<1x128xf32>
    %91 = vector.shape_cast %88 : vector<1x128xf32> to vector<1x1x128xf32>
    tpu.vector_store %arg7[%c0_90, %c1_91, %c0_92], %91 {strides = array<i32>} : memref<1x2x128xf32, #tpu.memory_space<vmem>>, vector<1x1x128xf32>,
    return
  }
  func.func @transform_0(%arg0: i32) -> (i32, i32, i32, i32, i32) {
    %c0_i32 = arith.constant 0 : i32
    %c0_i32_0 = arith.constant 0 : i32
    %c0_i32_1 = arith.constant 0 : i32
    %c0_i32_2 = arith.constant 0 : i32
    %c0_i32_3 = arith.constant 0 : i32
    return %arg0, %c0_i32, %c0_i32_0, %c0_i32_1, %c0_i32_2 : i32, i32, i32, i32, i32
  }
  func.func @transform_1(%arg0: i32) -> (i32, i32) {
    %c0_i32 = arith.constant 0 : i32
    %c0_i32_0 = arith.constant 0 : i32
    %c0_i32_1 = arith.constant 0 : i32
    return %c0_i32, %c0_i32_0 : i32, i32
  }
  func.func @transform_2(%arg0: i32) -> (i32, i32) {
    %c0_i32 = arith.constant 0 : i32
    %c0_i32_0 = arith.constant 0 : i32
    %c0_i32_1 = arith.constant 0 : i32
    return %c0_i32, %c0_i32_0 : i32, i32
  }
  func.func @transform_3(%arg0: i32) -> (i32, i32, i32, i32) {
    %c0_i32 = arith.constant 0 : i32
    %c0_i32_0 = arith.constant 0 : i32
    %c0_i32_1 = arith.constant 0 : i32
    %c0_i32_2 = arith.constant 0 : i32
    return %arg0, %c0_i32, %c0_i32_0, %c0_i32_1 : i32, i32, i32, i32
  }
  func.func @transform_4(%arg0: i32) -> (i32, i32, i32) {
    %c0_i32 = arith.constant 0 : i32
    %c0_i32_0 = arith.constant 0 : i32
    %c0_i32_1 = arith.constant 0 : i32
    return %arg0, %c0_i32, %c0_i32_0 : i32, i32, i32
  }
  func.func @transform_5(%arg0: i32) -> (i32, i32, i32, i32) {
    %c0_i32 = arith.constant 0 : i32
    %c0_i32_0 = arith.constant 0 : i32
    %c0_i32_1 = arith.constant 0 : i32
    %c0_i32_2 = arith.constant 0 : i32
    return %arg0, %c0_i32, %c0_i32_0, %c0_i32_1 : i32, i32, i32, i32
  }
  func.func @transform_6(%arg0: i32) -> (i32, i32, i32) {
    %c0_i32 = arith.constant 0 : i32
    %c0_i32_0 = arith.constant 0 : i32
    %c0_i32_1 = arith.constant 0 : i32
    return %arg0, %c0_i32, %c0_i32_0 : i32, i32, i32
  }
}

</mosaic_0001>

<llo_original>
// kernel: tpu_custom_call.1
$region0: #{tpu_custom_call.1}
  #allocation0 [shape = 'u32[]', space=smem, size = 0x4, offset = 0x4, fixed_abs, tag = 'smem constant byte address 0x4 - core index']
  #allocation1 [shape = 'u32[72,128]{1,0:T(1,128)}', space=vmem, size = 0x9000, scoped, tag = 'internal scratch']
  %s0 = inlined_call_operand.vmem [shape: bf16[2,1,18,18,4], index: 0, kind: input, shape index: {}]
  %s1 = inlined_call_operand.vmem [shape: bf16[36,128], index: 1, kind: input, shape index: {}]
  %s2 = inlined_call_operand.vmem [shape: bf16[4,128], index: 2, kind: input, shape index: {}]
  %s3 = inlined_call_operand.hbm [shape: bf16[2,16,16,128], index: 3, kind: output, shape index: {0}]
  %s4 = inlined_call_operand.hbm [shape: f32[2,2,128], index: 4, kind: output, shape index: {1}]
  %s5 = inlined_call_operand.hbm [shape: bf16[2,16,16,128], index: 5, kind: output, shape index: {2}]
  %s6 = inlined_call_operand.hbm [shape: f32[2,2,128], index: 6, kind: output, shape index: {3}]
  %7 = xla_tuple %s3, %s4, %s5, %s6
  %s8 = sld [smem:[#allocation0]]
  $region69: #{tpu_custom_call.1} parent=0
    _
  %s10 = ssub.s32 1, %s8
  %s11 = scalar_select 0, %s10, %s8
  $region1: #{tpu_custom_call.1} parent=0
    #allocation2 [shape = 'u8[131072]{0}', space=vmem, size = 0x20000, scoped, tag = 'output window, operand 0']
    #allocation3 [shape = 's32[2]{0}', space=sflag, size = 0x8, scoped, tag = 'scoped memory for tpu_custom_call.1']
    #allocation4 [shape = 'u8[2048]{0}', space=vmem, size = 0x800, scoped, tag = 'output window, operand 1']
    #allocation5 [shape = 's32[2]{0}', space=sflag, size = 0x8, scoped, tag = 'scoped memory for tpu_custom_call.1']
    #allocation6 [shape = 'u8[131072]{0}', space=vmem, size = 0x20000, scoped, tag = 'output window, operand 2']
    #allocation7 [shape = 'u8[2048]{0}', space=vmem, size = 0x800, scoped, tag = 'output window, operand 3']
    #allocation8 [shape = 's32[2]{0}', space=sflag, size = 0x8, scoped, tag = 'scoped memory for tpu_custom_call.1']
    %12 = vsyncpa [#allocation3], 0
    %s13 = scalar_lea.sflag [#allocation3], 1
    %14 = vsyncpa %s13, 0
    %15 = vsyncpa [#allocation5], 0
    %s16 = scalar_lea.sflag [#allocation5], 1
    %17 = vsyncpa %s16, 0
    %18 = vsyncpa [#allocation8], 0
    %s19 = scalar_lea.sflag [#allocation8], 1
    %20 = vsyncpa %s19, 0
    loop: start=0, step=1, limit=4
    $region2: #{tpu_custom_call.1} parent=1 // loop_pre_header
      _
    $region3: #{tpu_custom_call.1} parent=1 // loop_header
      %s22 = sphi 0, %s26
      %p23 = scmp.ge.s32.totalorder %s22, 4
      %s32 = sphi 0, %s34
      %s35 = sphi 0, %s32
      %s36 = sphi 0, %s35
      %s52 = sphi 0, %s36
      %s56 = sphi 0, %s56
      %s58 = sphi 0, %s56
      %s59 = sphi 0, %s58
      %s73 = sphi 0, %s59
      %s77 = sphi 0, %s77
      %s79 = sphi 0, %s77
      %s80 = sphi 0, %s79
      %s94 = sphi 0, %s80
      %s100 = sphi 0, %s102
      %s103 = sphi 0, %s100
      %s104 = sphi 0, %s103
      %s120 = sphi 0, %s104
      %s126 = sphi 0, %s128
      %s129 = sphi 0, %s126
      %s130 = sphi 0, %s129
      %s146 = sphi 0, %s130
      %s152 = sphi 0, %s154
      %s155 = sphi 0, %s152
      %s156 = sphi 0, %s155
      %s172 = sphi 0, %s156
      %s178 = sphi 0, %s180
      %s181 = sphi 0, %s178
      %s182 = sphi 0, %s181
      %s198 = sphi 0, %s182
    $region4: #{tpu_custom_call.1} parent=1 // loop_header_branch
      %25 = sbr.rel (%p23) target = $region8
    $region5: #{tpu_custom_call.1} parent=1 // loop_body
      %s27 = ssub.s32 %s22, 1
      %s28 = ssub.s32 %s22, 2
      %s29 = sadd.s32 %s22, 1
      %s30 = ssub.s32 %s22, %s29
      %p31 = scmp.eq.s32.totalorder %s30, 0
      %s33 = sadd.s32 %s32, 1
      %s34 = scalar_select %p31, %s32, %s33
      %p37 = pneg %p31
      %p38 = scmp.eq.s32.totalorder %s22, 1
      %p39 = por %p37, %p38
      %p40 = scmp.ne.s32.totalorder %s32, %s35
      %p41 = scmp.eq.s32.totalorder %s22, 0
      %p42 = por %p40, %p41
      %p43 = scmp.ne.s32.totalorder %s32, %s35
      %p44 = scmp.eq.s32.totalorder %s27, 1
      %p45 = por %p43, %p44
      %p46 = scmp.ne.s32.totalorder %s35, %s36
      %p47 = scmp.eq.s32.totalorder %s27, 0
      %p48 = por %p46, %p47
      %p49 = scmp.ne.s32.totalorder %s35, %s36
      %p50 = scmp.eq.s32.totalorder %s28, 1
      %p51 = por %p49, %p50
      %p53 = scmp.ne.s32.totalorder %s36, %s52
      %p54 = scmp.eq.s32.totalorder %s28, 0
      %p55 = por %p53, %p54
      %s57 = sadd.s32 %s56, 1
      %p60 = scmp.eq.s32.totalorder %s22, 1
      %p61 = scmp.ne.s32.totalorder %s56, %s58
      %p62 = scmp.eq.s32.totalorder %s22, 0
      %p63 = por %p61, %p62
      %p64 = scmp.ne.s32.totalorder %s56, %s58
      %p65 = scmp.eq.s32.totalorder %s27, 1
      %p66 = por %p64, %p65
      %p67 = scmp.ne.s32.totalorder %s58, %s59
      %p68 = scmp.eq.s32.totalorder %s27, 0
      %p69 = por %p67, %p68
      %p70 = scmp.ne.s32.totalorder %s58, %s59
      %p71 = scmp.eq.s32.totalorder %s28, 1
      %p72 = por %p70, %p71
      %p74 = scmp.ne.s32.totalorder %s59, %s73
      %p75 = scmp.eq.s32.totalorder %s28, 0
      %p76 = por %p74, %p75
      %s78 = sadd.s32 %s77, 1
      %p81 = scmp.eq.s32.totalorder %s22, 1
      %p82 = scmp.ne.s32.totalorder %s77, %s79
      %p83 = scmp.eq.s32.totalorder %s22, 0
      %p84 = por %p82, %p83
      %p85 = scmp.ne.s32.totalorder %s77, %s79
      %p86 = scmp.eq.s32.totalorder %s27, 1
      %p87 = por %p85, %p86
      %p88 = scmp.ne.s32.totalorder %s79, %s80
      %p89 = scmp.eq.s32.totalorder %s27, 0
      %p90 = por %p88, %p89
      %p91 = scmp.ne.s32.totalorder %s79, %s80
      %p92 = scmp.eq.s32.totalorder %s28, 1
      %p93 = por %p91, %p92
      %p95 = scmp.ne.s32.totalorder %s80, %s94
      %p96 = scmp.eq.s32.totalorder %s28, 0
      %p97 = por %p95, %p96
      %s98 = ssub.s32 %s22, %s29
      %p99 = scmp.eq.s32.totalorder %s98, 0
      %s101 = sadd.s32 %s100, 1
      %s102 = scalar_select %p99, %s100, %s101
      %p105 = pneg %p99
      %p106 = scmp.eq.s32.totalorder %s22, 1
      %p107 = por %p105, %p106
      %p108 = scmp.ne.s32.totalorder %s100, %s103
      %p109 = scmp.eq.s32.totalorder %s22, 0
      %p110 = por %p108, %p109
      %p111 = scmp.ne.s32.totalorder %s100, %s103
      %p112 = scmp.eq.s32.totalorder %s27, 1
      %p113 = por %p111, %p112
      %p114 = scmp.ne.s32.totalorder %s103, %s104
      %p115 = scmp.eq.s32.totalorder %s27, 0
      %p116 = por %p114, %p115
      %p117 = scmp.ne.s32.totalorder %s103, %s104
      %p118 = scmp.eq.s32.totalorder %s28, 1
      %p119 = por %p117, %p118
      %p121 = scmp.ne.s32.totalorder %s104, %s120
      %p122 = scmp.eq.s32.totalorder %s28, 0
      %p123 = por %p121, %p122
      %s124 = ssub.s32 %s22, %s29
      %p125 = scmp.eq.s32.totalorder %s124, 0
      %s127 = sadd.s32 %s126, 1
      %s128 = scalar_select %p125, %s126, %s127
      %p131 = pneg %p125
      %p132 = scmp.eq.s32.totalorder %s22, 1
      %p133 = por %p131, %p132
      %p134 = scmp.ne.s32.totalorder %s126, %s129
      %p135 = scmp.eq.s32.totalorder %s22, 0
      %p136 = por %p134, %p135
      %p137 = scmp.ne.s32.totalorder %s126, %s129
      %p138 = scmp.eq.s32.totalorder %s27, 1
      %p139 = por %p137, %p138
      %p140 = scmp.ne.s32.totalorder %s129, %s130
      %p141 = scmp.eq.s32.totalorder %s27, 0
      %p142 = por %p140, %p141
      %p143 = scmp.ne.s32.totalorder %s129, %s130
      %p144 = scmp.eq.s32.totalorder %s28, 1
      %p145 = por %p143, %p144
      %p147 = scmp.ne.s32.totalorder %s130, %s146
      %p148 = scmp.eq.s32.totalorder %s28, 0
      %p149 = por %p147, %p148
      %s150 = ssub.s32 %s22, %s29
      %p151 = scmp.eq.s32.totalorder %s150, 0
      %s153 = sadd.s32 %s152, 1
      %s154 = scalar_select %p151, %s152, %s153
      %p157 = pneg %p151
      %p158 = scmp.eq.s32.totalorder %s22, 1
      %p159 = por %p157, %p158
      %p160 = scmp.ne.s32.totalorder %s152, %s155
      %p161 = scmp.eq.s32.totalorder %s22, 0
      %p162 = por %p160, %p161
      %p163 = scmp.ne.s32.totalorder %s152, %s155
      %p164 = scmp.eq.s32.totalorder %s27, 1
      %p165 = por %p163, %p164
      %p166 = scmp.ne.s32.totalorder %s155, %s156
      %p167 = scmp.eq.s32.totalorder %s27, 0
      %p168 = por %p166, %p167
      %p169 = scmp.ne.s32.totalorder %s155, %s156
      %p170 = scmp.eq.s32.totalorder %s28, 1
      %p171 = por %p169, %p170
      %p173 = scmp.ne.s32.totalorder %s156, %s172
      %p174 = scmp.eq.s32.totalorder %s28, 0
      %p175 = por %p173, %p174
      %s176 = ssub.s32 %s22, %s29
      %p177 = scmp.eq.s32.totalorder %s176, 0
      %s179 = sadd.s32 %s178, 1
      %s180 = scalar_select %p177, %s178, %s179
      %p183 = pneg %p177
      %p184 = scmp.eq.s32.totalorder %s22, 1
      %p185 = por %p183, %p184
      %p186 = scmp.ne.s32.totalorder %s178, %s181
      %p187 = scmp.eq.s32.totalorder %s22, 0
      %p188 = por %p186, %p187
      %p189 = scmp.ne.s32.totalorder %s178, %s181
      %p190 = scmp.eq.s32.totalorder %s27, 1
      %p191 = por %p189, %p190
      %p192 = scmp.ne.s32.totalorder %s181, %s182
      %p193 = scmp.eq.s32.totalorder %s27, 0
      %p194 = por %p192, %p193
      %p195 = scmp.ne.s32.totalorder %s181, %s182
      %p196 = scmp.eq.s32.totalorder %s28, 1
      %p197 = por %p195, %p196
      %p199 = scmp.ne.s32.totalorder %s182, %s198
      %p200 = scmp.eq.s32.totalorder %s28, 0
      %p201 = por %p199, %p200
      %p202 = scmp.le.s32.totalorder 1, %s22
      %p203 = scmp.lt.s32.totalorder %s22, 3
      %p204 = pnand %p202, %p203
      %p205 = pneg %p204
      // Predicated region
      $region9: #{tpu_custom_call.1} parent=5 // pred_check
        _
      $region10: #{tpu_custom_call.1} parent=5 // pred_check_branch
        %207 = sbr.rel (%p204) target = $region12
      $region11: #{tpu_custom_call.1} parent=5 // pred_region
        %s208 = ssub.s32 %s22, 1
        // Predicated region
        $region13: #{tpu_custom_call.1} parent=11 // pred_check
          %p209 = pneg %p69
        $region14: #{tpu_custom_call.1} parent=11 // pred_check_branch
          %211 = sbr.rel (%p209) target = $region16
        $region15: #{tpu_custom_call.1} parent=11 // pred_region
          _
        $region16: #{tpu_custom_call.1} parent=11 // pred_fallthru
          _
        // Predicated region
        $region17: #{tpu_custom_call.1} parent=11 // pred_check
          %p212 = pneg %p90
        $region18: #{tpu_custom_call.1} parent=11 // pred_check_branch
          %214 = sbr.rel (%p212) target = $region20
        $region19: #{tpu_custom_call.1} parent=11 // pred_region
          _
        $region20: #{tpu_custom_call.1} parent=11 // pred_fallthru
          _
      $region12: #{tpu_custom_call.1} parent=5 // pred_fallthru
        _
      %p215 = scmp.lt.s32.totalorder %s22, 2
      // Predicated region
      $region21: #{tpu_custom_call.1} parent=5 // pred_check
        %p216 = pneg %p215
      $region22: #{tpu_custom_call.1} parent=5 // pred_check_branch
        %218 = sbr.rel (%p216) target = $region24
      $region23: #{tpu_custom_call.1} parent=5 // pred_region
        // Predicated region
        $region25: #{tpu_custom_call.1} parent=23 // pred_check
          %p219 = pneg %p42
        $region26: #{tpu_custom_call.1} parent=23 // pred_check_branch
          %221 = sbr.rel (%p219) target = $region28
        $region27: #{tpu_custom_call.1} parent=23 // pred_region
          %p222 = scmp.lt.s32.totalorder %s22, 1
          %s223 = scalar_select %p222, %s22, 1
          %s224 = smul.addr %s223, 54
          %s225 = smul.addr %s224, 4
          %s226 = scalar_lea.vmem %s0, %s225
        $region28: #{tpu_custom_call.1} parent=23 // pred_fallthru
          _
      $region24: #{tpu_custom_call.1} parent=5 // pred_fallthru
        _
      %p227 = scmp.le.s32.totalorder 1, %s22
      %p228 = scmp.lt.s32.totalorder %s22, 3
      %p229 = pnand %p227, %p228
      %p230 = pneg %p229
      // Predicated region
      $region29: #{tpu_custom_call.1} parent=5 // pred_check
        _
      $region30: #{tpu_custom_call.1} parent=5 // pred_check_branch
        %232 = sbr.rel (%p229) target = $region32
      $region31: #{tpu_custom_call.1} parent=5 // pred_region
        %s233 = ssub.s32 %s22, 1
        %p234 = scmp.lt.s32.totalorder %s27, 1
        %s235 = scalar_select %p234, %s27, 1
        %s236 = smul.addr %s235, 54
        %s237 = smul.addr %s236, 4
        %s238 = scalar_lea.vmem %s0, %s237
        %p239 = pneg %p48
        %p240 = pneg %p45
        %p241 = pneg %p69
        %p242 = pneg %p66
        %p243 = pneg %p90
        %p244 = pneg %p87
        %p245 = pneg %p116
        %p246 = pneg %p113
        %s247 = sand.u32 %s103, 1
        %s248 = scalar_lea.sflag [#allocation3], %s247
        %s249 = sand.u32 %s103, 1
        %s250 = smul.addr %s249, 128
        %s251 = scalar_lea.vmem [#allocation2], %s250
        %p252 = pneg %p142
        %p253 = pneg %p139
        %s254 = sand.u32 %s27, 1
        %s255 = scalar_lea.sflag [#allocation5], %s254
        %s256 = sand.u32 %s129, 1
        %s257 = smul.addr %s256, 2
        %s258 = scalar_lea.vmem [#allocation4], %s257
        %p259 = pneg %p168
        %p260 = pneg %p165
        %s261 = sand.u32 %s27, 1
        %s262 = scalar_lea.sflag [#allocation5], %s261
        %s263 = sand.u32 %s155, 1
        %s264 = smul.addr %s263, 128
        %s265 = scalar_lea.vmem [#allocation6], %s264
        %p266 = pneg %p194
        %p267 = pneg %p191
        %s268 = sand.u32 %s181, 1
        %s269 = scalar_lea.sflag [#allocation8], %s268
        %s270 = sand.u32 %s181, 1
        %s271 = smul.addr %s270, 2
        %s272 = scalar_lea.vmem [#allocation7], %s271
        %p273 = scmp.lt.s32.totalorder %s27, 1
        %s274 = scalar_select %p273, %s27, 1
        %s275 = smul.addr %s274, 54
        %s276 = smul.addr %s275, 4
        %s277 = scalar_lea.vmem %s0, %s276
        %v279 = vld [vmem:[%s277] sm:$0xf]
        %v280 = vld [vmem:[%s277 + $0x4] sm:$0xf]
        %v281 = vld [vmem:[%s277 + $0xc] sm:$0xf]
        %v282 = vld [vmem:[%s277 + $0x10] sm:$0xf]
        %v283 = vld [vmem:[%s277 + $0x18] sm:$0xf]
        %v284 = vld [vmem:[%s277 + $0x1c] sm:$0xf]
        %v285 = vld [vmem:[%s277 + $0x24] sm:$0xf]
        %v286 = vld [vmem:[%s277 + $0x28] sm:$0xf]
        %v287 = vld [vmem:[%s277 + $0x30] sm:$0xf]
        %v288 = vld [vmem:[%s277 + $0x34] sm:$0xf]
        %v289 = vld [vmem:[%s277 + $0x3c] sm:$0xf]
        %v290 = vld [vmem:[%s277 + $0x40] sm:$0xf]
        %v291 = vld [vmem:[%s277 + $0x48] sm:$0xf]
        %v292 = vld [vmem:[%s277 + $0x4c] sm:$0xf]
        %v293 = vld [vmem:[%s277 + $0x54] sm:$0xf]
        %v294 = vld [vmem:[%s277 + $0x58] sm:$0xf]
        %v295 = vld [vmem:[%s277 + $0x60] sm:$0xf]
        %v296 = vld [vmem:[%s277 + $0x64] sm:$0xf]
        %v297 = vld [vmem:[%s277 + $0x6c] sm:$0xf]
        %v298 = vld [vmem:[%s277 + $0x70] sm:$0xf]
        %v299 = vld [vmem:[%s277 + $0x78] sm:$0xf]
        %v300 = vld [vmem:[%s277 + $0x7c] sm:$0xf]
        %v301 = vld [vmem:[%s277 + $0x84] sm:$0xf]
        %v302 = vld [vmem:[%s277 + $0x88] sm:$0xf]
        %v303 = vld [vmem:[%s277 + $0x90] sm:$0xf]
        %v304 = vld [vmem:[%s277 + $0x94] sm:$0xf]
        %v305 = vld [vmem:[%s277 + $0x9c] sm:$0xf]
        %v306 = vld [vmem:[%s277 + $0xa0] sm:$0xf]
        %v307 = vld [vmem:[%s277 + $0xa8] sm:$0xf]
        %v308 = vld [vmem:[%s277 + $0xac] sm:$0xf]
        %v309 = vld [vmem:[%s277 + $0xb4] sm:$0xf]
        %v310 = vld [vmem:[%s277 + $0xb8] sm:$0xf]
        %v311 = vld [vmem:[%s1] sm:$0x3]
        %v312 = vld [vmem:[%s277 + $0x8] sm:$0x1]
        %v313 = vld [vmem:[%s277 + $0x14] sm:$0x1]
        %v314 = vld [vmem:[%s277 + $0x20] sm:$0x1]
        %v315 = vld [vmem:[%s277 + $0x2c] sm:$0x1]
        %v316 = vld [vmem:[%s277 + $0x38] sm:$0x1]
        %v317 = vld [vmem:[%s277 + $0x44] sm:$0x1]
        %v318 = vld [vmem:[%s277 + $0x50] sm:$0x1]
        %v319 = vld [vmem:[%s277 + $0x5c] sm:$0x1]
        %v320 = vld [vmem:[%s277 + $0x68] sm:$0x1]
        %v321 = vld [vmem:[%s277 + $0x74] sm:$0x1]
        %v322 = vld [vmem:[%s277 + $0x80] sm:$0x1]
        %v323 = vld [vmem:[%s277 + $0x8c] sm:$0x1]
        %v324 = vld [vmem:[%s277 + $0x98] sm:$0x1]
        %v325 = vld [vmem:[%s277 + $0xa4] sm:$0x1]
        %v326 = vld [vmem:[%s277 + $0xb0] sm:$0x1]
        %v327 = vld [vmem:[%s277 + $0xbc] sm:$0x1]
        %vm328 = vsmask.f32 3328
        %vm329 = vsmask.f32 7440
        %vm330 = vmor %vm328, %vm329
        %v332 = vshrl.u32 %v279, 16
        %v334 = vrot.slane %v332, 4
        %v335 = vshll.u32 %v279, 16
        %v337 = vrot.slane %v335, 5
        %v338 = vor.u32 %v334, %v337
        %v339 = vrot.slane %v338, 4
        %v341 = vshll.u32 %v280, 16
        %v343 = vrot.slane %v341, 5
        %v344 = vsel %vm330, %v339, %v343
        %v345 = vshrl.u32 %v280, 16
        %v347 = vrot.slane %v345, 4
        %v348 = vor.u32 %v347, %v343
        %v349 = vrot.slane %v348, 4
        %v351 = vshll.u32 %v312, 16
        %v353 = vrot.slane %v351, 5
        %v354 = vsel %vm330, %v349, %v353
        %v356 = vshrl.u32 %v281, 16
        %v358 = vrot.slane %v356, 4
        %v359 = vshll.u32 %v281, 16
        %v361 = vrot.slane %v359, 5
        %v362 = vor.u32 %v358, %v361
        %v363 = vrot.slane %v362, 4
        %v365 = vshll.u32 %v282, 16
        %v367 = vrot.slane %v365, 5
        %v368 = vsel %vm330, %v363, %v367
        %v369 = vshrl.u32 %v282, 16
        %v371 = vrot.slane %v369, 4
        %v372 = vor.u32 %v371, %v367
        %v373 = vrot.slane %v372, 4
        %v375 = vshll.u32 %v313, 16
        %v377 = vrot.slane %v375, 5
        %v378 = vsel %vm330, %v373, %v377
        %v380 = vshrl.u32 %v283, 16
        %v382 = vrot.slane %v380, 4
        %v383 = vshll.u32 %v283, 16
        %v385 = vrot.slane %v383, 5
        %v386 = vor.u32 %v382, %v385
        %v387 = vrot.slane %v386, 4
        %v389 = vshll.u32 %v284, 16
        %v391 = vrot.slane %v389, 5
        %v392 = vsel %vm330, %v387, %v391
        %v393 = vshrl.u32 %v284, 16
        %v395 = vrot.slane %v393, 4
        %v396 = vor.u32 %v395, %v391
        %v397 = vrot.slane %v396, 4
        %v399 = vshll.u32 %v314, 16
        %v401 = vrot.slane %v399, 5
        %v402 = vsel %vm330, %v397, %v401
        %v404 = vshrl.u32 %v285, 16
        %v406 = vrot.slane %v404, 4
        %v407 = vshll.u32 %v285, 16
        %v409 = vrot.slane %v407, 5
        %v410 = vor.u32 %v406, %v409
        %v411 = vrot.slane %v410, 4
        %v413 = vshll.u32 %v286, 16
        %v415 = vrot.slane %v413, 5
        %v416 = vsel %vm330, %v411, %v415
        %v417 = vshrl.u32 %v286, 16
        %v419 = vrot.slane %v417, 4
        %v420 = vor.u32 %v419, %v415
        %v421 = vrot.slane %v420, 4
        %v423 = vshll.u32 %v315, 16
        %v425 = vrot.slane %v423, 5
        %v426 = vsel %vm330, %v421, %v425
        %v428 = vshrl.u32 %v287, 16
        %v430 = vrot.slane %v428, 4
        %v431 = vshll.u32 %v287, 16
        %v433 = vrot.slane %v431, 5
        %v434 = vor.u32 %v430, %v433
        %v435 = vrot.slane %v434, 4
        %v437 = vshll.u32 %v288, 16
        %v439 = vrot.slane %v437, 5
        %v440 = vsel %vm330, %v435, %v439
        %v441 = vshrl.u32 %v288, 16
        %v443 = vrot.slane %v441, 4
        %v444 = vor.u32 %v443, %v439
        %v445 = vrot.slane %v444, 4
        %v447 = vshll.u32 %v316, 16
        %v449 = vrot.slane %v447, 5
        %v450 = vsel %vm330, %v445, %v449
        %v452 = vshrl.u32 %v289, 16
        %v454 = vrot.slane %v452, 4
        %v455 = vshll.u32 %v289, 16
        %v457 = vrot.slane %v455, 5
        %v458 = vor.u32 %v454, %v457
        %v459 = vrot.slane %v458, 4
        %v461 = vshll.u32 %v290, 16
        %v463 = vrot.slane %v461, 5
        %v464 = vsel %vm330, %v459, %v463
        %v465 = vshrl.u32 %v290, 16
        %v467 = vrot.slane %v465, 4
        %v468 = vor.u32 %v467, %v463
        %v469 = vrot.slane %v468, 4
        %v471 = vshll.u32 %v317, 16
        %v473 = vrot.slane %v471, 5
        %v474 = vsel %vm330, %v469, %v473
        %v476 = vshrl.u32 %v291, 16
        %v478 = vrot.slane %v476, 4
        %v479 = vshll.u32 %v291, 16
        %v481 = vrot.slane %v479, 5
        %v482 = vor.u32 %v478, %v481
        %v483 = vrot.slane %v482, 4
        %v485 = vshll.u32 %v292, 16
        %v487 = vrot.slane %v485, 5
        %v488 = vsel %vm330, %v483, %v487
        %v489 = vshrl.u32 %v292, 16
        %v491 = vrot.slane %v489, 4
        %v492 = vor.u32 %v491, %v487
        %v493 = vrot.slane %v492, 4
        %v495 = vshll.u32 %v318, 16
        %v497 = vrot.slane %v495, 5
        %v498 = vsel %vm330, %v493, %v497
        %v500 = vshrl.u32 %v293, 16
        %v502 = vrot.slane %v500, 4
        %v503 = vshll.u32 %v293, 16
        %v505 = vrot.slane %v503, 5
        %v506 = vor.u32 %v502, %v505
        %v507 = vrot.slane %v506, 4
        %v509 = vshll.u32 %v294, 16
        %v511 = vrot.slane %v509, 5
        %v512 = vsel %vm330, %v507, %v511
        %v513 = vshrl.u32 %v294, 16
        %v515 = vrot.slane %v513, 4
        %v516 = vor.u32 %v515, %v511
        %v517 = vrot.slane %v516, 4
        %v519 = vshll.u32 %v319, 16
        %v521 = vrot.slane %v519, 5
        %v522 = vsel %vm330, %v517, %v521
        %v524 = vshrl.u32 %v295, 16
        %v526 = vrot.slane %v524, 4
        %v527 = vshll.u32 %v295, 16
        %v529 = vrot.slane %v527, 5
        %v530 = vor.u32 %v526, %v529
        %v531 = vrot.slane %v530, 4
        %v533 = vshll.u32 %v296, 16
        %v535 = vrot.slane %v533, 5
        %v536 = vsel %vm330, %v531, %v535
        %v537 = vshrl.u32 %v296, 16
        %v539 = vrot.slane %v537, 4
        %v540 = vor.u32 %v539, %v535
        %v541 = vrot.slane %v540, 4
        %v543 = vshll.u32 %v320, 16
        %v545 = vrot.slane %v543, 5
        %v546 = vsel %vm330, %v541, %v545
        %v548 = vshrl.u32 %v297, 16
        %v550 = vrot.slane %v548, 4
        %v551 = vshll.u32 %v297, 16
        %v553 = vrot.slane %v551, 5
        %v554 = vor.u32 %v550, %v553
        %v555 = vrot.slane %v554, 4
        %v557 = vshll.u32 %v298, 16
        %v559 = vrot.slane %v557, 5
        %v560 = vsel %vm330, %v555, %v559
        %v561 = vshrl.u32 %v298, 16
        %v563 = vrot.slane %v561, 4
        %v564 = vor.u32 %v563, %v559
        %v565 = vrot.slane %v564, 4
        %v567 = vshll.u32 %v321, 16
        %v569 = vrot.slane %v567, 5
        %v570 = vsel %vm330, %v565, %v569
        %v572 = vshrl.u32 %v299, 16
        %v574 = vrot.slane %v572, 4
        %v575 = vshll.u32 %v299, 16
        %v577 = vrot.slane %v575, 5
        %v578 = vor.u32 %v574, %v577
        %v579 = vrot.slane %v578, 4
        %v581 = vshll.u32 %v300, 16
        %v583 = vrot.slane %v581, 5
        %v584 = vsel %vm330, %v579, %v583
        %v585 = vshrl.u32 %v300, 16
        %v587 = vrot.slane %v585, 4
        %v588 = vor.u32 %v587, %v583
        %v589 = vrot.slane %v588, 4
        %v591 = vshll.u32 %v322, 16
        %v593 = vrot.slane %v591, 5
        %v594 = vsel %vm330, %v589, %v593
        %v596 = vshrl.u32 %v301, 16
        %v598 = vrot.slane %v596, 4
        %v599 = vshll.u32 %v301, 16
        %v601 = vrot.slane %v599, 5
        %v602 = vor.u32 %v598, %v601
        %v603 = vrot.slane %v602, 4
        %v605 = vshll.u32 %v302, 16
        %v607 = vrot.slane %v605, 5
        %v608 = vsel %vm330, %v603, %v607
        %v609 = vshrl.u32 %v302, 16
        %v611 = vrot.slane %v609, 4
        %v612 = vor.u32 %v611, %v607
        %v613 = vrot.slane %v612, 4
        %v615 = vshll.u32 %v323, 16
        %v617 = vrot.slane %v615, 5
        %v618 = vsel %vm330, %v613, %v617
        %v620 = vshrl.u32 %v303, 16
        %v622 = vrot.slane %v620, 4
        %v623 = vshll.u32 %v303, 16
        %v625 = vrot.slane %v623, 5
        %v626 = vor.u32 %v622, %v625
        %v627 = vrot.slane %v626, 4
        %v629 = vshll.u32 %v304, 16
        %v631 = vrot.slane %v629, 5
        %v632 = vsel %vm330, %v627, %v631
        %v633 = vshrl.u32 %v304, 16
        %v635 = vrot.slane %v633, 4
        %v636 = vor.u32 %v635, %v631
        %v637 = vrot.slane %v636, 4
        %v639 = vshll.u32 %v324, 16
        %v641 = vrot.slane %v639, 5
        %v642 = vsel %vm330, %v637, %v641
        %v644 = vshrl.u32 %v305, 16
        %v646 = vrot.slane %v644, 4
        %v647 = vshll.u32 %v305, 16
        %v649 = vrot.slane %v647, 5
        %v650 = vor.u32 %v646, %v649
        %v651 = vrot.slane %v650, 4
        %v653 = vshll.u32 %v306, 16
        %v655 = vrot.slane %v653, 5
        %v656 = vsel %vm330, %v651, %v655
        %v657 = vshrl.u32 %v306, 16
        %v659 = vrot.slane %v657, 4
        %v660 = vor.u32 %v659, %v655
        %v661 = vrot.slane %v660, 4
        %v663 = vshll.u32 %v325, 16
        %v665 = vrot.slane %v663, 5
        %v666 = vsel %vm330, %v661, %v665
        %v668 = vshrl.u32 %v307, 16
        %v670 = vrot.slane %v668, 4
        %v671 = vshll.u32 %v307, 16
        %v673 = vrot.slane %v671, 5
        %v674 = vor.u32 %v670, %v673
        %v675 = vrot.slane %v674, 4
        %v677 = vshll.u32 %v308, 16
        %v679 = vrot.slane %v677, 5
        %v680 = vsel %vm330, %v675, %v679
        %v681 = vshrl.u32 %v308, 16
        %v683 = vrot.slane %v681, 4
        %v684 = vor.u32 %v683, %v679
        %v685 = vrot.slane %v684, 4
        %v687 = vshll.u32 %v326, 16
        %v689 = vrot.slane %v687, 5
        %v690 = vsel %vm330, %v685, %v689
        %v692 = vshrl.u32 %v309, 16
        %v694 = vrot.slane %v692, 4
        %v695 = vshll.u32 %v309, 16
        %v697 = vrot.slane %v695, 5
        %v698 = vor.u32 %v694, %v697
        %v699 = vrot.slane %v698, 4
        %v701 = vshll.u32 %v310, 16
        %v703 = vrot.slane %v701, 5
        %v704 = vsel %vm330, %v699, %v703
        %v705 = vshrl.u32 %v310, 16
        %v707 = vrot.slane %v705, 4
        %v708 = vor.u32 %v707, %v703
        %v709 = vrot.slane %v708, 4
        %v711 = vshll.u32 %v327, 16
        %v713 = vrot.slane %v711, 5
        %v714 = vsel %vm330, %v709, %v713
        %v715 = vld [vmem:[%s1] sm:$0xc]
        %v716 = vunpack.c.l.b16 %v344
        %v717 = vunpack.c.l.b16 %v354
        %v718 = vunpack.c.l.b16 %v368
        %v719 = vunpack.c.l.b16 %v378
        %v720 = vunpack.c.l.b16 %v392
        %v721 = vunpack.c.l.b16 %v402
        %v722 = vunpack.c.l.b16 %v416
        %v723 = vunpack.c.l.b16 %v426
        %v724 = vunpack.c.l.b16 %v440
        %v725 = vunpack.c.l.b16 %v450
        %v726 = vunpack.c.l.b16 %v464
        %v727 = vunpack.c.l.b16 %v474
        %v728 = vunpack.c.l.b16 %v488
        %v729 = vunpack.c.l.b16 %v498
        %v730 = vunpack.c.l.b16 %v512
        %v731 = vunpack.c.l.b16 %v522
        %v732 = vunpack.c.l.b16 %v536
        %v733 = vunpack.c.l.b16 %v546
        %v734 = vunpack.c.l.b16 %v560
        %v735 = vunpack.c.l.b16 %v570
        %v736 = vunpack.c.l.b16 %v584
        %v737 = vunpack.c.l.b16 %v594
        %v738 = vunpack.c.l.b16 %v608
        %v739 = vunpack.c.l.b16 %v618
        %v740 = vunpack.c.l.b16 %v632
        %v741 = vunpack.c.l.b16 %v642
        %v742 = vunpack.c.l.b16 %v656
        %v743 = vunpack.c.l.b16 %v666
        %v744 = vunpack.c.l.b16 %v680
        %v745 = vunpack.c.l.b16 %v690
        %v746 = vunpack.c.l.b16 %v704
        %v747 = vunpack.c.l.b16 %v714
        %v748 = vpack.c.b16 %v717, %v716
        %v749 = vpack.c.b16 %v719, %v718
        %v750 = vpack.c.b16 %v721, %v720
        %v751 = vpack.c.b16 %v723, %v722
        %v752 = vpack.c.b16 %v725, %v724
        %v753 = vpack.c.b16 %v727, %v726
        %v754 = vpack.c.b16 %v729, %v728
        %v755 = vpack.c.b16 %v731, %v730
        %v756 = vpack.c.b16 %v733, %v732
        %v757 = vpack.c.b16 %v735, %v734
        %v758 = vpack.c.b16 %v737, %v736
        %v759 = vpack.c.b16 %v739, %v738
        %v760 = vpack.c.b16 %v741, %v740
        %v761 = vpack.c.b16 %v743, %v742
        %v762 = vpack.c.b16 %v745, %v744
        %v763 = vpack.c.b16 %v747, %v746
        %v765 = vunpack.c.l.b16 %v715
        %v766 = vpack.c.b16 %v765, %v765
        %v767 = vrot.slane %v766, 2
        %vm768 = vcmask 31744
        %v770 = vsel %vm768, %v748, 0
        %v773 = vsel %vm768, %v749, 0
        %v776 = vsel %vm768, %v750, 0
        %v779 = vsel %vm768, %v751, 0
        %v782 = vsel %vm768, %v752, 0
        %v785 = vsel %vm768, %v753, 0
        %v788 = vsel %vm768, %v754, 0
        %v791 = vsel %vm768, %v755, 0
        %v794 = vsel %vm768, %v756, 0
        %v797 = vsel %vm768, %v757, 0
        %v800 = vsel %vm768, %v758, 0
        %v803 = vsel %vm768, %v759, 0
        %v806 = vsel %vm768, %v760, 0
        %v809 = vsel %vm768, %v761, 0
        %v812 = vsel %vm768, %v762, 0
        %v815 = vsel %vm768, %v763, 0
        %vm817 = vcmask 1041408
        %v819 = vsel %vm817, %v767, 0
        %821 = vmatpush.bf16.msra.mxu0 0
        %822 = vmatpush.bf16.msra.mxu0 0
        %823 = vmatpush.bf16.msra.mxu0 0
        %824 = vmatpush.bf16.msra.mxu0 0
        %825 = vmatpush.bf16.msra.mxu0 0
        %826 = vmatpush.bf16.msra.mxu0 0
        %827 = vmatpush.bf16.msra.mxu0 0
        %828 = vmatpush.bf16.msra.mxu0 %v819
        %829 = vmatmul.bf16.gmra.mxu0 %v770
        %v830 = vpop.f32.mrf.mxu0
        %v831 = vadd.f32 0.0, %v830
        %v832 = vpop.f32.mrf.mxu0
        %v833 = vadd.f32 0.0, %v832
        %834 = vmatmul.bf16.gmra.mxu0 %v773
        %v835 = vpop.f32.mrf.mxu0
        %v836 = vadd.f32 0.0, %v835
        %v837 = vpop.f32.mrf.mxu0
        %v838 = vadd.f32 0.0, %v837
        %839 = vmatmul.bf16.gmra.mxu0 %v776
        %v840 = vpop.f32.mrf.mxu0
        %v841 = vadd.f32 0.0, %v840
        %v842 = vpop.f32.mrf.mxu0
        %v843 = vadd.f32 0.0, %v842
        %844 = vmatmul.bf16.gmra.mxu0 %v779
        %v845 = vpop.f32.mrf.mxu0
        %v846 = vadd.f32 0.0, %v845
        %v847 = vpop.f32.mrf.mxu0
        %v848 = vadd.f32 0.0, %v847
        %849 = vmatmul.bf16.gmra.mxu0 %v782
        %v850 = vpop.f32.mrf.mxu0
        %v851 = vadd.f32 0.0, %v850
        %v852 = vpop.f32.mrf.mxu0
        %v853 = vadd.f32 0.0, %v852
        %854 = vmatmul.bf16.gmra.mxu0 %v785
        %v855 = vpop.f32.mrf.mxu0
        %v856 = vadd.f32 0.0, %v855
        %v857 = vpop.f32.mrf.mxu0
        %v858 = vadd.f32 0.0, %v857
        %859 = vmatmul.bf16.gmra.mxu0 %v788
        %v860 = vpop.f32.mrf.mxu0
        %v861 = vadd.f32 0.0, %v860
        %v862 = vpop.f32.mrf.mxu0
        %v863 = vadd.f32 0.0, %v862
        %864 = vmatmul.bf16.gmra.mxu0 %v791
        %v865 = vpop.f32.mrf.mxu0
        %v866 = vadd.f32 0.0, %v865
        %v867 = vpop.f32.mrf.mxu0
        %v868 = vadd.f32 0.0, %v867
        %869 = vmatmul.bf16.gmra.mxu0 %v794
        %v870 = vpop.f32.mrf.mxu0
        %v871 = vadd.f32 0.0, %v870
        %v872 = vpop.f32.mrf.mxu0
        %v873 = vadd.f32 0.0, %v872
        %874 = vmatmul.bf16.gmra.mxu0 %v797
        %v875 = vpop.f32.mrf.mxu0
        %v876 = vadd.f32 0.0, %v875
        %v877 = vpop.f32.mrf.mxu0
        %v878 = vadd.f32 0.0, %v877
        %879 = vmatmul.bf16.gmra.mxu0 %v800
        %v880 = vpop.f32.mrf.mxu0
        %v881 = vadd.f32 0.0, %v880
        %v882 = vpop.f32.mrf.mxu0
        %v883 = vadd.f32 0.0, %v882
        %884 = vmatmul.bf16.gmra.mxu0 %v803
        %v885 = vpop.f32.mrf.mxu0
        %v886 = vadd.f32 0.0, %v885
        %v887 = vpop.f32.mrf.mxu0
        %v888 = vadd.f32 0.0, %v887
        %889 = vmatmul.bf16.gmra.mxu0 %v806
        %v890 = vpop.f32.mrf.mxu0
        %v891 = vadd.f32 0.0, %v890
        %v892 = vpop.f32.mrf.mxu0
        %v893 = vadd.f32 0.0, %v892
        %894 = vmatmul.bf16.gmra.mxu0 %v809
        %v895 = vpop.f32.mrf.mxu0
        %v896 = vadd.f32 0.0, %v895
        %v897 = vpop.f32.mrf.mxu0
        %v898 = vadd.f32 0.0, %v897
        %899 = vmatmul.bf16.gmra.mxu0 %v812
        %v900 = vpop.f32.mrf.mxu0
        %v901 = vadd.f32 0.0, %v900
        %v902 = vpop.f32.mrf.mxu0
        %v903 = vadd.f32 0.0, %v902
        %904 = vmatmul.bf16.gmra.mxu0 %v815
        %v905 = vpop.f32.mrf.mxu0
        %v906 = vadd.f32 0.0, %v905
        %v907 = vpop.f32.mrf.mxu0
        %v908 = vadd.f32 0.0, %v907
        %909 = vdwg.mxu0
        %v942 = vunpack.c.l.b16 %v279
        %v943 = vunpack.c.l.b16 %v280
        %v944 = vunpack.c.l.b16 %v281
        %v945 = vunpack.c.l.b16 %v282
        %v946 = vunpack.c.l.b16 %v283
        %v947 = vunpack.c.l.b16 %v284
        %v948 = vunpack.c.l.b16 %v285
        %v949 = vunpack.c.l.b16 %v286
        %v950 = vunpack.c.l.b16 %v287
        %v951 = vunpack.c.l.b16 %v288
        %v952 = vunpack.c.l.b16 %v289
        %v953 = vunpack.c.l.b16 %v290
        %v954 = vunpack.c.l.b16 %v291
        %v955 = vunpack.c.l.b16 %v292
        %v956 = vunpack.c.l.b16 %v293
        %v957 = vunpack.c.l.b16 %v294
        %v958 = vunpack.c.l.b16 %v295
        %v959 = vunpack.c.l.b16 %v296
        %v960 = vunpack.c.l.b16 %v297
        %v961 = vunpack.c.l.b16 %v298
        %v962 = vunpack.c.l.b16 %v299
        %v963 = vunpack.c.l.b16 %v300
        %v964 = vunpack.c.l.b16 %v301
        %v965 = vunpack.c.l.b16 %v302
        %v966 = vunpack.c.l.b16 %v303
        %v967 = vunpack.c.l.b16 %v304
        %v968 = vunpack.c.l.b16 %v305
        %v969 = vunpack.c.l.b16 %v306
        %v970 = vunpack.c.l.b16 %v307
        %v971 = vunpack.c.l.b16 %v308
        %v972 = vunpack.c.l.b16 %v309
        %v973 = vunpack.c.l.b16 %v310
        %v974 = vpack.c.b16 %v943, %v942
        %v975 = vpack.c.b16 %v945, %v944
        %v976 = vpack.c.b16 %v947, %v946
        %v977 = vpack.c.b16 %v949, %v948
        %v978 = vpack.c.b16 %v951, %v950
        %v979 = vpack.c.b16 %v953, %v952
        %v980 = vpack.c.b16 %v955, %v954
        %v981 = vpack.c.b16 %v957, %v956
        %v982 = vpack.c.b16 %v959, %v958
        %v983 = vpack.c.b16 %v961, %v960
        %v984 = vpack.c.b16 %v963, %v962
        %v985 = vpack.c.b16 %v965, %v964
        %v986 = vpack.c.b16 %v967, %v966
        %v987 = vpack.c.b16 %v969, %v968
        %v988 = vpack.c.b16 %v971, %v970
        %v989 = vpack.c.b16 %v973, %v972
        %v991 = vsel %vm768, %v974, 0
        %v994 = vsel %vm768, %v975, 0
        %v997 = vsel %vm768, %v976, 0
        %v1000 = vsel %vm768, %v977, 0
        %v1003 = vsel %vm768, %v978, 0
        %v1006 = vsel %vm768, %v979, 0
        %v1009 = vsel %vm768, %v980, 0
        %v1012 = vsel %vm768, %v981, 0
        %v1015 = vsel %vm768, %v982, 0
        %v1018 = vsel %vm768, %v983, 0
        %v1021 = vsel %vm768, %v984, 0
        %v1024 = vsel %vm768, %v985, 0
        %v1027 = vsel %vm768, %v986, 0
        %v1030 = vsel %vm768, %v987, 0
        %v1033 = vsel %vm768, %v988, 0
        %v1036 = vsel %vm768, %v989, 0
        %v1039 = vsel %vm817, %v311, 0
        %1041 = vmatpush.bf16.msra.mxu0 0
        %1042 = vmatpush.bf16.msra.mxu0 0
        %1043 = vmatpush.bf16.msra.mxu0 0
        %1044 = vmatpush.bf16.msra.mxu0 0
        %1045 = vmatpush.bf16.msra.mxu0 0
        %1046 = vmatpush.bf16.msra.mxu0 0
        %1047 = vmatpush.bf16.msra.mxu0 0
        %1048 = vmatpush.bf16.msra.mxu0 %v1039
        %1049 = vmatmul.bf16.gmra.mxu0 %v991
        %v1050 = vpop.f32.mrf.mxu0
        %v1051 = vadd.f32 %v831, %v1050
        %v1052 = vpop.f32.mrf.mxu0
        %v1053 = vadd.f32 %v833, %v1052
        %1054 = vmatmul.bf16.gmra.mxu0 %v994
        %v1055 = vpop.f32.mrf.mxu0
        %v1056 = vadd.f32 %v836, %v1055
        %v1057 = vpop.f32.mrf.mxu0
        %v1058 = vadd.f32 %v838, %v1057
        %1059 = vmatmul.bf16.gmra.mxu0 %v997
        %v1060 = vpop.f32.mrf.mxu0
        %v1061 = vadd.f32 %v841, %v1060
        %v1062 = vpop.f32.mrf.mxu0
        %v1063 = vadd.f32 %v843, %v1062
        %1064 = vmatmul.bf16.gmra.mxu0 %v1000
        %v1065 = vpop.f32.mrf.mxu0
        %v1066 = vadd.f32 %v846, %v1065
        %v1067 = vpop.f32.mrf.mxu0
        %v1068 = vadd.f32 %v848, %v1067
        %1069 = vmatmul.bf16.gmra.mxu0 %v1003
        %v1070 = vpop.f32.mrf.mxu0
        %v1071 = vadd.f32 %v851, %v1070
        %v1072 = vpop.f32.mrf.mxu0
        %v1073 = vadd.f32 %v853, %v1072
        %1074 = vmatmul.bf16.gmra.mxu0 %v1006
        %v1075 = vpop.f32.mrf.mxu0
        %v1076 = vadd.f32 %v856, %v1075
        %v1077 = vpop.f32.mrf.mxu0
        %v1078 = vadd.f32 %v858, %v1077
        %1079 = vmatmul.bf16.gmra.mxu0 %v1009
        %v1080 = vpop.f32.mrf.mxu0
        %v1081 = vadd.f32 %v861, %v1080
        %v1082 = vpop.f32.mrf.mxu0
        %v1083 = vadd.f32 %v863, %v1082
        %1084 = vmatmul.bf16.gmra.mxu0 %v1012
        %v1085 = vpop.f32.mrf.mxu0
        %v1086 = vadd.f32 %v866, %v1085
        %v1087 = vpop.f32.mrf.mxu0
        %v1088 = vadd.f32 %v868, %v1087
        %1089 = vmatmul.bf16.gmra.mxu0 %v1015
        %v1090 = vpop.f32.mrf.mxu0
        %v1091 = vadd.f32 %v871, %v1090
        %v1092 = vpop.f32.mrf.mxu0
        %v1093 = vadd.f32 %v873, %v1092
        %1094 = vmatmul.bf16.gmra.mxu0 %v1018
        %v1095 = vpop.f32.mrf.mxu0
        %v1096 = vadd.f32 %v876, %v1095
        %v1097 = vpop.f32.mrf.mxu0
        %v1098 = vadd.f32 %v878, %v1097
        %1099 = vmatmul.bf16.gmra.mxu0 %v1021
        %v1100 = vpop.f32.mrf.mxu0
        %v1101 = vadd.f32 %v881, %v1100
        %v1102 = vpop.f32.mrf.mxu0
        %v1103 = vadd.f32 %v883, %v1102
        %1104 = vmatmul.bf16.gmra.mxu0 %v1024
        %v1105 = vpop.f32.mrf.mxu0
        %v1106 = vadd.f32 %v886, %v1105
        %v1107 = vpop.f32.mrf.mxu0
        %v1108 = vadd.f32 %v888, %v1107
        %1109 = vmatmul.bf16.gmra.mxu0 %v1027
        %v1110 = vpop.f32.mrf.mxu0
        %v1111 = vadd.f32 %v891, %v1110
        %v1112 = vpop.f32.mrf.mxu0
        %v1113 = vadd.f32 %v893, %v1112
        %1114 = vmatmul.bf16.gmra.mxu0 %v1030
        %v1115 = vpop.f32.mrf.mxu0
        %v1116 = vadd.f32 %v896, %v1115
        %v1117 = vpop.f32.mrf.mxu0
        %v1118 = vadd.f32 %v898, %v1117
        %1119 = vmatmul.bf16.gmra.mxu0 %v1033
        %v1120 = vpop.f32.mrf.mxu0
        %v1121 = vadd.f32 %v901, %v1120
        %v1122 = vpop.f32.mrf.mxu0
        %v1123 = vadd.f32 %v903, %v1122
        %1124 = vmatmul.bf16.gmra.mxu0 %v1036
        %v1125 = vpop.f32.mrf.mxu0
        %v1126 = vadd.f32 %v906, %v1125
        %v1127 = vpop.f32.mrf.mxu0
        %v1128 = vadd.f32 %v908, %v1127
        %1129 = vdwg.mxu0
        %v1130 = vld [vmem:[%s277] sm:$0xe]
        %v1131 = vld [vmem:[%s277 + $0xc] sm:$0xe]
        %v1132 = vld [vmem:[%s277 + $0x18] sm:$0xe]
        %v1133 = vld [vmem:[%s277 + $0x24] sm:$0xe]
        %v1134 = vld [vmem:[%s277 + $0x30] sm:$0xe]
        %v1135 = vld [vmem:[%s277 + $0x3c] sm:$0xe]
        %v1136 = vld [vmem:[%s277 + $0x48] sm:$0xe]
        %v1137 = vld [vmem:[%s277 + $0x54] sm:$0xe]
        %v1138 = vld [vmem:[%s277 + $0x60] sm:$0xe]
        %v1139 = vld [vmem:[%s277 + $0x6c] sm:$0xe]
        %v1140 = vld [vmem:[%s277 + $0x78] sm:$0xe]
        %v1141 = vld [vmem:[%s277 + $0x84] sm:$0xe]
        %v1142 = vld [vmem:[%s277 + $0x90] sm:$0xe]
        %v1143 = vld [vmem:[%s277 + $0x9c] sm:$0xe]
        %v1144 = vld [vmem:[%s277 + $0xa8] sm:$0xe]
        %v1145 = vld [vmem:[%s277 + $0xb4] sm:$0xe]
        %vm1178 = vcmask 1042432
        %vm1179 = vcmask 1046532
        %vm1180 = vmor %vm1178, %vm1179
        %v1181 = vrot.slane %v1130, 5
        %v1182 = vrot.slane %v1181, 4
        %v1183 = vrot.slane %v280, 5
        %v1184 = vsel %vm1180, %v1182, %v1183
        %v1185 = vrot.slane %v1183, 4
        %v1186 = vrot.slane %v312, 5
        %v1187 = vsel %vm1180, %v1185, %v1186
        %v1188 = vrot.slane %v1131, 5
        %v1189 = vrot.slane %v1188, 4
        %v1190 = vrot.slane %v282, 5
        %v1191 = vsel %vm1180, %v1189, %v1190
        %v1192 = vrot.slane %v1190, 4
        %v1193 = vrot.slane %v313, 5
        %v1194 = vsel %vm1180, %v1192, %v1193
        %v1195 = vrot.slane %v1132, 5
        %v1196 = vrot.slane %v1195, 4
        %v1197 = vrot.slane %v284, 5
        %v1198 = vsel %vm1180, %v1196, %v1197
        %v1199 = vrot.slane %v1197, 4
        %v1200 = vrot.slane %v314, 5
        %v1201 = vsel %vm1180, %v1199, %v1200
        %v1202 = vrot.slane %v1133, 5
        %v1203 = vrot.slane %v1202, 4
        %v1204 = vrot.slane %v286, 5
        %v1205 = vsel %vm1180, %v1203, %v1204
        %v1206 = vrot.slane %v1204, 4
        %v1207 = vrot.slane %v315, 5
        %v1208 = vsel %vm1180, %v1206, %v1207
        %v1209 = vrot.slane %v1134, 5
        %v1210 = vrot.slane %v1209, 4
        %v1211 = vrot.slane %v288, 5
        %v1212 = vsel %vm1180, %v1210, %v1211
        %v1213 = vrot.slane %v1211, 4
        %v1214 = vrot.slane %v316, 5
        %v1215 = vsel %vm1180, %v1213, %v1214
        %v1216 = vrot.slane %v1135, 5
        %v1217 = vrot.slane %v1216, 4
        %v1218 = vrot.slane %v290, 5
        %v1219 = vsel %vm1180, %v1217, %v1218
        %v1220 = vrot.slane %v1218, 4
        %v1221 = vrot.slane %v317, 5
        %v1222 = vsel %vm1180, %v1220, %v1221
        %v1223 = vrot.slane %v1136, 5
        %v1224 = vrot.slane %v1223, 4
        %v1225 = vrot.slane %v292, 5
        %v1226 = vsel %vm1180, %v1224, %v1225
        %v1227 = vrot.slane %v1225, 4
        %v1228 = vrot.slane %v318, 5
        %v1229 = vsel %vm1180, %v1227, %v1228
        %v1230 = vrot.slane %v1137, 5
        %v1231 = vrot.slane %v1230, 4
        %v1232 = vrot.slane %v294, 5
        %v1233 = vsel %vm1180, %v1231, %v1232
        %v1234 = vrot.slane %v1232, 4
        %v1235 = vrot.slane %v319, 5
        %v1236 = vsel %vm1180, %v1234, %v1235
        %v1237 = vrot.slane %v1138, 5
        %v1238 = vrot.slane %v1237, 4
        %v1239 = vrot.slane %v296, 5
        %v1240 = vsel %vm1180, %v1238, %v1239
        %v1241 = vrot.slane %v1239, 4
        %v1242 = vrot.slane %v320, 5
        %v1243 = vsel %vm1180, %v1241, %v1242
        %v1244 = vrot.slane %v1139, 5
        %v1245 = vrot.slane %v1244, 4
        %v1246 = vrot.slane %v298, 5
        %v1247 = vsel %vm1180, %v1245, %v1246
        %v1248 = vrot.slane %v1246, 4
        %v1249 = vrot.slane %v321, 5
        %v1250 = vsel %vm1180, %v1248, %v1249
        %v1251 = vrot.slane %v1140, 5
        %v1252 = vrot.slane %v1251, 4
        %v1253 = vrot.slane %v300, 5
        %v1254 = vsel %vm1180, %v1252, %v1253
        %v1255 = vrot.slane %v1253, 4
        %v1256 = vrot.slane %v322, 5
        %v1257 = vsel %vm1180, %v1255, %v1256
        %v1258 = vrot.slane %v1141, 5
        %v1259 = vrot.slane %v1258, 4
        %v1260 = vrot.slane %v302, 5
        %v1261 = vsel %vm1180, %v1259, %v1260
        %v1262 = vrot.slane %v1260, 4
        %v1263 = vrot.slane %v323, 5
        %v1264 = vsel %vm1180, %v1262, %v1263
        %v1265 = vrot.slane %v1142, 5
        %v1266 = vrot.slane %v1265, 4
        %v1267 = vrot.slane %v304, 5
        %v1268 = vsel %vm1180, %v1266, %v1267
        %v1269 = vrot.slane %v1267, 4
        %v1270 = vrot.slane %v324, 5
        %v1271 = vsel %vm1180, %v1269, %v1270
        %v1272 = vrot.slane %v1143, 5
        %v1273 = vrot.slane %v1272, 4
        %v1274 = vrot.slane %v306, 5
        %v1275 = vsel %vm1180, %v1273, %v1274
        %v1276 = vrot.slane %v1274, 4
        %v1277 = vrot.slane %v325, 5
        %v1278 = vsel %vm1180, %v1276, %v1277
        %v1279 = vrot.slane %v1144, 5
        %v1280 = vrot.slane %v1279, 4
        %v1281 = vrot.slane %v308, 5
        %v1282 = vsel %vm1180, %v1280, %v1281
        %v1283 = vrot.slane %v1281, 4
        %v1284 = vrot.slane %v326, 5
        %v1285 = vsel %vm1180, %v1283, %v1284
        %v1286 = vrot.slane %v1145, 5
        %v1287 = vrot.slane %v1286, 4
        %v1288 = vrot.slane %v310, 5
        %v1289 = vsel %vm1180, %v1287, %v1288
        %v1290 = vrot.slane %v1288, 4
        %v1291 = vrot.slane %v327, 5
        %v1292 = vsel %vm1180, %v1290, %v1291
        %v1293 = vld [vmem:[%s1 + $0x4] sm:$0x3]
        %v1294 = vunpack.c.l.b16 %v1184
        %v1295 = vunpack.c.l.b16 %v1187
        %v1296 = vunpack.c.l.b16 %v1191
        %v1297 = vunpack.c.l.b16 %v1194
        %v1298 = vunpack.c.l.b16 %v1198
        %v1299 = vunpack.c.l.b16 %v1201
        %v1300 = vunpack.c.l.b16 %v1205
        %v1301 = vunpack.c.l.b16 %v1208
        %v1302 = vunpack.c.l.b16 %v1212
        %v1303 = vunpack.c.l.b16 %v1215
        %v1304 = vunpack.c.l.b16 %v1219
        %v1305 = vunpack.c.l.b16 %v1222
        %v1306 = vunpack.c.l.b16 %v1226
        %v1307 = vunpack.c.l.b16 %v1229
        %v1308 = vunpack.c.l.b16 %v1233
        %v1309 = vunpack.c.l.b16 %v1236
        %v1310 = vunpack.c.l.b16 %v1240
        %v1311 = vunpack.c.l.b16 %v1243
        %v1312 = vunpack.c.l.b16 %v1247
        %v1313 = vunpack.c.l.b16 %v1250
        %v1314 = vunpack.c.l.b16 %v1254
        %v1315 = vunpack.c.l.b16 %v1257
        %v1316 = vunpack.c.l.b16 %v1261
        %v1317 = vunpack.c.l.b16 %v1264
        %v1318 = vunpack.c.l.b16 %v1268
        %v1319 = vunpack.c.l.b16 %v1271
        %v1320 = vunpack.c.l.b16 %v1275
        %v1321 = vunpack.c.l.b16 %v1278
        %v1322 = vunpack.c.l.b16 %v1282
        %v1323 = vunpack.c.l.b16 %v1285
        %v1324 = vunpack.c.l.b16 %v1289
        %v1325 = vunpack.c.l.b16 %v1292
        %v1326 = vpack.c.b16 %v1295, %v1294
        %v1327 = vpack.c.b16 %v1297, %v1296
        %v1328 = vpack.c.b16 %v1299, %v1298
        %v1329 = vpack.c.b16 %v1301, %v1300
        %v1330 = vpack.c.b16 %v1303, %v1302
        %v1331 = vpack.c.b16 %v1305, %v1304
        %v1332 = vpack.c.b16 %v1307, %v1306
        %v1333 = vpack.c.b16 %v1309, %v1308
        %v1334 = vpack.c.b16 %v1311, %v1310
        %v1335 = vpack.c.b16 %v1313, %v1312
        %v1336 = vpack.c.b16 %v1315, %v1314
        %v1337 = vpack.c.b16 %v1317, %v1316
        %v1338 = vpack.c.b16 %v1319, %v1318
        %v1339 = vpack.c.b16 %v1321, %v1320
        %v1340 = vpack.c.b16 %v1323, %v1322
        %v1341 = vpack.c.b16 %v1325, %v1324
        %v1343 = vsel %vm768, %v1326, 0
        %v1346 = vsel %vm768, %v1327, 0
        %v1349 = vsel %vm768, %v1328, 0
        %v1352 = vsel %vm768, %v1329, 0
        %v1355 = vsel %vm768, %v1330, 0
        %v1358 = vsel %vm768, %v1331, 0
        %v1361 = vsel %vm768, %v1332, 0
        %v1364 = vsel %vm768, %v1333, 0
        %v1367 = vsel %vm768, %v1334, 0
        %v1370 = vsel %vm768, %v1335, 0
        %v1373 = vsel %vm768, %v1336, 0
        %v1376 = vsel %vm768, %v1337, 0
        %v1379 = vsel %vm768, %v1338, 0
        %v1382 = vsel %vm768, %v1339, 0
        %v1385 = vsel %vm768, %v1340, 0
        %v1388 = vsel %vm768, %v1341, 0
        %v1391 = vsel %vm817, %v1293, 0
        %1393 = vmatpush.bf16.msra.mxu0 0
        %1394 = vmatpush.bf16.msra.mxu0 0
        %1395 = vmatpush.bf16.msra.mxu0 0
        %1396 = vmatpush.bf16.msra.mxu0 0
        %1397 = vmatpush.bf16.msra.mxu0 0
        %1398 = vmatpush.bf16.msra.mxu0 0
        %1399 = vmatpush.bf16.msra.mxu0 0
        %1400 = vmatpush.bf16.msra.mxu0 %v1391
        %1401 = vmatmul.bf16.gmra.mxu0 %v1343
        %v1402 = vpop.f32.mrf.mxu0
        %v1403 = vadd.f32 0.0, %v1402
        %v1404 = vpop.f32.mrf.mxu0
        %v1405 = vadd.f32 0.0, %v1404
        %1406 = vmatmul.bf16.gmra.mxu0 %v1346
        %v1407 = vpop.f32.mrf.mxu0
        %v1408 = vadd.f32 0.0, %v1407
        %v1409 = vpop.f32.mrf.mxu0
        %v1410 = vadd.f32 0.0, %v1409
        %1411 = vmatmul.bf16.gmra.mxu0 %v1349
        %v1412 = vpop.f32.mrf.mxu0
        %v1413 = vadd.f32 0.0, %v1412
        %v1414 = vpop.f32.mrf.mxu0
        %v1415 = vadd.f32 0.0, %v1414
        %1416 = vmatmul.bf16.gmra.mxu0 %v1352
        %v1417 = vpop.f32.mrf.mxu0
        %v1418 = vadd.f32 0.0, %v1417
        %v1419 = vpop.f32.mrf.mxu0
        %v1420 = vadd.f32 0.0, %v1419
        %1421 = vmatmul.bf16.gmra.mxu0 %v1355
        %v1422 = vpop.f32.mrf.mxu0
        %v1423 = vadd.f32 0.0, %v1422
        %v1424 = vpop.f32.mrf.mxu0
        %v1425 = vadd.f32 0.0, %v1424
        %1426 = vmatmul.bf16.gmra.mxu0 %v1358
        %v1427 = vpop.f32.mrf.mxu0
        %v1428 = vadd.f32 0.0, %v1427
        %v1429 = vpop.f32.mrf.mxu0
        %v1430 = vadd.f32 0.0, %v1429
        %1431 = vmatmul.bf16.gmra.mxu0 %v1361
        %v1432 = vpop.f32.mrf.mxu0
        %v1433 = vadd.f32 0.0, %v1432
        %v1434 = vpop.f32.mrf.mxu0
        %v1435 = vadd.f32 0.0, %v1434
        %1436 = vmatmul.bf16.gmra.mxu0 %v1364
        %v1437 = vpop.f32.mrf.mxu0
        %v1438 = vadd.f32 0.0, %v1437
        %v1439 = vpop.f32.mrf.mxu0
        %v1440 = vadd.f32 0.0, %v1439
        %1441 = vmatmul.bf16.gmra.mxu0 %v1367
        %v1442 = vpop.f32.mrf.mxu0
        %v1443 = vadd.f32 0.0, %v1442
        %v1444 = vpop.f32.mrf.mxu0
        %v1445 = vadd.f32 0.0, %v1444
        %1446 = vmatmul.bf16.gmra.mxu0 %v1370
        %v1447 = vpop.f32.mrf.mxu0
        %v1448 = vadd.f32 0.0, %v1447
        %v1449 = vpop.f32.mrf.mxu0
        %v1450 = vadd.f32 0.0, %v1449
        %1451 = vmatmul.bf16.gmra.mxu0 %v1373
        %v1452 = vpop.f32.mrf.mxu0
        %v1453 = vadd.f32 0.0, %v1452
        %v1454 = vpop.f32.mrf.mxu0
        %v1455 = vadd.f32 0.0, %v1454
        %1456 = vmatmul.bf16.gmra.mxu0 %v1376
        %v1457 = vpop.f32.mrf.mxu0
        %v1458 = vadd.f32 0.0, %v1457
        %v1459 = vpop.f32.mrf.mxu0
        %v1460 = vadd.f32 0.0, %v1459
        %1461 = vmatmul.bf16.gmra.mxu0 %v1379
        %v1462 = vpop.f32.mrf.mxu0
        %v1463 = vadd.f32 0.0, %v1462
        %v1464 = vpop.f32.mrf.mxu0
        %v1465 = vadd.f32 0.0, %v1464
        %1466 = vmatmul.bf16.gmra.mxu0 %v1382
        %v1467 = vpop.f32.mrf.mxu0
        %v1468 = vadd.f32 0.0, %v1467
        %v1469 = vpop.f32.mrf.mxu0
        %v1470 = vadd.f32 0.0, %v1469
        %1471 = vmatmul.bf16.gmra.mxu0 %v1385
        %v1472 = vpop.f32.mrf.mxu0
        %v1473 = vadd.f32 0.0, %v1472
        %v1474 = vpop.f32.mrf.mxu0
        %v1475 = vadd.f32 0.0, %v1474
        %1476 = vmatmul.bf16.gmra.mxu0 %v1388
        %v1477 = vpop.f32.mrf.mxu0
        %v1478 = vadd.f32 0.0, %v1477
        %v1479 = vpop.f32.mrf.mxu0
        %v1480 = vadd.f32 0.0, %v1479
        %1481 = vdwg.mxu0
        %v1482 = vadd.f32 %v1051, %v1403
        %v1483 = vadd.f32 %v1053, %v1405
        %v1484 = vadd.f32 %v1056, %v1408
        %v1485 = vadd.f32 %v1058, %v1410
        %v1486 = vadd.f32 %v1061, %v1413
        %v1487 = vadd.f32 %v1063, %v1415
        %v1488 = vadd.f32 %v1066, %v1418
        %v1489 = vadd.f32 %v1068, %v1420
        %v1490 = vadd.f32 %v1071, %v1423
        %v1491 = vadd.f32 %v1073, %v1425
        %v1492 = vadd.f32 %v1076, %v1428
        %v1493 = vadd.f32 %v1078, %v1430
        %v1494 = vadd.f32 %v1081, %v1433
        %v1495 = vadd.f32 %v1083, %v1435
        %v1496 = vadd.f32 %v1086, %v1438
        %v1497 = vadd.f32 %v1088, %v1440
        %v1498 = vadd.f32 %v1091, %v1443
        %v1499 = vadd.f32 %v1093, %v1445
        %v1500 = vadd.f32 %v1096, %v1448
        %v1501 = vadd.f32 %v1098, %v1450
        %v1502 = vadd.f32 %v1101, %v1453
        %v1503 = vadd.f32 %v1103, %v1455
        %v1504 = vadd.f32 %v1106, %v1458
        %v1505 = vadd.f32 %v1108, %v1460
        %v1506 = vadd.f32 %v1111, %v1463
        %v1507 = vadd.f32 %v1113, %v1465
        %v1508 = vadd.f32 %v1116, %v1468
        %v1509 = vadd.f32 %v1118, %v1470
        %v1510 = vadd.f32 %v1121, %v1473
        %v1511 = vadd.f32 %v1123, %v1475
        %v1512 = vadd.f32 %v1126, %v1478
        %v1513 = vadd.f32 %v1128, %v1480
        %s1514 = scalar_lea.vmem %s277, 12
        %v1515 = vld [vmem:[%s1514] sm:$0xf]
        %v1516 = vld [vmem:[%s1514 + $0x4] sm:$0xf]
        %v1517 = vld [vmem:[%s1514 + $0xc] sm:$0xf]
        %v1518 = vld [vmem:[%s1514 + $0x10] sm:$0xf]
        %v1519 = vld [vmem:[%s1514 + $0x18] sm:$0xf]
        %v1520 = vld [vmem:[%s1514 + $0x1c] sm:$0xf]
        %v1521 = vld [vmem:[%s1514 + $0x24] sm:$0xf]
        %v1522 = vld [vmem:[%s1514 + $0x28] sm:$0xf]
        %v1523 = vld [vmem:[%s1514 + $0x30] sm:$0xf]
        %v1524 = vld [vmem:[%s1514 + $0x34] sm:$0xf]
        %v1525 = vld [vmem:[%s1514 + $0x3c] sm:$0xf]
        %v1526 = vld [vmem:[%s1514 + $0x40] sm:$0xf]
        %v1527 = vld [vmem:[%s1514 + $0x48] sm:$0xf]
        %v1528 = vld [vmem:[%s1514 + $0x4c] sm:$0xf]
        %v1529 = vld [vmem:[%s1514 + $0x54] sm:$0xf]
        %v1530 = vld [vmem:[%s1514 + $0x58] sm:$0xf]
        %v1531 = vld [vmem:[%s1514 + $0x60] sm:$0xf]
        %v1532 = vld [vmem:[%s1514 + $0x64] sm:$0xf]
        %v1533 = vld [vmem:[%s1514 + $0x6c] sm:$0xf]
        %v1534 = vld [vmem:[%s1514 + $0x70] sm:$0xf]
        %v1535 = vld [vmem:[%s1514 + $0x78] sm:$0xf]
        %v1536 = vld [vmem:[%s1514 + $0x7c] sm:$0xf]
        %v1537 = vld [vmem:[%s1514 + $0x84] sm:$0xf]
        %v1538 = vld [vmem:[%s1514 + $0x88] sm:$0xf]
        %v1539 = vld [vmem:[%s1514 + $0x90] sm:$0xf]
        %v1540 = vld [vmem:[%s1514 + $0x94] sm:$0xf]
        %v1541 = vld [vmem:[%s1514 + $0x9c] sm:$0xf]
        %v1542 = vld [vmem:[%s1514 + $0xa0] sm:$0xf]
        %v1543 = vld [vmem:[%s1514 + $0xa8] sm:$0xf]
        %v1544 = vld [vmem:[%s1514 + $0xac] sm:$0xf]
        %v1545 = vld [vmem:[%s1514 + $0xb4] sm:$0xf]
        %v1546 = vld [vmem:[%s1514 + $0xb8] sm:$0xf]
        %v1547 = vld [vmem:[%s1 + $0x4] sm:$0xc]
        %v1580 = vunpack.c.l.b16 %v1515
        %v1581 = vunpack.c.l.b16 %v1516
        %v1582 = vunpack.c.l.b16 %v1517
        %v1583 = vunpack.c.l.b16 %v1518
        %v1584 = vunpack.c.l.b16 %v1519
        %v1585 = vunpack.c.l.b16 %v1520
        %v1586 = vunpack.c.l.b16 %v1521
        %v1587 = vunpack.c.l.b16 %v1522
        %v1588 = vunpack.c.l.b16 %v1523
        %v1589 = vunpack.c.l.b16 %v1524
        %v1590 = vunpack.c.l.b16 %v1525
        %v1591 = vunpack.c.l.b16 %v1526
        %v1592 = vunpack.c.l.b16 %v1527
        %v1593 = vunpack.c.l.b16 %v1528
        %v1594 = vunpack.c.l.b16 %v1529
        %v1595 = vunpack.c.l.b16 %v1530
        %v1596 = vunpack.c.l.b16 %v1531
        %v1597 = vunpack.c.l.b16 %v1532
        %v1598 = vunpack.c.l.b16 %v1533
        %v1599 = vunpack.c.l.b16 %v1534
        %v1600 = vunpack.c.l.b16 %v1535
        %v1601 = vunpack.c.l.b16 %v1536
        %v1602 = vunpack.c.l.b16 %v1537
        %v1603 = vunpack.c.l.b16 %v1538
        %v1604 = vunpack.c.l.b16 %v1539
        %v1605 = vunpack.c.l.b16 %v1540
        %v1606 = vunpack.c.l.b16 %v1541
        %v1607 = vunpack.c.l.b16 %v1542
        %v1608 = vunpack.c.l.b16 %v1543
        %v1609 = vunpack.c.l.b16 %v1544
        %v1610 = vunpack.c.l.b16 %v1545
        %v1611 = vunpack.c.l.b16 %v1546
        %v1612 = vpack.c.b16 %v1581, %v1580
        %v1613 = vpack.c.b16 %v1583, %v1582
        %v1614 = vpack.c.b16 %v1585, %v1584
        %v1615 = vpack.c.b16 %v1587, %v1586
        %v1616 = vpack.c.b16 %v1589, %v1588
        %v1617 = vpack.c.b16 %v1591, %v1590
        %v1618 = vpack.c.b16 %v1593, %v1592
        %v1619 = vpack.c.b16 %v1595, %v1594
        %v1620 = vpack.c.b16 %v1597, %v1596
        %v1621 = vpack.c.b16 %v1599, %v1598
        %v1622 = vpack.c.b16 %v1601, %v1600
        %v1623 = vpack.c.b16 %v1603, %v1602
        %v1624 = vpack.c.b16 %v1605, %v1604
        %v1625 = vpack.c.b16 %v1607, %v1606
        %v1626 = vpack.c.b16 %v1609, %v1608
        %v1627 = vpack.c.b16 %v1611, %v1610
        %v1629 = vunpack.c.l.b16 %v1547
        %v1630 = vpack.c.b16 %v1629, %v1629
        %v1631 = vrot.slane %v1630, 2
        %v1633 = vsel %vm768, %v1612, 0
        %v1636 = vsel %vm768, %v1613, 0
        %v1639 = vsel %vm768, %v1614, 0
        %v1642 = vsel %vm768, %v1615, 0
        %v1645 = vsel %vm768, %v1616, 0
        %v1648 = vsel %vm768, %v1617, 0
        %v1651 = vsel %vm768, %v1618, 0
        %v1654 = vsel %vm768, %v1619, 0
        %v1657 = vsel %vm768, %v1620, 0
        %v1660 = vsel %vm768, %v1621, 0
        %v1663 = vsel %vm768, %v1622, 0
        %v1666 = vsel %vm768, %v1623, 0
        %v1669 = vsel %vm768, %v1624, 0
        %v1672 = vsel %vm768, %v1625, 0
        %v1675 = vsel %vm768, %v1626, 0
        %v1678 = vsel %vm768, %v1627, 0
        %v1681 = vsel %vm817, %v1631, 0
        %1683 = vmatpush.bf16.msra.mxu0 0
        %1684 = vmatpush.bf16.msra.mxu0 0
        %1685 = vmatpush.bf16.msra.mxu0 0
        %1686 = vmatpush.bf16.msra.mxu0 0
        %1687 = vmatpush.bf16.msra.mxu0 0
        %1688 = vmatpush.bf16.msra.mxu0 0
        %1689 = vmatpush.bf16.msra.mxu0 0
        %1690 = vmatpush.bf16.msra.mxu0 %v1681
        %1691 = vmatmul.bf16.gmra.mxu0 %v1633
        %v1692 = vpop.f32.mrf.mxu0
        %v1693 = vadd.f32 0.0, %v1692
        %v1694 = vpop.f32.mrf.mxu0
        %v1695 = vadd.f32 0.0, %v1694
        %1696 = vmatmul.bf16.gmra.mxu0 %v1636
        %v1697 = vpop.f32.mrf.mxu0
        %v1698 = vadd.f32 0.0, %v1697
        %v1699 = vpop.f32.mrf.mxu0
        %v1700 = vadd.f32 0.0, %v1699
        %1701 = vmatmul.bf16.gmra.mxu0 %v1639
        %v1702 = vpop.f32.mrf.mxu0
        %v1703 = vadd.f32 0.0, %v1702
        %v1704 = vpop.f32.mrf.mxu0
        %v1705 = vadd.f32 0.0, %v1704
        %1706 = vmatmul.bf16.gmra.mxu0 %v1642
        %v1707 = vpop.f32.mrf.mxu0
        %v1708 = vadd.f32 0.0, %v1707
        %v1709 = vpop.f32.mrf.mxu0
        %v1710 = vadd.f32 0.0, %v1709
        %1711 = vmatmul.bf16.gmra.mxu0 %v1645
        %v1712 = vpop.f32.mrf.mxu0
        %v1713 = vadd.f32 0.0, %v1712
        %v1714 = vpop.f32.mrf.mxu0
        %v1715 = vadd.f32 0.0, %v1714
        %1716 = vmatmul.bf16.gmra.mxu0 %v1648
        %v1717 = vpop.f32.mrf.mxu0
        %v1718 = vadd.f32 0.0, %v1717
        %v1719 = vpop.f32.mrf.mxu0
        %v1720 = vadd.f32 0.0, %v1719
        %1721 = vmatmul.bf16.gmra.mxu0 %v1651
        %v1722 = vpop.f32.mrf.mxu0
        %v1723 = vadd.f32 0.0, %v1722
        %v1724 = vpop.f32.mrf.mxu0
        %v1725 = vadd.f32 0.0, %v1724
        %1726 = vmatmul.bf16.gmra.mxu0 %v1654
        %v1727 = vpop.f32.mrf.mxu0
        %v1728 = vadd.f32 0.0, %v1727
        %v1729 = vpop.f32.mrf.mxu0
        %v1730 = vadd.f32 0.0, %v1729
        %1731 = vmatmul.bf16.gmra.mxu0 %v1657
        %v1732 = vpop.f32.mrf.mxu0
        %v1733 = vadd.f32 0.0, %v1732
        %v1734 = vpop.f32.mrf.mxu0
        %v1735 = vadd.f32 0.0, %v1734
        %1736 = vmatmul.bf16.gmra.mxu0 %v1660
        %v1737 = vpop.f32.mrf.mxu0
        %v1738 = vadd.f32 0.0, %v1737
        %v1739 = vpop.f32.mrf.mxu0
        %v1740 = vadd.f32 0.0, %v1739
        %1741 = vmatmul.bf16.gmra.mxu0 %v1663
        %v1742 = vpop.f32.mrf.mxu0
        %v1743 = vadd.f32 0.0, %v1742
        %v1744 = vpop.f32.mrf.mxu0
        %v1745 = vadd.f32 0.0, %v1744
        %1746 = vmatmul.bf16.gmra.mxu0 %v1666
        %v1747 = vpop.f32.mrf.mxu0
        %v1748 = vadd.f32 0.0, %v1747
        %v1749 = vpop.f32.mrf.mxu0
        %v1750 = vadd.f32 0.0, %v1749
        %1751 = vmatmul.bf16.gmra.mxu0 %v1669
        %v1752 = vpop.f32.mrf.mxu0
        %v1753 = vadd.f32 0.0, %v1752
        %v1754 = vpop.f32.mrf.mxu0
        %v1755 = vadd.f32 0.0, %v1754
        %1756 = vmatmul.bf16.gmra.mxu0 %v1672
        %v1757 = vpop.f32.mrf.mxu0
        %v1758 = vadd.f32 0.0, %v1757
        %v1759 = vpop.f32.mrf.mxu0
        %v1760 = vadd.f32 0.0, %v1759
        %1761 = vmatmul.bf16.gmra.mxu0 %v1675
        %v1762 = vpop.f32.mrf.mxu0
        %v1763 = vadd.f32 0.0, %v1762
        %v1764 = vpop.f32.mrf.mxu0
        %v1765 = vadd.f32 0.0, %v1764
        %1766 = vmatmul.bf16.gmra.mxu0 %v1678
        %v1767 = vpop.f32.mrf.mxu0
        %v1768 = vadd.f32 0.0, %v1767
        %v1769 = vpop.f32.mrf.mxu0
        %v1770 = vadd.f32 0.0, %v1769
        %1771 = vdwg.mxu0
        %v1772 = vadd.f32 %v1482, %v1693
        %v1773 = vadd.f32 %v1483, %v1695
        %v1774 = vadd.f32 %v1484, %v1698
        %v1775 = vadd.f32 %v1485, %v1700
        %v1776 = vadd.f32 %v1486, %v1703
        %v1777 = vadd.f32 %v1487, %v1705
        %v1778 = vadd.f32 %v1488, %v1708
        %v1779 = vadd.f32 %v1489, %v1710
        %v1780 = vadd.f32 %v1490, %v1713
        %v1781 = vadd.f32 %v1491, %v1715
        %v1782 = vadd.f32 %v1492, %v1718
        %v1783 = vadd.f32 %v1493, %v1720
        %v1784 = vadd.f32 %v1494, %v1723
        %v1785 = vadd.f32 %v1495, %v1725
        %v1786 = vadd.f32 %v1496, %v1728
        %v1787 = vadd.f32 %v1497, %v1730
        %v1788 = vadd.f32 %v1498, %v1733
        %v1789 = vadd.f32 %v1499, %v1735
        %v1790 = vadd.f32 %v1500, %v1738
        %v1791 = vadd.f32 %v1501, %v1740
        %v1792 = vadd.f32 %v1502, %v1743
        %v1793 = vadd.f32 %v1503, %v1745
        %v1794 = vadd.f32 %v1504, %v1748
        %v1795 = vadd.f32 %v1505, %v1750
        %v1796 = vadd.f32 %v1506, %v1753
        %v1797 = vadd.f32 %v1507, %v1755
        %v1798 = vadd.f32 %v1508, %v1758
        %v1799 = vadd.f32 %v1509, %v1760
        %v1800 = vadd.f32 %v1510, %v1763
        %v1801 = vadd.f32 %v1511, %v1765
        %v1802 = vadd.f32 %v1512, %v1768
        %v1803 = vadd.f32 %v1513, %v1770
        %v1804 = vld [vmem:[%s1514] sm:$0xf]
        %v1805 = vld [vmem:[%s1514 + $0x4] sm:$0xf]
        %v1806 = vld [vmem:[%s1514 + $0x8] sm:$0x1]
        %v1807 = vld [vmem:[%s1514 + $0xc] sm:$0xf]
        %v1808 = vld [vmem:[%s1514 + $0x10] sm:$0xf]
        %v1809 = vld [vmem:[%s1514 + $0x14] sm:$0x1]
        %v1810 = vld [vmem:[%s1514 + $0x18] sm:$0xf]
        %v1811 = vld [vmem:[%s1514 + $0x1c] sm:$0xf]
        %v1812 = vld [vmem:[%s1514 + $0x20] sm:$0x1]
        %v1813 = vld [vmem:[%s1514 + $0x24] sm:$0xf]
        %v1814 = vld [vmem:[%s1514 + $0x28] sm:$0xf]
        %v1815 = vld [vmem:[%s1514 + $0x2c] sm:$0x1]
        %v1816 = vld [vmem:[%s1514 + $0x30] sm:$0xf]
        %v1817 = vld [vmem:[%s1514 + $0x34] sm:$0xf]
        %v1818 = vld [vmem:[%s1514 + $0x38] sm:$0x1]
        %v1819 = vld [vmem:[%s1514 + $0x3c] sm:$0xf]
        %v1820 = vld [vmem:[%s1514 + $0x40] sm:$0xf]
        %v1821 = vld [vmem:[%s1514 + $0x44] sm:$0x1]
        %v1822 = vld [vmem:[%s1514 + $0x48] sm:$0xf]
        %v1823 = vld [vmem:[%s1514 + $0x4c] sm:$0xf]
        %v1824 = vld [vmem:[%s1514 + $0x50] sm:$0x1]
        %v1825 = vld [vmem:[%s1514 + $0x54] sm:$0xf]
        %v1826 = vld [vmem:[%s1514 + $0x58] sm:$0xf]
        %v1827 = vld [vmem:[%s1514 + $0x5c] sm:$0x1]
        %v1828 = vld [vmem:[%s1514 + $0x60] sm:$0xf]
        %v1829 = vld [vmem:[%s1514 + $0x64] sm:$0xf]
        %v1830 = vld [vmem:[%s1514 + $0x68] sm:$0x1]
        %v1831 = vld [vmem:[%s1514 + $0x6c] sm:$0xf]
        %v1832 = vld [vmem:[%s1514 + $0x70] sm:$0xf]
        %v1833 = vld [vmem:[%s1514 + $0x74] sm:$0x1]
        %v1834 = vld [vmem:[%s1514 + $0x78] sm:$0xf]
        %v1835 = vld [vmem:[%s1514 + $0x7c] sm:$0xf]
        %v1836 = vld [vmem:[%s1514 + $0x80] sm:$0x1]
        %v1837 = vld [vmem:[%s1514 + $0x84] sm:$0xf]
        %v1838 = vld [vmem:[%s1514 + $0x88] sm:$0xf]
        %v1839 = vld [vmem:[%s1514 + $0x8c] sm:$0x1]
        %v1840 = vld [vmem:[%s1514 + $0x90] sm:$0xf]
        %v1841 = vld [vmem:[%s1514 + $0x94] sm:$0xf]
        %v1842 = vld [vmem:[%s1514 + $0x98] sm:$0x1]
        %v1843 = vld [vmem:[%s1514 + $0x9c] sm:$0xf]
        %v1844 = vld [vmem:[%s1514 + $0xa0] sm:$0xf]
        %v1845 = vld [vmem:[%s1514 + $0xa4] sm:$0x1]
        %v1846 = vld [vmem:[%s1514 + $0xa8] sm:$0xf]
        %v1847 = vld [vmem:[%s1514 + $0xac] sm:$0xf]
        %v1848 = vld [vmem:[%s1514 + $0xb0] sm:$0x1]
        %v1849 = vld [vmem:[%s1514 + $0xb4] sm:$0xf]
        %v1850 = vld [vmem:[%s1514 + $0xb8] sm:$0xf]
        %v1851 = vld [vmem:[%s1514 + $0xbc] sm:$0x1]
        %v1853 = vshrl.u32 %v1804, 16
        %v1855 = vrot.slane %v1853, 4
        %v1856 = vshll.u32 %v1804, 16
        %v1858 = vrot.slane %v1856, 5
        %v1859 = vor.u32 %v1855, %v1858
        %v1860 = vrot.slane %v1859, 4
        %v1862 = vshll.u32 %v1805, 16
        %v1864 = vrot.slane %v1862, 5
        %v1865 = vsel %vm330, %v1860, %v1864
        %v1866 = vshrl.u32 %v1805, 16
        %v1868 = vrot.slane %v1866, 4
        %v1869 = vor.u32 %v1868, %v1864
        %v1870 = vrot.slane %v1869, 4
        %v1872 = vshll.u32 %v1806, 16
        %v1874 = vrot.slane %v1872, 5
        %v1875 = vsel %vm330, %v1870, %v1874
        %v1877 = vshrl.u32 %v1807, 16
        %v1879 = vrot.slane %v1877, 4
        %v1880 = vshll.u32 %v1807, 16
        %v1882 = vrot.slane %v1880, 5
        %v1883 = vor.u32 %v1879, %v1882
        %v1884 = vrot.slane %v1883, 4
        %v1886 = vshll.u32 %v1808, 16
        %v1888 = vrot.slane %v1886, 5
        %v1889 = vsel %vm330, %v1884, %v1888
        %v1890 = vshrl.u32 %v1808, 16
        %v1892 = vrot.slane %v1890, 4
        %v1893 = vor.u32 %v1892, %v1888
        %v1894 = vrot.slane %v1893, 4
        %v1896 = vshll.u32 %v1809, 16
        %v1898 = vrot.slane %v1896, 5
        %v1899 = vsel %vm330, %v1894, %v1898
        %v1901 = vshrl.u32 %v1810, 16
        %v1903 = vrot.slane %v1901, 4
        %v1904 = vshll.u32 %v1810, 16
        %v1906 = vrot.slane %v1904, 5
        %v1907 = vor.u32 %v1903, %v1906
        %v1908 = vrot.slane %v1907, 4
        %v1910 = vshll.u32 %v1811, 16
        %v1912 = vrot.slane %v1910, 5
        %v1913 = vsel %vm330, %v1908, %v1912
        %v1914 = vshrl.u32 %v1811, 16
        %v1916 = vrot.slane %v1914, 4
        %v1917 = vor.u32 %v1916, %v1912
        %v1918 = vrot.slane %v1917, 4
        %v1920 = vshll.u32 %v1812, 16
        %v1922 = vrot.slane %v1920, 5
        %v1923 = vsel %vm330, %v1918, %v1922
        %v1925 = vshrl.u32 %v1813, 16
        %v1927 = vrot.slane %v1925, 4
        %v1928 = vshll.u32 %v1813, 16
        %v1930 = vrot.slane %v1928, 5
        %v1931 = vor.u32 %v1927, %v1930
        %v1932 = vrot.slane %v1931, 4
        %v1934 = vshll.u32 %v1814, 16
        %v1936 = vrot.slane %v1934, 5
        %v1937 = vsel %vm330, %v1932, %v1936
        %v1938 = vshrl.u32 %v1814, 16
        %v1940 = vrot.slane %v1938, 4
        %v1941 = vor.u32 %v1940, %v1936
        %v1942 = vrot.slane %v1941, 4
        %v1944 = vshll.u32 %v1815, 16
        %v1946 = vrot.slane %v1944, 5
        %v1947 = vsel %vm330, %v1942, %v1946
        %v1949 = vshrl.u32 %v1816, 16
        %v1951 = vrot.slane %v1949, 4
        %v1952 = vshll.u32 %v1816, 16
        %v1954 = vrot.slane %v1952, 5
        %v1955 = vor.u32 %v1951, %v1954
        %v1956 = vrot.slane %v1955, 4
        %v1958 = vshll.u32 %v1817, 16
        %v1960 = vrot.slane %v1958, 5
        %v1961 = vsel %vm330, %v1956, %v1960
        %v1962 = vshrl.u32 %v1817, 16
        %v1964 = vrot.slane %v1962, 4
        %v1965 = vor.u32 %v1964, %v1960
        %v1966 = vrot.slane %v1965, 4
        %v1968 = vshll.u32 %v1818, 16
        %v1970 = vrot.slane %v1968, 5
        %v1971 = vsel %vm330, %v1966, %v1970
        %v1973 = vshrl.u32 %v1819, 16
        %v1975 = vrot.slane %v1973, 4
        %v1976 = vshll.u32 %v1819, 16
        %v1978 = vrot.slane %v1976, 5
        %v1979 = vor.u32 %v1975, %v1978
        %v1980 = vrot.slane %v1979, 4
        %v1982 = vshll.u32 %v1820, 16
        %v1984 = vrot.slane %v1982, 5
        %v1985 = vsel %vm330, %v1980, %v1984
        %v1986 = vshrl.u32 %v1820, 16
        %v1988 = vrot.slane %v1986, 4
        %v1989 = vor.u32 %v1988, %v1984
        %v1990 = vrot.slane %v1989, 4
        %v1992 = vshll.u32 %v1821, 16
        %v1994 = vrot.slane %v1992, 5
        %v1995 = vsel %vm330, %v1990, %v1994
        %v1997 = vshrl.u32 %v1822, 16
        %v1999 = vrot.slane %v1997, 4
        %v2000 = vshll.u32 %v1822, 16
        %v2002 = vrot.slane %v2000, 5
        %v2003 = vor.u32 %v1999, %v2002
        %v2004 = vrot.slane %v2003, 4
        %v2006 = vshll.u32 %v1823, 16
        %v2008 = vrot.slane %v2006, 5
        %v2009 = vsel %vm330, %v2004, %v2008
        %v2010 = vshrl.u32 %v1823, 16
        %v2012 = vrot.slane %v2010, 4
        %v2013 = vor.u32 %v2012, %v2008
        %v2014 = vrot.slane %v2013, 4
        %v2016 = vshll.u32 %v1824, 16
        %v2018 = vrot.slane %v2016, 5
        %v2019 = vsel %vm330, %v2014, %v2018
        %v2021 = vshrl.u32 %v1825, 16
        %v2023 = vrot.slane %v2021, 4
        %v2024 = vshll.u32 %v1825, 16
        %v2026 = vrot.slane %v2024, 5
        %v2027 = vor.u32 %v2023, %v2026
        %v2028 = vrot.slane %v2027, 4
        %v2030 = vshll.u32 %v1826, 16
        %v2032 = vrot.slane %v2030, 5
        %v2033 = vsel %vm330, %v2028, %v2032
        %v2034 = vshrl.u32 %v1826, 16
        %v2036 = vrot.slane %v2034, 4
        %v2037 = vor.u32 %v2036, %v2032
        %v2038 = vrot.slane %v2037, 4
        %v2040 = vshll.u32 %v1827, 16
        %v2042 = vrot.slane %v2040, 5
        %v2043 = vsel %vm330, %v2038, %v2042
        %v2045 = vshrl.u32 %v1828, 16
        %v2047 = vrot.slane %v2045, 4
        %v2048 = vshll.u32 %v1828, 16
        %v2050 = vrot.slane %v2048, 5
        %v2051 = vor.u32 %v2047, %v2050
        %v2052 = vrot.slane %v2051, 4
        %v2054 = vshll.u32 %v1829, 16
        %v2056 = vrot.slane %v2054, 5
        %v2057 = vsel %vm330, %v2052, %v2056
        %v2058 = vshrl.u32 %v1829, 16
        %v2060 = vrot.slane %v2058, 4
        %v2061 = vor.u32 %v2060, %v2056
        %v2062 = vrot.slane %v2061, 4
        %v2064 = vshll.u32 %v1830, 16
        %v2066 = vrot.slane %v2064, 5
        %v2067 = vsel %vm330, %v2062, %v2066
        %v2069 = vshrl.u32 %v1831, 16
        %v2071 = vrot.slane %v2069, 4
        %v2072 = vshll.u32 %v1831, 16
        %v2074 = vrot.slane %v2072, 5
        %v2075 = vor.u32 %v2071, %v2074
        %v2076 = vrot.slane %v2075, 4
        %v2078 = vshll.u32 %v1832, 16
        %v2080 = vrot.slane %v2078, 5
        %v2081 = vsel %vm330, %v2076, %v2080
        %v2082 = vshrl.u32 %v1832, 16
        %v2084 = vrot.slane %v2082, 4
        %v2085 = vor.u32 %v2084, %v2080
        %v2086 = vrot.slane %v2085, 4
        %v2088 = vshll.u32 %v1833, 16
        %v2090 = vrot.slane %v2088, 5
        %v2091 = vsel %vm330, %v2086, %v2090
        %v2093 = vshrl.u32 %v1834, 16
        %v2095 = vrot.slane %v2093, 4
        %v2096 = vshll.u32 %v1834, 16
        %v2098 = vrot.slane %v2096, 5
        %v2099 = vor.u32 %v2095, %v2098
        %v2100 = vrot.slane %v2099, 4
        %v2102 = vshll.u32 %v1835, 16
        %v2104 = vrot.slane %v2102, 5
        %v2105 = vsel %vm330, %v2100, %v2104
        %v2106 = vshrl.u32 %v1835, 16
        %v2108 = vrot.slane %v2106, 4
        %v2109 = vor.u32 %v2108, %v2104
        %v2110 = vrot.slane %v2109, 4
        %v2112 = vshll.u32 %v1836, 16
        %v2114 = vrot.slane %v2112, 5
        %v2115 = vsel %vm330, %v2110, %v2114
        %v2117 = vshrl.u32 %v1837, 16
        %v2119 = vrot.slane %v2117, 4
        %v2120 = vshll.u32 %v1837, 16
        %v2122 = vrot.slane %v2120, 5
        %v2123 = vor.u32 %v2119, %v2122
        %v2124 = vrot.slane %v2123, 4
        %v2126 = vshll.u32 %v1838, 16
        %v2128 = vrot.slane %v2126, 5
        %v2129 = vsel %vm330, %v2124, %v2128
        %v2130 = vshrl.u32 %v1838, 16
        %v2132 = vrot.slane %v2130, 4
        %v2133 = vor.u32 %v2132, %v2128
        %v2134 = vrot.slane %v2133, 4
        %v2136 = vshll.u32 %v1839, 16
        %v2138 = vrot.slane %v2136, 5
        %v2139 = vsel %vm330, %v2134, %v2138
        %v2141 = vshrl.u32 %v1840, 16
        %v2143 = vrot.slane %v2141, 4
        %v2144 = vshll.u32 %v1840, 16
        %v2146 = vrot.slane %v2144, 5
        %v2147 = vor.u32 %v2143, %v2146
        %v2148 = vrot.slane %v2147, 4
        %v2150 = vshll.u32 %v1841, 16
        %v2152 = vrot.slane %v2150, 5
        %v2153 = vsel %vm330, %v2148, %v2152
        %v2154 = vshrl.u32 %v1841, 16
        %v2156 = vrot.slane %v2154, 4
        %v2157 = vor.u32 %v2156, %v2152
        %v2158 = vrot.slane %v2157, 4
        %v2160 = vshll.u32 %v1842, 16
        %v2162 = vrot.slane %v2160, 5
        %v2163 = vsel %vm330, %v2158, %v2162
        %v2165 = vshrl.u32 %v1843, 16
        %v2167 = vrot.slane %v2165, 4
        %v2168 = vshll.u32 %v1843, 16
        %v2170 = vrot.slane %v2168, 5
        %v2171 = vor.u32 %v2167, %v2170
        %v2172 = vrot.slane %v2171, 4
        %v2174 = vshll.u32 %v1844, 16
        %v2176 = vrot.slane %v2174, 5
        %v2177 = vsel %vm330, %v2172, %v2176
        %v2178 = vshrl.u32 %v1844, 16
        %v2180 = vrot.slane %v2178, 4
        %v2181 = vor.u32 %v2180, %v2176
        %v2182 = vrot.slane %v2181, 4
        %v2184 = vshll.u32 %v1845, 16
        %v2186 = vrot.slane %v2184, 5
        %v2187 = vsel %vm330, %v2182, %v2186
        %v2189 = vshrl.u32 %v1846, 16
        %v2191 = vrot.slane %v2189, 4
        %v2192 = vshll.u32 %v1846, 16
        %v2194 = vrot.slane %v2192, 5
        %v2195 = vor.u32 %v2191, %v2194
        %v2196 = vrot.slane %v2195, 4
        %v2198 = vshll.u32 %v1847, 16
        %v2200 = vrot.slane %v2198, 5
        %v2201 = vsel %vm330, %v2196, %v2200
        %v2202 = vshrl.u32 %v1847, 16
        %v2204 = vrot.slane %v2202, 4
        %v2205 = vor.u32 %v2204, %v2200
        %v2206 = vrot.slane %v2205, 4
        %v2208 = vshll.u32 %v1848, 16
        %v2210 = vrot.slane %v2208, 5
        %v2211 = vsel %vm330, %v2206, %v2210
        %v2213 = vshrl.u32 %v1849, 16
        %v2215 = vrot.slane %v2213, 4
        %v2216 = vshll.u32 %v1849, 16
        %v2218 = vrot.slane %v2216, 5
        %v2219 = vor.u32 %v2215, %v2218
        %v2220 = vrot.slane %v2219, 4
        %v2222 = vshll.u32 %v1850, 16
        %v2224 = vrot.slane %v2222, 5
        %v2225 = vsel %vm330, %v2220, %v2224
        %v2226 = vshrl.u32 %v1850, 16
        %v2228 = vrot.slane %v2226, 4
        %v2229 = vor.u32 %v2228, %v2224
        %v2230 = vrot.slane %v2229, 4
        %v2232 = vshll.u32 %v1851, 16
        %v2234 = vrot.slane %v2232, 5
        %v2235 = vsel %vm330, %v2230, %v2234
        %v2236 = vld [vmem:[%s1 + $0x8] sm:$0x3]
        %v2237 = vunpack.c.l.b16 %v1865
        %v2238 = vunpack.c.l.b16 %v1875
        %v2239 = vunpack.c.l.b16 %v1889
        %v2240 = vunpack.c.l.b16 %v1899
        %v2241 = vunpack.c.l.b16 %v1913
        %v2242 = vunpack.c.l.b16 %v1923
        %v2243 = vunpack.c.l.b16 %v1937
        %v2244 = vunpack.c.l.b16 %v1947
        %v2245 = vunpack.c.l.b16 %v1961
        %v2246 = vunpack.c.l.b16 %v1971
        %v2247 = vunpack.c.l.b16 %v1985
        %v2248 = vunpack.c.l.b16 %v1995
        %v2249 = vunpack.c.l.b16 %v2009
        %v2250 = vunpack.c.l.b16 %v2019
        %v2251 = vunpack.c.l.b16 %v2033
        %v2252 = vunpack.c.l.b16 %v2043
        %v2253 = vunpack.c.l.b16 %v2057
        %v2254 = vunpack.c.l.b16 %v2067
        %v2255 = vunpack.c.l.b16 %v2081
        %v2256 = vunpack.c.l.b16 %v2091
        %v2257 = vunpack.c.l.b16 %v2105
        %v2258 = vunpack.c.l.b16 %v2115
        %v2259 = vunpack.c.l.b16 %v2129
        %v2260 = vunpack.c.l.b16 %v2139
        %v2261 = vunpack.c.l.b16 %v2153
        %v2262 = vunpack.c.l.b16 %v2163
        %v2263 = vunpack.c.l.b16 %v2177
        %v2264 = vunpack.c.l.b16 %v2187
        %v2265 = vunpack.c.l.b16 %v2201
        %v2266 = vunpack.c.l.b16 %v2211
        %v2267 = vunpack.c.l.b16 %v2225
        %v2268 = vunpack.c.l.b16 %v2235
        %v2269 = vpack.c.b16 %v2238, %v2237
        %v2270 = vpack.c.b16 %v2240, %v2239
        %v2271 = vpack.c.b16 %v2242, %v2241
        %v2272 = vpack.c.b16 %v2244, %v2243
        %v2273 = vpack.c.b16 %v2246, %v2245
        %v2274 = vpack.c.b16 %v2248, %v2247
        %v2275 = vpack.c.b16 %v2250, %v2249
        %v2276 = vpack.c.b16 %v2252, %v2251
        %v2277 = vpack.c.b16 %v2254, %v2253
        %v2278 = vpack.c.b16 %v2256, %v2255
        %v2279 = vpack.c.b16 %v2258, %v2257
        %v2280 = vpack.c.b16 %v2260, %v2259
        %v2281 = vpack.c.b16 %v2262, %v2261
        %v2282 = vpack.c.b16 %v2264, %v2263
        %v2283 = vpack.c.b16 %v2266, %v2265
        %v2284 = vpack.c.b16 %v2268, %v2267
        %v2286 = vsel %vm768, %v2269, 0
        %v2289 = vsel %vm768, %v2270, 0
        %v2292 = vsel %vm768, %v2271, 0
        %v2295 = vsel %vm768, %v2272, 0
        %v2298 = vsel %vm768, %v2273, 0
        %v2301 = vsel %vm768, %v2274, 0
        %v2304 = vsel %vm768, %v2275, 0
        %v2307 = vsel %vm768, %v2276, 0
        %v2310 = vsel %vm768, %v2277, 0
        %v2313 = vsel %vm768, %v2278, 0
        %v2316 = vsel %vm768, %v2279, 0
        %v2319 = vsel %vm768, %v2280, 0
        %v2322 = vsel %vm768, %v2281, 0
        %v2325 = vsel %vm768, %v2282, 0
        %v2328 = vsel %vm768, %v2283, 0
        %v2331 = vsel %vm768, %v2284, 0
        %v2334 = vsel %vm817, %v2236, 0
        %2336 = vmatpush.bf16.msra.mxu0 0
        %2337 = vmatpush.bf16.msra.mxu0 0
        %2338 = vmatpush.bf16.msra.mxu0 0
        %2339 = vmatpush.bf16.msra.mxu0 0
        %2340 = vmatpush.bf16.msra.mxu0 0
        %2341 = vmatpush.bf16.msra.mxu0 0
        %2342 = vmatpush.bf16.msra.mxu0 0
        %2343 = vmatpush.bf16.msra.mxu0 %v2334
        %2344 = vmatmul.bf16.gmra.mxu0 %v2286
        %v2345 = vpop.f32.mrf.mxu0
        %v2346 = vadd.f32 0.0, %v2345
        %v2347 = vpop.f32.mrf.mxu0
        %v2348 = vadd.f32 0.0, %v2347
        %2349 = vmatmul.bf16.gmra.mxu0 %v2289
        %v2350 = vpop.f32.mrf.mxu0
        %v2351 = vadd.f32 0.0, %v2350
        %v2352 = vpop.f32.mrf.mxu0
        %v2353 = vadd.f32 0.0, %v2352
        %2354 = vmatmul.bf16.gmra.mxu0 %v2292
        %v2355 = vpop.f32.mrf.mxu0
        %v2356 = vadd.f32 0.0, %v2355
        %v2357 = vpop.f32.mrf.mxu0
        %v2358 = vadd.f32 0.0, %v2357
        %2359 = vmatmul.bf16.gmra.mxu0 %v2295
        %v2360 = vpop.f32.mrf.mxu0
        %v2361 = vadd.f32 0.0, %v2360
        %v2362 = vpop.f32.mrf.mxu0
        %v2363 = vadd.f32 0.0, %v2362
        %2364 = vmatmul.bf16.gmra.mxu0 %v2298
        %v2365 = vpop.f32.mrf.mxu0
        %v2366 = vadd.f32 0.0, %v2365
        %v2367 = vpop.f32.mrf.mxu0
        %v2368 = vadd.f32 0.0, %v2367
        %2369 = vmatmul.bf16.gmra.mxu0 %v2301
        %v2370 = vpop.f32.mrf.mxu0
        %v2371 = vadd.f32 0.0, %v2370
        %v2372 = vpop.f32.mrf.mxu0
        %v2373 = vadd.f32 0.0, %v2372
        %2374 = vmatmul.bf16.gmra.mxu0 %v2304
        %v2375 = vpop.f32.mrf.mxu0
        %v2376 = vadd.f32 0.0, %v2375
        %v2377 = vpop.f32.mrf.mxu0
        %v2378 = vadd.f32 0.0, %v2377
        %2379 = vmatmul.bf16.gmra.mxu0 %v2307
        %v2380 = vpop.f32.mrf.mxu0
        %v2381 = vadd.f32 0.0, %v2380
        %v2382 = vpop.f32.mrf.mxu0
        %v2383 = vadd.f32 0.0, %v2382
        %2384 = vmatmul.bf16.gmra.mxu0 %v2310
        %v2385 = vpop.f32.mrf.mxu0
        %v2386 = vadd.f32 0.0, %v2385
        %v2387 = vpop.f32.mrf.mxu0
        %v2388 = vadd.f32 0.0, %v2387
        %2389 = vmatmul.bf16.gmra.mxu0 %v2313
        %v2390 = vpop.f32.mrf.mxu0
        %v2391 = vadd.f32 0.0, %v2390
        %v2392 = vpop.f32.mrf.mxu0
        %v2393 = vadd.f32 0.0, %v2392
        %2394 = vmatmul.bf16.gmra.mxu0 %v2316
        %v2395 = vpop.f32.mrf.mxu0
        %v2396 = vadd.f32 0.0, %v2395
        %v2397 = vpop.f32.mrf.mxu0
        %v2398 = vadd.f32 0.0, %v2397
        %2399 = vmatmul.bf16.gmra.mxu0 %v2319
        %v2400 = vpop.f32.mrf.mxu0
        %v2401 = vadd.f32 0.0, %v2400
        %v2402 = vpop.f32.mrf.mxu0
        %v2403 = vadd.f32 0.0, %v2402
        %2404 = vmatmul.bf16.gmra.mxu0 %v2322
        %v2405 = vpop.f32.mrf.mxu0
        %v2406 = vadd.f32 0.0, %v2405
        %v2407 = vpop.f32.mrf.mxu0
        %v2408 = vadd.f32 0.0, %v2407
        %2409 = vmatmul.bf16.gmra.mxu0 %v2325
        %v2410 = vpop.f32.mrf.mxu0
        %v2411 = vadd.f32 0.0, %v2410
        %v2412 = vpop.f32.mrf.mxu0
        %v2413 = vadd.f32 0.0, %v2412
        %2414 = vmatmul.bf16.gmra.mxu0 %v2328
        %v2415 = vpop.f32.mrf.mxu0
        %v2416 = vadd.f32 0.0, %v2415
        %v2417 = vpop.f32.mrf.mxu0
        %v2418 = vadd.f32 0.0, %v2417
        %2419 = vmatmul.bf16.gmra.mxu0 %v2331
        %v2420 = vpop.f32.mrf.mxu0
        %v2421 = vadd.f32 0.0, %v2420
        %v2422 = vpop.f32.mrf.mxu0
        %v2423 = vadd.f32 0.0, %v2422
        %2424 = vdwg.mxu0
        %v2425 = vadd.f32 %v1772, %v2346
        %v2426 = vadd.f32 %v1773, %v2348
        %v2427 = vadd.f32 %v1774, %v2351
        %v2428 = vadd.f32 %v1775, %v2353
        %v2429 = vadd.f32 %v1776, %v2356
        %v2430 = vadd.f32 %v1777, %v2358
        %v2431 = vadd.f32 %v1778, %v2361
        %v2432 = vadd.f32 %v1779, %v2363
        %v2433 = vadd.f32 %v1780, %v2366
        %v2434 = vadd.f32 %v1781, %v2368
        %v2435 = vadd.f32 %v1782, %v2371
        %v2436 = vadd.f32 %v1783, %v2373
        %v2437 = vadd.f32 %v1784, %v2376
        %v2438 = vadd.f32 %v1785, %v2378
        %v2439 = vadd.f32 %v1786, %v2381
        %v2440 = vadd.f32 %v1787, %v2383
        %v2441 = vadd.f32 %v1788, %v2386
        %v2442 = vadd.f32 %v1789, %v2388
        %v2443 = vadd.f32 %v1790, %v2391
        %v2444 = vadd.f32 %v1791, %v2393
        %v2445 = vadd.f32 %v1792, %v2396
        %v2446 = vadd.f32 %v1793, %v2398
        %v2447 = vadd.f32 %v1794, %v2401
        %v2448 = vadd.f32 %v1795, %v2403
        %v2449 = vadd.f32 %v1796, %v2406
        %v2450 = vadd.f32 %v1797, %v2408
        %v2451 = vadd.f32 %v1798, %v2411
        %v2452 = vadd.f32 %v1799, %v2413
        %v2453 = vadd.f32 %v1800, %v2416
        %v2454 = vadd.f32 %v1801, %v2418
        %v2455 = vadd.f32 %v1802, %v2421
        %v2456 = vadd.f32 %v1803, %v2423
        %v2457 = vld [vmem:[%s1514] sm:$0xe]
        %v2458 = vld [vmem:[%s1514 + $0xc] sm:$0xe]
        %v2459 = vld [vmem:[%s1514 + $0x18] sm:$0xe]
        %v2460 = vld [vmem:[%s1514 + $0x24] sm:$0xe]
        %v2461 = vld [vmem:[%s1514 + $0x30] sm:$0xe]
        %v2462 = vld [vmem:[%s1514 + $0x3c] sm:$0xe]
        %v2463 = vld [vmem:[%s1514 + $0x48] sm:$0xe]
        %v2464 = vld [vmem:[%s1514 + $0x54] sm:$0xe]
        %v2465 = vld [vmem:[%s1514 + $0x60] sm:$0xe]
        %v2466 = vld [vmem:[%s1514 + $0x6c] sm:$0xe]
        %v2467 = vld [vmem:[%s1514 + $0x78] sm:$0xe]
        %v2468 = vld [vmem:[%s1514 + $0x84] sm:$0xe]
        %v2469 = vld [vmem:[%s1514 + $0x90] sm:$0xe]
        %v2470 = vld [vmem:[%s1514 + $0x9c] sm:$0xe]
        %v2471 = vld [vmem:[%s1514 + $0xa8] sm:$0xe]
        %v2472 = vld [vmem:[%s1514 + $0xb4] sm:$0xe]
        %v2521 = vrot.slane %v2457, 5
        %v2522 = vrot.slane %v2521, 4
        %v2523 = vrot.slane %v1805, 5
        %v2524 = vsel %vm1180, %v2522, %v2523
        %v2525 = vrot.slane %v2523, 4
        %v2526 = vrot.slane %v1806, 5
        %v2527 = vsel %vm1180, %v2525, %v2526
        %v2528 = vrot.slane %v2458, 5
        %v2529 = vrot.slane %v2528, 4
        %v2530 = vrot.slane %v1808, 5
        %v2531 = vsel %vm1180, %v2529, %v2530
        %v2532 = vrot.slane %v2530, 4
        %v2533 = vrot.slane %v1809, 5
        %v2534 = vsel %vm1180, %v2532, %v2533
        %v2535 = vrot.slane %v2459, 5
        %v2536 = vrot.slane %v2535, 4
        %v2537 = vrot.slane %v1811, 5
        %v2538 = vsel %vm1180, %v2536, %v2537
        %v2539 = vrot.slane %v2537, 4
        %v2540 = vrot.slane %v1812, 5
        %v2541 = vsel %vm1180, %v2539, %v2540
        %v2542 = vrot.slane %v2460, 5
        %v2543 = vrot.slane %v2542, 4
        %v2544 = vrot.slane %v1814, 5
        %v2545 = vsel %vm1180, %v2543, %v2544
        %v2546 = vrot.slane %v2544, 4
        %v2547 = vrot.slane %v1815, 5
        %v2548 = vsel %vm1180, %v2546, %v2547
        %v2549 = vrot.slane %v2461, 5
        %v2550 = vrot.slane %v2549, 4
        %v2551 = vrot.slane %v1817, 5
        %v2552 = vsel %vm1180, %v2550, %v2551
        %v2553 = vrot.slane %v2551, 4
        %v2554 = vrot.slane %v1818, 5
        %v2555 = vsel %vm1180, %v2553, %v2554
        %v2556 = vrot.slane %v2462, 5
        %v2557 = vrot.slane %v2556, 4
        %v2558 = vrot.slane %v1820, 5
        %v2559 = vsel %vm1180, %v2557, %v2558
        %v2560 = vrot.slane %v2558, 4
        %v2561 = vrot.slane %v1821, 5
        %v2562 = vsel %vm1180, %v2560, %v2561
        %v2563 = vrot.slane %v2463, 5
        %v2564 = vrot.slane %v2563, 4
        %v2565 = vrot.slane %v1823, 5
        %v2566 = vsel %vm1180, %v2564, %v2565
        %v2567 = vrot.slane %v2565, 4
        %v2568 = vrot.slane %v1824, 5
        %v2569 = vsel %vm1180, %v2567, %v2568
        %v2570 = vrot.slane %v2464, 5
        %v2571 = vrot.slane %v2570, 4
        %v2572 = vrot.slane %v1826, 5
        %v2573 = vsel %vm1180, %v2571, %v2572
        %v2574 = vrot.slane %v2572, 4
        %v2575 = vrot.slane %v1827, 5
        %v2576 = vsel %vm1180, %v2574, %v2575
        %v2577 = vrot.slane %v2465, 5
        %v2578 = vrot.slane %v2577, 4
        %v2579 = vrot.slane %v1829, 5
        %v2580 = vsel %vm1180, %v2578, %v2579
        %v2581 = vrot.slane %v2579, 4
        %v2582 = vrot.slane %v1830, 5
        %v2583 = vsel %vm1180, %v2581, %v2582
        %v2584 = vrot.slane %v2466, 5
        %v2585 = vrot.slane %v2584, 4
        %v2586 = vrot.slane %v1832, 5
        %v2587 = vsel %vm1180, %v2585, %v2586
        %v2588 = vrot.slane %v2586, 4
        %v2589 = vrot.slane %v1833, 5
        %v2590 = vsel %vm1180, %v2588, %v2589
        %v2591 = vrot.slane %v2467, 5
        %v2592 = vrot.slane %v2591, 4
        %v2593 = vrot.slane %v1835, 5
        %v2594 = vsel %vm1180, %v2592, %v2593
        %v2595 = vrot.slane %v2593, 4
        %v2596 = vrot.slane %v1836, 5
        %v2597 = vsel %vm1180, %v2595, %v2596
        %v2598 = vrot.slane %v2468, 5
        %v2599 = vrot.slane %v2598, 4
        %v2600 = vrot.slane %v1838, 5
        %v2601 = vsel %vm1180, %v2599, %v2600
        %v2602 = vrot.slane %v2600, 4
        %v2603 = vrot.slane %v1839, 5
        %v2604 = vsel %vm1180, %v2602, %v2603
        %v2605 = vrot.slane %v2469, 5
        %v2606 = vrot.slane %v2605, 4
        %v2607 = vrot.slane %v1841, 5
        %v2608 = vsel %vm1180, %v2606, %v2607
        %v2609 = vrot.slane %v2607, 4
        %v2610 = vrot.slane %v1842, 5
        %v2611 = vsel %vm1180, %v2609, %v2610
        %v2612 = vrot.slane %v2470, 5
        %v2613 = vrot.slane %v2612, 4
        %v2614 = vrot.slane %v1844, 5
        %v2615 = vsel %vm1180, %v2613, %v2614
        %v2616 = vrot.slane %v2614, 4
        %v2617 = vrot.slane %v1845, 5
        %v2618 = vsel %vm1180, %v2616, %v2617
        %v2619 = vrot.slane %v2471, 5
        %v2620 = vrot.slane %v2619, 4
        %v2621 = vrot.slane %v1847, 5
        %v2622 = vsel %vm1180, %v2620, %v2621
        %v2623 = vrot.slane %v2621, 4
        %v2624 = vrot.slane %v1848, 5
        %v2625 = vsel %vm1180, %v2623, %v2624
        %v2626 = vrot.slane %v2472, 5
        %v2627 = vrot.slane %v2626, 4
        %v2628 = vrot.slane %v1850, 5
        %v2629 = vsel %vm1180, %v2627, %v2628
        %v2630 = vrot.slane %v2628, 4
        %v2631 = vrot.slane %v1851, 5
        %v2632 = vsel %vm1180, %v2630, %v2631
        %v2633 = vld [vmem:[%s1 + $0x8] sm:$0xc]
        %v2634 = vunpack.c.l.b16 %v2524
        %v2635 = vunpack.c.l.b16 %v2527
        %v2636 = vunpack.c.l.b16 %v2531
        %v2637 = vunpack.c.l.b16 %v2534
        %v2638 = vunpack.c.l.b16 %v2538
        %v2639 = vunpack.c.l.b16 %v2541
        %v2640 = vunpack.c.l.b16 %v2545
        %v2641 = vunpack.c.l.b16 %v2548
        %v2642 = vunpack.c.l.b16 %v2552
        %v2643 = vunpack.c.l.b16 %v2555
        %v2644 = vunpack.c.l.b16 %v2559
        %v2645 = vunpack.c.l.b16 %v2562
        %v2646 = vunpack.c.l.b16 %v2566
        %v2647 = vunpack.c.l.b16 %v2569
        %v2648 = vunpack.c.l.b16 %v2573
        %v2649 = vunpack.c.l.b16 %v2576
        %v2650 = vunpack.c.l.b16 %v2580
        %v2651 = vunpack.c.l.b16 %v2583
        %v2652 = vunpack.c.l.b16 %v2587
        %v2653 = vunpack.c.l.b16 %v2590
        %v2654 = vunpack.c.l.b16 %v2594
        %v2655 = vunpack.c.l.b16 %v2597
        %v2656 = vunpack.c.l.b16 %v2601
        %v2657 = vunpack.c.l.b16 %v2604
        %v2658 = vunpack.c.l.b16 %v2608
        %v2659 = vunpack.c.l.b16 %v2611
        %v2660 = vunpack.c.l.b16 %v2615
        %v2661 = vunpack.c.l.b16 %v2618
        %v2662 = vunpack.c.l.b16 %v2622
        %v2663 = vunpack.c.l.b16 %v2625
        %v2664 = vunpack.c.l.b16 %v2629
        %v2665 = vunpack.c.l.b16 %v2632
        %v2666 = vpack.c.b16 %v2635, %v2634
        %v2667 = vpack.c.b16 %v2637, %v2636
        %v2668 = vpack.c.b16 %v2639, %v2638
        %v2669 = vpack.c.b16 %v2641, %v2640
        %v2670 = vpack.c.b16 %v2643, %v2642
        %v2671 = vpack.c.b16 %v2645, %v2644
        %v2672 = vpack.c.b16 %v2647, %v2646
        %v2673 = vpack.c.b16 %v2649, %v2648
        %v2674 = vpack.c.b16 %v2651, %v2650
        %v2675 = vpack.c.b16 %v2653, %v2652
        %v2676 = vpack.c.b16 %v2655, %v2654
        %v2677 = vpack.c.b16 %v2657, %v2656
        %v2678 = vpack.c.b16 %v2659, %v2658
        %v2679 = vpack.c.b16 %v2661, %v2660
        %v2680 = vpack.c.b16 %v2663, %v2662
        %v2681 = vpack.c.b16 %v2665, %v2664
        %v2683 = vunpack.c.l.b16 %v2633
        %v2684 = vpack.c.b16 %v2683, %v2683
        %v2685 = vrot.slane %v2684, 2
        %v2687 = vsel %vm768, %v2666, 0
        %v2690 = vsel %vm768, %v2667, 0
        %v2693 = vsel %vm768, %v2668, 0
        %v2696 = vsel %vm768, %v2669, 0
        %v2699 = vsel %vm768, %v2670, 0
        %v2702 = vsel %vm768, %v2671, 0
        %v2705 = vsel %vm768, %v2672, 0
        %v2708 = vsel %vm768, %v2673, 0
        %v2711 = vsel %vm768, %v2674, 0
        %v2714 = vsel %vm768, %v2675, 0
        %v2717 = vsel %vm768, %v2676, 0
        %v2720 = vsel %vm768, %v2677, 0
        %v2723 = vsel %vm768, %v2678, 0
        %v2726 = vsel %vm768, %v2679, 0
        %v2729 = vsel %vm768, %v2680, 0
        %v2732 = vsel %vm768, %v2681, 0
        %v2735 = vsel %vm817, %v2685, 0
        %2737 = vmatpush.bf16.msra.mxu0 0
        %2738 = vmatpush.bf16.msra.mxu0 0
        %2739 = vmatpush.bf16.msra.mxu0 0
        %2740 = vmatpush.bf16.msra.mxu0 0
        %2741 = vmatpush.bf16.msra.mxu0 0
        %2742 = vmatpush.bf16.msra.mxu0 0
        %2743 = vmatpush.bf16.msra.mxu0 0
        %2744 = vmatpush.bf16.msra.mxu0 %v2735
        %2745 = vmatmul.bf16.gmra.mxu0 %v2687
        %v2746 = vpop.f32.mrf.mxu0
        %v2747 = vadd.f32 0.0, %v2746
        %v2748 = vpop.f32.mrf.mxu0
        %v2749 = vadd.f32 0.0, %v2748
        %2750 = vmatmul.bf16.gmra.mxu0 %v2690
        %v2751 = vpop.f32.mrf.mxu0
        %v2752 = vadd.f32 0.0, %v2751
        %v2753 = vpop.f32.mrf.mxu0
        %v2754 = vadd.f32 0.0, %v2753
        %2755 = vmatmul.bf16.gmra.mxu0 %v2693
        %v2756 = vpop.f32.mrf.mxu0
        %v2757 = vadd.f32 0.0, %v2756
        %v2758 = vpop.f32.mrf.mxu0
        %v2759 = vadd.f32 0.0, %v2758
        %2760 = vmatmul.bf16.gmra.mxu0 %v2696
        %v2761 = vpop.f32.mrf.mxu0
        %v2762 = vadd.f32 0.0, %v2761
        %v2763 = vpop.f32.mrf.mxu0
        %v2764 = vadd.f32 0.0, %v2763
        %2765 = vmatmul.bf16.gmra.mxu0 %v2699
        %v2766 = vpop.f32.mrf.mxu0
        %v2767 = vadd.f32 0.0, %v2766
        %v2768 = vpop.f32.mrf.mxu0
        %v2769 = vadd.f32 0.0, %v2768
        %2770 = vmatmul.bf16.gmra.mxu0 %v2702
        %v2771 = vpop.f32.mrf.mxu0
        %v2772 = vadd.f32 0.0, %v2771
        %v2773 = vpop.f32.mrf.mxu0
        %v2774 = vadd.f32 0.0, %v2773
        %2775 = vmatmul.bf16.gmra.mxu0 %v2705
        %v2776 = vpop.f32.mrf.mxu0
        %v2777 = vadd.f32 0.0, %v2776
        %v2778 = vpop.f32.mrf.mxu0
        %v2779 = vadd.f32 0.0, %v2778
        %2780 = vmatmul.bf16.gmra.mxu0 %v2708
        %v2781 = vpop.f32.mrf.mxu0
        %v2782 = vadd.f32 0.0, %v2781
        %v2783 = vpop.f32.mrf.mxu0
        %v2784 = vadd.f32 0.0, %v2783
        %2785 = vmatmul.bf16.gmra.mxu0 %v2711
        %v2786 = vpop.f32.mrf.mxu0
        %v2787 = vadd.f32 0.0, %v2786
        %v2788 = vpop.f32.mrf.mxu0
        %v2789 = vadd.f32 0.0, %v2788
        %2790 = vmatmul.bf16.gmra.mxu0 %v2714
        %v2791 = vpop.f32.mrf.mxu0
        %v2792 = vadd.f32 0.0, %v2791
        %v2793 = vpop.f32.mrf.mxu0
        %v2794 = vadd.f32 0.0, %v2793
        %2795 = vmatmul.bf16.gmra.mxu0 %v2717
        %v2796 = vpop.f32.mrf.mxu0
        %v2797 = vadd.f32 0.0, %v2796
        %v2798 = vpop.f32.mrf.mxu0
        %v2799 = vadd.f32 0.0, %v2798
        %2800 = vmatmul.bf16.gmra.mxu0 %v2720
        %v2801 = vpop.f32.mrf.mxu0
        %v2802 = vadd.f32 0.0, %v2801
        %v2803 = vpop.f32.mrf.mxu0
        %v2804 = vadd.f32 0.0, %v2803
        %2805 = vmatmul.bf16.gmra.mxu0 %v2723
        %v2806 = vpop.f32.mrf.mxu0
        %v2807 = vadd.f32 0.0, %v2806
        %v2808 = vpop.f32.mrf.mxu0
        %v2809 = vadd.f32 0.0, %v2808
        %2810 = vmatmul.bf16.gmra.mxu0 %v2726
        %v2811 = vpop.f32.mrf.mxu0
        %v2812 = vadd.f32 0.0, %v2811
        %v2813 = vpop.f32.mrf.mxu0
        %v2814 = vadd.f32 0.0, %v2813
        %2815 = vmatmul.bf16.gmra.mxu0 %v2729
        %v2816 = vpop.f32.mrf.mxu0
        %v2817 = vadd.f32 0.0, %v2816
        %v2818 = vpop.f32.mrf.mxu0
        %v2819 = vadd.f32 0.0, %v2818
        %2820 = vmatmul.bf16.gmra.mxu0 %v2732
        %v2821 = vpop.f32.mrf.mxu0
        %v2822 = vadd.f32 0.0, %v2821
        %v2823 = vpop.f32.mrf.mxu0
        %v2824 = vadd.f32 0.0, %v2823
        %2825 = vdwg.mxu0
        %v2826 = vadd.f32 %v2425, %v2747
        %v2827 = vadd.f32 %v2426, %v2749
        %v2828 = vadd.f32 %v2427, %v2752
        %v2829 = vadd.f32 %v2428, %v2754
        %v2830 = vadd.f32 %v2429, %v2757
        %v2831 = vadd.f32 %v2430, %v2759
        %v2832 = vadd.f32 %v2431, %v2762
        %v2833 = vadd.f32 %v2432, %v2764
        %v2834 = vadd.f32 %v2433, %v2767
        %v2835 = vadd.f32 %v2434, %v2769
        %v2836 = vadd.f32 %v2435, %v2772
        %v2837 = vadd.f32 %v2436, %v2774
        %v2838 = vadd.f32 %v2437, %v2777
        %v2839 = vadd.f32 %v2438, %v2779
        %v2840 = vadd.f32 %v2439, %v2782
        %v2841 = vadd.f32 %v2440, %v2784
        %v2842 = vadd.f32 %v2441, %v2787
        %v2843 = vadd.f32 %v2442, %v2789
        %v2844 = vadd.f32 %v2443, %v2792
        %v2845 = vadd.f32 %v2444, %v2794
        %v2846 = vadd.f32 %v2445, %v2797
        %v2847 = vadd.f32 %v2446, %v2799
        %v2848 = vadd.f32 %v2447, %v2802
        %v2849 = vadd.f32 %v2448, %v2804
        %v2850 = vadd.f32 %v2449, %v2807
        %v2851 = vadd.f32 %v2450, %v2809
        %v2852 = vadd.f32 %v2451, %v2812
        %v2853 = vadd.f32 %v2452, %v2814
        %v2854 = vadd.f32 %v2453, %v2817
        %v2855 = vadd.f32 %v2454, %v2819
        %v2856 = vadd.f32 %v2455, %v2822
        %v2857 = vadd.f32 %v2456, %v2824
        %s2858 = scalar_lea.vmem %s277, 24
        %v2859 = vld [vmem:[%s2858] sm:$0xf]
        %v2860 = vld [vmem:[%s2858 + $0x4] sm:$0xf]
        %v2861 = vld [vmem:[%s2858 + $0xc] sm:$0xf]
        %v2862 = vld [vmem:[%s2858 + $0x10] sm:$0xf]
        %v2863 = vld [vmem:[%s2858 + $0x18] sm:$0xf]
        %v2864 = vld [vmem:[%s2858 + $0x1c] sm:$0xf]
        %v2865 = vld [vmem:[%s2858 + $0x24] sm:$0xf]
        %v2866 = vld [vmem:[%s2858 + $0x28] sm:$0xf]
        %v2867 = vld [vmem:[%s2858 + $0x30] sm:$0xf]
        %v2868 = vld [vmem:[%s2858 + $0x34] sm:$0xf]
        %v2869 = vld [vmem:[%s2858 + $0x3c] sm:$0xf]
        %v2870 = vld [vmem:[%s2858 + $0x40] sm:$0xf]
        %v2871 = vld [vmem:[%s2858 + $0x48] sm:$0xf]
        %v2872 = vld [vmem:[%s2858 + $0x4c] sm:$0xf]
        %v2873 = vld [vmem:[%s2858 + $0x54] sm:$0xf]
        %v2874 = vld [vmem:[%s2858 + $0x58] sm:$0xf]
        %v2875 = vld [vmem:[%s2858 + $0x60] sm:$0xf]
        %v2876 = vld [vmem:[%s2858 + $0x64] sm:$0xf]
        %v2877 = vld [vmem:[%s2858 + $0x6c] sm:$0xf]
        %v2878 = vld [vmem:[%s2858 + $0x70] sm:$0xf]
        %v2879 = vld [vmem:[%s2858 + $0x78] sm:$0xf]
        %v2880 = vld [vmem:[%s2858 + $0x7c] sm:$0xf]
        %v2881 = vld [vmem:[%s2858 + $0x84] sm:$0xf]
        %v2882 = vld [vmem:[%s2858 + $0x88] sm:$0xf]
        %v2883 = vld [vmem:[%s2858 + $0x90] sm:$0xf]
        %v2884 = vld [vmem:[%s2858 + $0x94] sm:$0xf]
        %v2885 = vld [vmem:[%s2858 + $0x9c] sm:$0xf]
        %v2886 = vld [vmem:[%s2858 + $0xa0] sm:$0xf]
        %v2887 = vld [vmem:[%s2858 + $0xa8] sm:$0xf]
        %v2888 = vld [vmem:[%s2858 + $0xac] sm:$0xf]
        %v2889 = vld [vmem:[%s2858 + $0xb4] sm:$0xf]
        %v2890 = vld [vmem:[%s2858 + $0xb8] sm:$0xf]
        %v2891 = vld [vmem:[%s1 + $0xc] sm:$0x3]
        %v2924 = vunpack.c.l.b16 %v2859
        %v2925 = vunpack.c.l.b16 %v2860
        %v2926 = vunpack.c.l.b16 %v2861
        %v2927 = vunpack.c.l.b16 %v2862
        %v2928 = vunpack.c.l.b16 %v2863
        %v2929 = vunpack.c.l.b16 %v2864
        %v2930 = vunpack.c.l.b16 %v2865
        %v2931 = vunpack.c.l.b16 %v2866
        %v2932 = vunpack.c.l.b16 %v2867
        %v2933 = vunpack.c.l.b16 %v2868
        %v2934 = vunpack.c.l.b16 %v2869
        %v2935 = vunpack.c.l.b16 %v2870
        %v2936 = vunpack.c.l.b16 %v2871
        %v2937 = vunpack.c.l.b16 %v2872
        %v2938 = vunpack.c.l.b16 %v2873
        %v2939 = vunpack.c.l.b16 %v2874
        %v2940 = vunpack.c.l.b16 %v2875
        %v2941 = vunpack.c.l.b16 %v2876
        %v2942 = vunpack.c.l.b16 %v2877
        %v2943 = vunpack.c.l.b16 %v2878
        %v2944 = vunpack.c.l.b16 %v2879
        %v2945 = vunpack.c.l.b16 %v2880
        %v2946 = vunpack.c.l.b16 %v2881
        %v2947 = vunpack.c.l.b16 %v2882
        %v2948 = vunpack.c.l.b16 %v2883
        %v2949 = vunpack.c.l.b16 %v2884
        %v2950 = vunpack.c.l.b16 %v2885
        %v2951 = vunpack.c.l.b16 %v2886
        %v2952 = vunpack.c.l.b16 %v2887
        %v2953 = vunpack.c.l.b16 %v2888
        %v2954 = vunpack.c.l.b16 %v2889
        %v2955 = vunpack.c.l.b16 %v2890
        %v2956 = vpack.c.b16 %v2925, %v2924
        %v2957 = vpack.c.b16 %v2927, %v2926
        %v2958 = vpack.c.b16 %v2929, %v2928
        %v2959 = vpack.c.b16 %v2931, %v2930
        %v2960 = vpack.c.b16 %v2933, %v2932
        %v2961 = vpack.c.b16 %v2935, %v2934
        %v2962 = vpack.c.b16 %v2937, %v2936
        %v2963 = vpack.c.b16 %v2939, %v2938
        %v2964 = vpack.c.b16 %v2941, %v2940
        %v2965 = vpack.c.b16 %v2943, %v2942
        %v2966 = vpack.c.b16 %v2945, %v2944
        %v2967 = vpack.c.b16 %v2947, %v2946
        %v2968 = vpack.c.b16 %v2949, %v2948
        %v2969 = vpack.c.b16 %v2951, %v2950
        %v2970 = vpack.c.b16 %v2953, %v2952
        %v2971 = vpack.c.b16 %v2955, %v2954
        %v2973 = vsel %vm768, %v2956, 0
        %v2976 = vsel %vm768, %v2957, 0
        %v2979 = vsel %vm768, %v2958, 0
        %v2982 = vsel %vm768, %v2959, 0
        %v2985 = vsel %vm768, %v2960, 0
        %v2988 = vsel %vm768, %v2961, 0
        %v2991 = vsel %vm768, %v2962, 0
        %v2994 = vsel %vm768, %v2963, 0
        %v2997 = vsel %vm768, %v2964, 0
        %v3000 = vsel %vm768, %v2965, 0
        %v3003 = vsel %vm768, %v2966, 0
        %v3006 = vsel %vm768, %v2967, 0
        %v3009 = vsel %vm768, %v2968, 0
        %v3012 = vsel %vm768, %v2969, 0
        %v3015 = vsel %vm768, %v2970, 0
        %v3018 = vsel %vm768, %v2971, 0
        %v3021 = vsel %vm817, %v2891, 0
        %3023 = vmatpush.bf16.msra.mxu0 0
        %3024 = vmatpush.bf16.msra.mxu0 0
        %3025 = vmatpush.bf16.msra.mxu0 0
        %3026 = vmatpush.bf16.msra.mxu0 0
        %3027 = vmatpush.bf16.msra.mxu0 0
        %3028 = vmatpush.bf16.msra.mxu0 0
        %3029 = vmatpush.bf16.msra.mxu0 0
        %3030 = vmatpush.bf16.msra.mxu0 %v3021
        %3031 = vmatmul.bf16.gmra.mxu0 %v2973
        %v3032 = vpop.f32.mrf.mxu0
        %v3033 = vadd.f32 0.0, %v3032
        %v3034 = vpop.f32.mrf.mxu0
        %v3035 = vadd.f32 0.0, %v3034
        %3036 = vmatmul.bf16.gmra.mxu0 %v2976
        %v3037 = vpop.f32.mrf.mxu0
        %v3038 = vadd.f32 0.0, %v3037
        %v3039 = vpop.f32.mrf.mxu0
        %v3040 = vadd.f32 0.0, %v3039
        %3041 = vmatmul.bf16.gmra.mxu0 %v2979
        %v3042 = vpop.f32.mrf.mxu0
        %v3043 = vadd.f32 0.0, %v3042
        %v3044 = vpop.f32.mrf.mxu0
        %v3045 = vadd.f32 0.0, %v3044
        %3046 = vmatmul.bf16.gmra.mxu0 %v2982
        %v3047 = vpop.f32.mrf.mxu0
        %v3048 = vadd.f32 0.0, %v3047
        %v3049 = vpop.f32.mrf.mxu0
        %v3050 = vadd.f32 0.0, %v3049
        %3051 = vmatmul.bf16.gmra.mxu0 %v2985
        %v3052 = vpop.f32.mrf.mxu0
        %v3053 = vadd.f32 0.0, %v3052
        %v3054 = vpop.f32.mrf.mxu0
        %v3055 = vadd.f32 0.0, %v3054
        %3056 = vmatmul.bf16.gmra.mxu0 %v2988
        %v3057 = vpop.f32.mrf.mxu0
        %v3058 = vadd.f32 0.0, %v3057
        %v3059 = vpop.f32.mrf.mxu0
        %v3060 = vadd.f32 0.0, %v3059
        %3061 = vmatmul.bf16.gmra.mxu0 %v2991
        %v3062 = vpop.f32.mrf.mxu0
        %v3063 = vadd.f32 0.0, %v3062
        %v3064 = vpop.f32.mrf.mxu0
        %v3065 = vadd.f32 0.0, %v3064
        %3066 = vmatmul.bf16.gmra.mxu0 %v2994
        %v3067 = vpop.f32.mrf.mxu0
        %v3068 = vadd.f32 0.0, %v3067
        %v3069 = vpop.f32.mrf.mxu0
        %v3070 = vadd.f32 0.0, %v3069
        %3071 = vmatmul.bf16.gmra.mxu0 %v2997
        %v3072 = vpop.f32.mrf.mxu0
        %v3073 = vadd.f32 0.0, %v3072
        %v3074 = vpop.f32.mrf.mxu0
        %v3075 = vadd.f32 0.0, %v3074
        %3076 = vmatmul.bf16.gmra.mxu0 %v3000
        %v3077 = vpop.f32.mrf.mxu0
        %v3078 = vadd.f32 0.0, %v3077
        %v3079 = vpop.f32.mrf.mxu0
        %v3080 = vadd.f32 0.0, %v3079
        %3081 = vmatmul.bf16.gmra.mxu0 %v3003
        %v3082 = vpop.f32.mrf.mxu0
        %v3083 = vadd.f32 0.0, %v3082
        %v3084 = vpop.f32.mrf.mxu0
        %v3085 = vadd.f32 0.0, %v3084
        %3086 = vmatmul.bf16.gmra.mxu0 %v3006
        %v3087 = vpop.f32.mrf.mxu0
        %v3088 = vadd.f32 0.0, %v3087
        %v3089 = vpop.f32.mrf.mxu0
        %v3090 = vadd.f32 0.0, %v3089
        %3091 = vmatmul.bf16.gmra.mxu0 %v3009
        %v3092 = vpop.f32.mrf.mxu0
        %v3093 = vadd.f32 0.0, %v3092
        %v3094 = vpop.f32.mrf.mxu0
        %v3095 = vadd.f32 0.0, %v3094
        %3096 = vmatmul.bf16.gmra.mxu0 %v3012
        %v3097 = vpop.f32.mrf.mxu0
        %v3098 = vadd.f32 0.0, %v3097
        %v3099 = vpop.f32.mrf.mxu0
        %v3100 = vadd.f32 0.0, %v3099
        %3101 = vmatmul.bf16.gmra.mxu0 %v3015
        %v3102 = vpop.f32.mrf.mxu0
        %v3103 = vadd.f32 0.0, %v3102
        %v3104 = vpop.f32.mrf.mxu0
        %v3105 = vadd.f32 0.0, %v3104
        %3106 = vmatmul.bf16.gmra.mxu0 %v3018
        %v3107 = vpop.f32.mrf.mxu0
        %v3108 = vadd.f32 0.0, %v3107
        %v3109 = vpop.f32.mrf.mxu0
        %v3110 = vadd.f32 0.0, %v3109
        %3111 = vdwg.mxu0
        %v3112 = vadd.f32 %v2826, %v3033
        %v3113 = vadd.f32 %v2827, %v3035
        %v3114 = vadd.f32 %v2828, %v3038
        %v3115 = vadd.f32 %v2829, %v3040
        %v3116 = vadd.f32 %v2830, %v3043
        %v3117 = vadd.f32 %v2831, %v3045
        %v3118 = vadd.f32 %v2832, %v3048
        %v3119 = vadd.f32 %v2833, %v3050
        %v3120 = vadd.f32 %v2834, %v3053
        %v3121 = vadd.f32 %v2835, %v3055
        %v3122 = vadd.f32 %v2836, %v3058
        %v3123 = vadd.f32 %v2837, %v3060
        %v3124 = vadd.f32 %v2838, %v3063
        %v3125 = vadd.f32 %v2839, %v3065
        %v3126 = vadd.f32 %v2840, %v3068
        %v3127 = vadd.f32 %v2841, %v3070
        %v3128 = vadd.f32 %v2842, %v3073
        %v3129 = vadd.f32 %v2843, %v3075
        %v3130 = vadd.f32 %v2844, %v3078
        %v3131 = vadd.f32 %v2845, %v3080
        %v3132 = vadd.f32 %v2846, %v3083
        %v3133 = vadd.f32 %v2847, %v3085
        %v3134 = vadd.f32 %v2848, %v3088
        %v3135 = vadd.f32 %v2849, %v3090
        %v3136 = vadd.f32 %v2850, %v3093
        %v3137 = vadd.f32 %v2851, %v3095
        %v3138 = vadd.f32 %v2852, %v3098
        %v3139 = vadd.f32 %v2853, %v3100
        %v3140 = vadd.f32 %v2854, %v3103
        %v3141 = vadd.f32 %v2855, %v3105
        %v3142 = vadd.f32 %v2856, %v3108
        %v3143 = vadd.f32 %v2857, %v3110
        %v3144 = vld [vmem:[%s2858] sm:$0xf]
        %v3145 = vld [vmem:[%s2858 + $0x4] sm:$0xf]
        %v3146 = vld [vmem:[%s2858 + $0x8] sm:$0x1]
        %v3147 = vld [vmem:[%s2858 + $0xc] sm:$0xf]
        %v3148 = vld [vmem:[%s2858 + $0x10] sm:$0xf]
        %v3149 = vld [vmem:[%s2858 + $0x14] sm:$0x1]
        %v3150 = vld [vmem:[%s2858 + $0x18] sm:$0xf]
        %v3151 = vld [vmem:[%s2858 + $0x1c] sm:$0xf]
        %v3152 = vld [vmem:[%s2858 + $0x20] sm:$0x1]
        %v3153 = vld [vmem:[%s2858 + $0x24] sm:$0xf]
        %v3154 = vld [vmem:[%s2858 + $0x28] sm:$0xf]
        %v3155 = vld [vmem:[%s2858 + $0x2c] sm:$0x1]
        %v3156 = vld [vmem:[%s2858 + $0x30] sm:$0xf]
        %v3157 = vld [vmem:[%s2858 + $0x34] sm:$0xf]
        %v3158 = vld [vmem:[%s2858 + $0x38] sm:$0x1]
        %v3159 = vld [vmem:[%s2858 + $0x3c] sm:$0xf]
        %v3160 = vld [vmem:[%s2858 + $0x40] sm:$0xf]
        %v3161 = vld [vmem:[%s2858 + $0x44] sm:$0x1]
        %v3162 = vld [vmem:[%s2858 + $0x48] sm:$0xf]
        %v3163 = vld [vmem:[%s2858 + $0x4c] sm:$0xf]
        %v3164 = vld [vmem:[%s2858 + $0x50] sm:$0x1]
        %v3165 = vld [vmem:[%s2858 + $0x54] sm:$0xf]
        %v3166 = vld [vmem:[%s2858 + $0x58] sm:$0xf]
        %v3167 = vld [vmem:[%s2858 + $0x5c] sm:$0x1]
        %v3168 = vld [vmem:[%s2858 + $0x60] sm:$0xf]
        %v3169 = vld [vmem:[%s2858 + $0x64] sm:$0xf]
        %v3170 = vld [vmem:[%s2858 + $0x68] sm:$0x1]
        %v3171 = vld [vmem:[%s2858 + $0x6c] sm:$0xf]
        %v3172 = vld [vmem:[%s2858 + $0x70] sm:$0xf]
        %v3173 = vld [vmem:[%s2858 + $0x74] sm:$0x1]
        %v3174 = vld [vmem:[%s2858 + $0x78] sm:$0xf]
        %v3175 = vld [vmem:[%s2858 + $0x7c] sm:$0xf]
        %v3176 = vld [vmem:[%s2858 + $0x80] sm:$0x1]
        %v3177 = vld [vmem:[%s2858 + $0x84] sm:$0xf]
        %v3178 = vld [vmem:[%s2858 + $0x88] sm:$0xf]
        %v3179 = vld [vmem:[%s2858 + $0x8c] sm:$0x1]
        %v3180 = vld [vmem:[%s2858 + $0x90] sm:$0xf]
        %v3181 = vld [vmem:[%s2858 + $0x94] sm:$0xf]
        %v3182 = vld [vmem:[%s2858 + $0x98] sm:$0x1]
        %v3183 = vld [vmem:[%s2858 + $0x9c] sm:$0xf]
        %v3184 = vld [vmem:[%s2858 + $0xa0] sm:$0xf]
        %v3185 = vld [vmem:[%s2858 + $0xa4] sm:$0x1]
        %v3186 = vld [vmem:[%s2858 + $0xa8] sm:$0xf]
        %v3187 = vld [vmem:[%s2858 + $0xac] sm:$0xf]
        %v3188 = vld [vmem:[%s2858 + $0xb0] sm:$0x1]
        %v3189 = vld [vmem:[%s2858 + $0xb4] sm:$0xf]
        %v3190 = vld [vmem:[%s2858 + $0xb8] sm:$0xf]
        %v3191 = vld [vmem:[%s2858 + $0xbc] sm:$0x1]
        %v3193 = vshrl.u32 %v3144, 16
        %v3195 = vrot.slane %v3193, 4
        %v3196 = vshll.u32 %v3144, 16
        %v3198 = vrot.slane %v3196, 5
        %v3199 = vor.u32 %v3195, %v3198
        %v3200 = vrot.slane %v3199, 4
        %v3202 = vshll.u32 %v3145, 16
        %v3204 = vrot.slane %v3202, 5
        %v3205 = vsel %vm330, %v3200, %v3204
        %v3206 = vshrl.u32 %v3145, 16
        %v3208 = vrot.slane %v3206, 4
        %v3209 = vor.u32 %v3208, %v3204
        %v3210 = vrot.slane %v3209, 4
        %v3212 = vshll.u32 %v3146, 16
        %v3214 = vrot.slane %v3212, 5
        %v3215 = vsel %vm330, %v3210, %v3214
        %v3217 = vshrl.u32 %v3147, 16
        %v3219 = vrot.slane %v3217, 4
        %v3220 = vshll.u32 %v3147, 16
        %v3222 = vrot.slane %v3220, 5
        %v3223 = vor.u32 %v3219, %v3222
        %v3224 = vrot.slane %v3223, 4
        %v3226 = vshll.u32 %v3148, 16
        %v3228 = vrot.slane %v3226, 5
        %v3229 = vsel %vm330, %v3224, %v3228
        %v3230 = vshrl.u32 %v3148, 16
        %v3232 = vrot.slane %v3230, 4
        %v3233 = vor.u32 %v3232, %v3228
        %v3234 = vrot.slane %v3233, 4
        %v3236 = vshll.u32 %v3149, 16
        %v3238 = vrot.slane %v3236, 5
        %v3239 = vsel %vm330, %v3234, %v3238
        %v3241 = vshrl.u32 %v3150, 16
        %v3243 = vrot.slane %v3241, 4
        %v3244 = vshll.u32 %v3150, 16
        %v3246 = vrot.slane %v3244, 5
        %v3247 = vor.u32 %v3243, %v3246
        %v3248 = vrot.slane %v3247, 4
        %v3250 = vshll.u32 %v3151, 16
        %v3252 = vrot.slane %v3250, 5
        %v3253 = vsel %vm330, %v3248, %v3252
        %v3254 = vshrl.u32 %v3151, 16
        %v3256 = vrot.slane %v3254, 4
        %v3257 = vor.u32 %v3256, %v3252
        %v3258 = vrot.slane %v3257, 4
        %v3260 = vshll.u32 %v3152, 16
        %v3262 = vrot.slane %v3260, 5
        %v3263 = vsel %vm330, %v3258, %v3262
        %v3265 = vshrl.u32 %v3153, 16
        %v3267 = vrot.slane %v3265, 4
        %v3268 = vshll.u32 %v3153, 16
        %v3270 = vrot.slane %v3268, 5
        %v3271 = vor.u32 %v3267, %v3270
        %v3272 = vrot.slane %v3271, 4
        %v3274 = vshll.u32 %v3154, 16
        %v3276 = vrot.slane %v3274, 5
        %v3277 = vsel %vm330, %v3272, %v3276
        %v3278 = vshrl.u32 %v3154, 16
        %v3280 = vrot.slane %v3278, 4
        %v3281 = vor.u32 %v3280, %v3276
        %v3282 = vrot.slane %v3281, 4
        %v3284 = vshll.u32 %v3155, 16
        %v3286 = vrot.slane %v3284, 5
        %v3287 = vsel %vm330, %v3282, %v3286
        %v3289 = vshrl.u32 %v3156, 16
        %v3291 = vrot.slane %v3289, 4
        %v3292 = vshll.u32 %v3156, 16
        %v3294 = vrot.slane %v3292, 5
        %v3295 = vor.u32 %v3291, %v3294
        %v3296 = vrot.slane %v3295, 4
        %v3298 = vshll.u32 %v3157, 16
        %v3300 = vrot.slane %v3298, 5
        %v3301 = vsel %vm330, %v3296, %v3300
        %v3302 = vshrl.u32 %v3157, 16
        %v3304 = vrot.slane %v3302, 4
        %v3305 = vor.u32 %v3304, %v3300
        %v3306 = vrot.slane %v3305, 4
        %v3308 = vshll.u32 %v3158, 16
        %v3310 = vrot.slane %v3308, 5
        %v3311 = vsel %vm330, %v3306, %v3310
        %v3313 = vshrl.u32 %v3159, 16
        %v3315 = vrot.slane %v3313, 4
        %v3316 = vshll.u32 %v3159, 16
        %v3318 = vrot.slane %v3316, 5
        %v3319 = vor.u32 %v3315, %v3318
        %v3320 = vrot.slane %v3319, 4
        %v3322 = vshll.u32 %v3160, 16
        %v3324 = vrot.slane %v3322, 5
        %v3325 = vsel %vm330, %v3320, %v3324
        %v3326 = vshrl.u32 %v3160, 16
        %v3328 = vrot.slane %v3326, 4
        %v3329 = vor.u32 %v3328, %v3324
        %v3330 = vrot.slane %v3329, 4
        %v3332 = vshll.u32 %v3161, 16
        %v3334 = vrot.slane %v3332, 5
        %v3335 = vsel %vm330, %v3330, %v3334
        %v3337 = vshrl.u32 %v3162, 16
        %v3339 = vrot.slane %v3337, 4
        %v3340 = vshll.u32 %v3162, 16
        %v3342 = vrot.slane %v3340, 5
        %v3343 = vor.u32 %v3339, %v3342
        %v3344 = vrot.slane %v3343, 4
        %v3346 = vshll.u32 %v3163, 16
        %v3348 = vrot.slane %v3346, 5
        %v3349 = vsel %vm330, %v3344, %v3348
        %v3350 = vshrl.u32 %v3163, 16
        %v3352 = vrot.slane %v3350, 4
        %v3353 = vor.u32 %v3352, %v3348
        %v3354 = vrot.slane %v3353, 4
        %v3356 = vshll.u32 %v3164, 16
        %v3358 = vrot.slane %v3356, 5
        %v3359 = vsel %vm330, %v3354, %v3358
        %v3361 = vshrl.u32 %v3165, 16
        %v3363 = vrot.slane %v3361, 4
        %v3364 = vshll.u32 %v3165, 16
        %v3366 = vrot.slane %v3364, 5
        %v3367 = vor.u32 %v3363, %v3366
        %v3368 = vrot.slane %v3367, 4
        %v3370 = vshll.u32 %v3166, 16
        %v3372 = vrot.slane %v3370, 5
        %v3373 = vsel %vm330, %v3368, %v3372
        %v3374 = vshrl.u32 %v3166, 16
        %v3376 = vrot.slane %v3374, 4
        %v3377 = vor.u32 %v3376, %v3372
        %v3378 = vrot.slane %v3377, 4
        %v3380 = vshll.u32 %v3167, 16
        %v3382 = vrot.slane %v3380, 5
        %v3383 = vsel %vm330, %v3378, %v3382
        %v3385 = vshrl.u32 %v3168, 16
        %v3387 = vrot.slane %v3385, 4
        %v3388 = vshll.u32 %v3168, 16
        %v3390 = vrot.slane %v3388, 5
        %v3391 = vor.u32 %v3387, %v3390
        %v3392 = vrot.slane %v3391, 4
        %v3394 = vshll.u32 %v3169, 16
        %v3396 = vrot.slane %v3394, 5
        %v3397 = vsel %vm330, %v3392, %v3396
        %v3398 = vshrl.u32 %v3169, 16
        %v3400 = vrot.slane %v3398, 4
        %v3401 = vor.u32 %v3400, %v3396
        %v3402 = vrot.slane %v3401, 4
        %v3404 = vshll.u32 %v3170, 16
        %v3406 = vrot.slane %v3404, 5
        %v3407 = vsel %vm330, %v3402, %v3406
        %v3409 = vshrl.u32 %v3171, 16
        %v3411 = vrot.slane %v3409, 4
        %v3412 = vshll.u32 %v3171, 16
        %v3414 = vrot.slane %v3412, 5
        %v3415 = vor.u32 %v3411, %v3414
        %v3416 = vrot.slane %v3415, 4
        %v3418 = vshll.u32 %v3172, 16
        %v3420 = vrot.slane %v3418, 5
        %v3421 = vsel %vm330, %v3416, %v3420
        %v3422 = vshrl.u32 %v3172, 16
        %v3424 = vrot.slane %v3422, 4
        %v3425 = vor.u32 %v3424, %v3420
        %v3426 = vrot.slane %v3425, 4
        %v3428 = vshll.u32 %v3173, 16
        %v3430 = vrot.slane %v3428, 5
        %v3431 = vsel %vm330, %v3426, %v3430
        %v3433 = vshrl.u32 %v3174, 16
        %v3435 = vrot.slane %v3433, 4
        %v3436 = vshll.u32 %v3174, 16
        %v3438 = vrot.slane %v3436, 5
        %v3439 = vor.u32 %v3435, %v3438
        %v3440 = vrot.slane %v3439, 4
        %v3442 = vshll.u32 %v3175, 16
        %v3444 = vrot.slane %v3442, 5
        %v3445 = vsel %vm330, %v3440, %v3444
        %v3446 = vshrl.u32 %v3175, 16
        %v3448 = vrot.slane %v3446, 4
        %v3449 = vor.u32 %v3448, %v3444
        %v3450 = vrot.slane %v3449, 4
        %v3452 = vshll.u32 %v3176, 16
        %v3454 = vrot.slane %v3452, 5
        %v3455 = vsel %vm330, %v3450, %v3454
        %v3457 = vshrl.u32 %v3177, 16
        %v3459 = vrot.slane %v3457, 4
        %v3460 = vshll.u32 %v3177, 16
        %v3462 = vrot.slane %v3460, 5
        %v3463 = vor.u32 %v3459, %v3462
        %v3464 = vrot.slane %v3463, 4
        %v3466 = vshll.u32 %v3178, 16
        %v3468 = vrot.slane %v3466, 5
        %v3469 = vsel %vm330, %v3464, %v3468
        %v3470 = vshrl.u32 %v3178, 16
        %v3472 = vrot.slane %v3470, 4
        %v3473 = vor.u32 %v3472, %v3468
        %v3474 = vrot.slane %v3473, 4
        %v3476 = vshll.u32 %v3179, 16
        %v3478 = vrot.slane %v3476, 5
        %v3479 = vsel %vm330, %v3474, %v3478
        %v3481 = vshrl.u32 %v3180, 16
        %v3483 = vrot.slane %v3481, 4
        %v3484 = vshll.u32 %v3180, 16
        %v3486 = vrot.slane %v3484, 5
        %v3487 = vor.u32 %v3483, %v3486
        %v3488 = vrot.slane %v3487, 4
        %v3490 = vshll.u32 %v3181, 16
        %v3492 = vrot.slane %v3490, 5
        %v3493 = vsel %vm330, %v3488, %v3492
        %v3494 = vshrl.u32 %v3181, 16
        %v3496 = vrot.slane %v3494, 4
        %v3497 = vor.u32 %v3496, %v3492
        %v3498 = vrot.slane %v3497, 4
        %v3500 = vshll.u32 %v3182, 16
        %v3502 = vrot.slane %v3500, 5
        %v3503 = vsel %vm330, %v3498, %v3502
        %v3505 = vshrl.u32 %v3183, 16
        %v3507 = vrot.slane %v3505, 4
        %v3508 = vshll.u32 %v3183, 16
        %v3510 = vrot.slane %v3508, 5
        %v3511 = vor.u32 %v3507, %v3510
        %v3512 = vrot.slane %v3511, 4
        %v3514 = vshll.u32 %v3184, 16
        %v3516 = vrot.slane %v3514, 5
        %v3517 = vsel %vm330, %v3512, %v3516
        %v3518 = vshrl.u32 %v3184, 16
        %v3520 = vrot.slane %v3518, 4
        %v3521 = vor.u32 %v3520, %v3516
        %v3522 = vrot.slane %v3521, 4
        %v3524 = vshll.u32 %v3185, 16
        %v3526 = vrot.slane %v3524, 5
        %v3527 = vsel %vm330, %v3522, %v3526
        %v3529 = vshrl.u32 %v3186, 16
        %v3531 = vrot.slane %v3529, 4
        %v3532 = vshll.u32 %v3186, 16
        %v3534 = vrot.slane %v3532, 5
        %v3535 = vor.u32 %v3531, %v3534
        %v3536 = vrot.slane %v3535, 4
        %v3538 = vshll.u32 %v3187, 16
        %v3540 = vrot.slane %v3538, 5
        %v3541 = vsel %vm330, %v3536, %v3540
        %v3542 = vshrl.u32 %v3187, 16
        %v3544 = vrot.slane %v3542, 4
        %v3545 = vor.u32 %v3544, %v3540
        %v3546 = vrot.slane %v3545, 4
        %v3548 = vshll.u32 %v3188, 16
        %v3550 = vrot.slane %v3548, 5
        %v3551 = vsel %vm330, %v3546, %v3550
        %v3553 = vshrl.u32 %v3189, 16
        %v3555 = vrot.slane %v3553, 4
        %v3556 = vshll.u32 %v3189, 16
        %v3558 = vrot.slane %v3556, 5
        %v3559 = vor.u32 %v3555, %v3558
        %v3560 = vrot.slane %v3559, 4
        %v3562 = vshll.u32 %v3190, 16
        %v3564 = vrot.slane %v3562, 5
        %v3565 = vsel %vm330, %v3560, %v3564
        %v3566 = vshrl.u32 %v3190, 16
        %v3568 = vrot.slane %v3566, 4
        %v3569 = vor.u32 %v3568, %v3564
        %v3570 = vrot.slane %v3569, 4
        %v3572 = vshll.u32 %v3191, 16
        %v3574 = vrot.slane %v3572, 5
        %v3575 = vsel %vm330, %v3570, %v3574
        %v3576 = vld [vmem:[%s1 + $0xc] sm:$0xc]
        %v3577 = vunpack.c.l.b16 %v3205
        %v3578 = vunpack.c.l.b16 %v3215
        %v3579 = vunpack.c.l.b16 %v3229
        %v3580 = vunpack.c.l.b16 %v3239
        %v3581 = vunpack.c.l.b16 %v3253
        %v3582 = vunpack.c.l.b16 %v3263
        %v3583 = vunpack.c.l.b16 %v3277
        %v3584 = vunpack.c.l.b16 %v3287
        %v3585 = vunpack.c.l.b16 %v3301
        %v3586 = vunpack.c.l.b16 %v3311
        %v3587 = vunpack.c.l.b16 %v3325
        %v3588 = vunpack.c.l.b16 %v3335
        %v3589 = vunpack.c.l.b16 %v3349
        %v3590 = vunpack.c.l.b16 %v3359
        %v3591 = vunpack.c.l.b16 %v3373
        %v3592 = vunpack.c.l.b16 %v3383
        %v3593 = vunpack.c.l.b16 %v3397
        %v3594 = vunpack.c.l.b16 %v3407
        %v3595 = vunpack.c.l.b16 %v3421
        %v3596 = vunpack.c.l.b16 %v3431
        %v3597 = vunpack.c.l.b16 %v3445
        %v3598 = vunpack.c.l.b16 %v3455
        %v3599 = vunpack.c.l.b16 %v3469
        %v3600 = vunpack.c.l.b16 %v3479
        %v3601 = vunpack.c.l.b16 %v3493
        %v3602 = vunpack.c.l.b16 %v3503
        %v3603 = vunpack.c.l.b16 %v3517
        %v3604 = vunpack.c.l.b16 %v3527
        %v3605 = vunpack.c.l.b16 %v3541
        %v3606 = vunpack.c.l.b16 %v3551
        %v3607 = vunpack.c.l.b16 %v3565
        %v3608 = vunpack.c.l.b16 %v3575
        %v3609 = vpack.c.b16 %v3578, %v3577
        %v3610 = vpack.c.b16 %v3580, %v3579
        %v3611 = vpack.c.b16 %v3582, %v3581
        %v3612 = vpack.c.b16 %v3584, %v3583
        %v3613 = vpack.c.b16 %v3586, %v3585
        %v3614 = vpack.c.b16 %v3588, %v3587
        %v3615 = vpack.c.b16 %v3590, %v3589
        %v3616 = vpack.c.b16 %v3592, %v3591
        %v3617 = vpack.c.b16 %v3594, %v3593
        %v3618 = vpack.c.b16 %v3596, %v3595
        %v3619 = vpack.c.b16 %v3598, %v3597
        %v3620 = vpack.c.b16 %v3600, %v3599
        %v3621 = vpack.c.b16 %v3602, %v3601
        %v3622 = vpack.c.b16 %v3604, %v3603
        %v3623 = vpack.c.b16 %v3606, %v3605
        %v3624 = vpack.c.b16 %v3608, %v3607
        %v3626 = vunpack.c.l.b16 %v3576
        %v3627 = vpack.c.b16 %v3626, %v3626
        %v3628 = vrot.slane %v3627, 2
        %v3630 = vsel %vm768, %v3609, 0
        %v3633 = vsel %vm768, %v3610, 0
        %v3636 = vsel %vm768, %v3611, 0
        %v3639 = vsel %vm768, %v3612, 0
        %v3642 = vsel %vm768, %v3613, 0
        %v3645 = vsel %vm768, %v3614, 0
        %v3648 = vsel %vm768, %v3615, 0
        %v3651 = vsel %vm768, %v3616, 0
        %v3654 = vsel %vm768, %v3617, 0
        %v3657 = vsel %vm768, %v3618, 0
        %v3660 = vsel %vm768, %v3619, 0
        %v3663 = vsel %vm768, %v3620, 0
        %v3666 = vsel %vm768, %v3621, 0
        %v3669 = vsel %vm768, %v3622, 0
        %v3672 = vsel %vm768, %v3623, 0
        %v3675 = vsel %vm768, %v3624, 0
        %v3678 = vsel %vm817, %v3628, 0
        %3680 = vmatpush.bf16.msra.mxu0 0
        %3681 = vmatpush.bf16.msra.mxu0 0
        %3682 = vmatpush.bf16.msra.mxu0 0
        %3683 = vmatpush.bf16.msra.mxu0 0
        %3684 = vmatpush.bf16.msra.mxu0 0
        %3685 = vmatpush.bf16.msra.mxu0 0
        %3686 = vmatpush.bf16.msra.mxu0 0
        %3687 = vmatpush.bf16.msra.mxu0 %v3678
        %3688 = vmatmul.bf16.gmra.mxu0 %v3630
        %v3689 = vpop.f32.mrf.mxu0
        %v3690 = vadd.f32 0.0, %v3689
        %v3691 = vpop.f32.mrf.mxu0
        %v3692 = vadd.f32 0.0, %v3691
        %3693 = vmatmul.bf16.gmra.mxu0 %v3633
        %v3694 = vpop.f32.mrf.mxu0
        %v3695 = vadd.f32 0.0, %v3694
        %v3696 = vpop.f32.mrf.mxu0
        %v3697 = vadd.f32 0.0, %v3696
        %3698 = vmatmul.bf16.gmra.mxu0 %v3636
        %v3699 = vpop.f32.mrf.mxu0
        %v3700 = vadd.f32 0.0, %v3699
        %v3701 = vpop.f32.mrf.mxu0
        %v3702 = vadd.f32 0.0, %v3701
        %3703 = vmatmul.bf16.gmra.mxu0 %v3639
        %v3704 = vpop.f32.mrf.mxu0
        %v3705 = vadd.f32 0.0, %v3704
        %v3706 = vpop.f32.mrf.mxu0
        %v3707 = vadd.f32 0.0, %v3706
        %3708 = vmatmul.bf16.gmra.mxu0 %v3642
        %v3709 = vpop.f32.mrf.mxu0
        %v3710 = vadd.f32 0.0, %v3709
        %v3711 = vpop.f32.mrf.mxu0
        %v3712 = vadd.f32 0.0, %v3711
        %3713 = vmatmul.bf16.gmra.mxu0 %v3645
        %v3714 = vpop.f32.mrf.mxu0
        %v3715 = vadd.f32 0.0, %v3714
        %v3716 = vpop.f32.mrf.mxu0
        %v3717 = vadd.f32 0.0, %v3716
        %3718 = vmatmul.bf16.gmra.mxu0 %v3648
        %v3719 = vpop.f32.mrf.mxu0
        %v3720 = vadd.f32 0.0, %v3719
        %v3721 = vpop.f32.mrf.mxu0
        %v3722 = vadd.f32 0.0, %v3721
        %3723 = vmatmul.bf16.gmra.mxu0 %v3651
        %v3724 = vpop.f32.mrf.mxu0
        %v3725 = vadd.f32 0.0, %v3724
        %v3726 = vpop.f32.mrf.mxu0
        %v3727 = vadd.f32 0.0, %v3726
        %3728 = vmatmul.bf16.gmra.mxu0 %v3654
        %v3729 = vpop.f32.mrf.mxu0
        %v3730 = vadd.f32 0.0, %v3729
        %v3731 = vpop.f32.mrf.mxu0
        %v3732 = vadd.f32 0.0, %v3731
        %3733 = vmatmul.bf16.gmra.mxu0 %v3657
        %v3734 = vpop.f32.mrf.mxu0
        %v3735 = vadd.f32 0.0, %v3734
        %v3736 = vpop.f32.mrf.mxu0
        %v3737 = vadd.f32 0.0, %v3736
        %3738 = vmatmul.bf16.gmra.mxu0 %v3660
        %v3739 = vpop.f32.mrf.mxu0
        %v3740 = vadd.f32 0.0, %v3739
        %v3741 = vpop.f32.mrf.mxu0
        %v3742 = vadd.f32 0.0, %v3741
        %3743 = vmatmul.bf16.gmra.mxu0 %v3663
        %v3744 = vpop.f32.mrf.mxu0
        %v3745 = vadd.f32 0.0, %v3744
        %v3746 = vpop.f32.mrf.mxu0
        %v3747 = vadd.f32 0.0, %v3746
        %3748 = vmatmul.bf16.gmra.mxu0 %v3666
        %v3749 = vpop.f32.mrf.mxu0
        %v3750 = vadd.f32 0.0, %v3749
        %v3751 = vpop.f32.mrf.mxu0
        %v3752 = vadd.f32 0.0, %v3751
        %3753 = vmatmul.bf16.gmra.mxu0 %v3669
        %v3754 = vpop.f32.mrf.mxu0
        %v3755 = vadd.f32 0.0, %v3754
        %v3756 = vpop.f32.mrf.mxu0
        %v3757 = vadd.f32 0.0, %v3756
        %3758 = vmatmul.bf16.gmra.mxu0 %v3672
        %v3759 = vpop.f32.mrf.mxu0
        %v3760 = vadd.f32 0.0, %v3759
        %v3761 = vpop.f32.mrf.mxu0
        %v3762 = vadd.f32 0.0, %v3761
        %3763 = vmatmul.bf16.gmra.mxu0 %v3675
        %v3764 = vpop.f32.mrf.mxu0
        %v3765 = vadd.f32 0.0, %v3764
        %v3766 = vpop.f32.mrf.mxu0
        %v3767 = vadd.f32 0.0, %v3766
        %3768 = vdwg.mxu0
        %v3769 = vadd.f32 %v3112, %v3690
        %v3770 = vadd.f32 %v3113, %v3692
        %v3771 = vadd.f32 %v3114, %v3695
        %v3772 = vadd.f32 %v3115, %v3697
        %v3773 = vadd.f32 %v3116, %v3700
        %v3774 = vadd.f32 %v3117, %v3702
        %v3775 = vadd.f32 %v3118, %v3705
        %v3776 = vadd.f32 %v3119, %v3707
        %v3777 = vadd.f32 %v3120, %v3710
        %v3778 = vadd.f32 %v3121, %v3712
        %v3779 = vadd.f32 %v3122, %v3715
        %v3780 = vadd.f32 %v3123, %v3717
        %v3781 = vadd.f32 %v3124, %v3720
        %v3782 = vadd.f32 %v3125, %v3722
        %v3783 = vadd.f32 %v3126, %v3725
        %v3784 = vadd.f32 %v3127, %v3727
        %v3785 = vadd.f32 %v3128, %v3730
        %v3786 = vadd.f32 %v3129, %v3732
        %v3787 = vadd.f32 %v3130, %v3735
        %v3788 = vadd.f32 %v3131, %v3737
        %v3789 = vadd.f32 %v3132, %v3740
        %v3790 = vadd.f32 %v3133, %v3742
        %v3791 = vadd.f32 %v3134, %v3745
        %v3792 = vadd.f32 %v3135, %v3747
        %v3793 = vadd.f32 %v3136, %v3750
        %v3794 = vadd.f32 %v3137, %v3752
        %v3795 = vadd.f32 %v3138, %v3755
        %v3796 = vadd.f32 %v3139, %v3757
        %v3797 = vadd.f32 %v3140, %v3760
        %v3798 = vadd.f32 %v3141, %v3762
        %v3799 = vadd.f32 %v3142, %v3765
        %v3800 = vadd.f32 %v3143, %v3767
        %v3801 = vld [vmem:[%s2858] sm:$0xe]
        %v3802 = vld [vmem:[%s2858 + $0xc] sm:$0xe]
        %v3803 = vld [vmem:[%s2858 + $0x18] sm:$0xe]
        %v3804 = vld [vmem:[%s2858 + $0x24] sm:$0xe]
        %v3805 = vld [vmem:[%s2858 + $0x30] sm:$0xe]
        %v3806 = vld [vmem:[%s2858 + $0x3c] sm:$0xe]
        %v3807 = vld [vmem:[%s2858 + $0x48] sm:$0xe]
        %v3808 = vld [vmem:[%s2858 + $0x54] sm:$0xe]
        %v3809 = vld [vmem:[%s2858 + $0x60] sm:$0xe]
        %v3810 = vld [vmem:[%s2858 + $0x6c] sm:$0xe]
        %v3811 = vld [vmem:[%s2858 + $0x78] sm:$0xe]
        %v3812 = vld [vmem:[%s2858 + $0x84] sm:$0xe]
        %v3813 = vld [vmem:[%s2858 + $0x90] sm:$0xe]
        %v3814 = vld [vmem:[%s2858 + $0x9c] sm:$0xe]
        %v3815 = vld [vmem:[%s2858 + $0xa8] sm:$0xe]
        %v3816 = vld [vmem:[%s2858 + $0xb4] sm:$0xe]
        %v3865 = vrot.slane %v3801, 5
        %v3866 = vrot.slane %v3865, 4
        %v3867 = vrot.slane %v3145, 5
        %v3868 = vsel %vm1180, %v3866, %v3867
        %v3869 = vrot.slane %v3867, 4
        %v3870 = vrot.slane %v3146, 5
        %v3871 = vsel %vm1180, %v3869, %v3870
        %v3872 = vrot.slane %v3802, 5
        %v3873 = vrot.slane %v3872, 4
        %v3874 = vrot.slane %v3148, 5
        %v3875 = vsel %vm1180, %v3873, %v3874
        %v3876 = vrot.slane %v3874, 4
        %v3877 = vrot.slane %v3149, 5
        %v3878 = vsel %vm1180, %v3876, %v3877
        %v3879 = vrot.slane %v3803, 5
        %v3880 = vrot.slane %v3879, 4
        %v3881 = vrot.slane %v3151, 5
        %v3882 = vsel %vm1180, %v3880, %v3881
        %v3883 = vrot.slane %v3881, 4
        %v3884 = vrot.slane %v3152, 5
        %v3885 = vsel %vm1180, %v3883, %v3884
        %v3886 = vrot.slane %v3804, 5
        %v3887 = vrot.slane %v3886, 4
        %v3888 = vrot.slane %v3154, 5
        %v3889 = vsel %vm1180, %v3887, %v3888
        %v3890 = vrot.slane %v3888, 4
        %v3891 = vrot.slane %v3155, 5
        %v3892 = vsel %vm1180, %v3890, %v3891
        %v3893 = vrot.slane %v3805, 5
        %v3894 = vrot.slane %v3893, 4
        %v3895 = vrot.slane %v3157, 5
        %v3896 = vsel %vm1180, %v3894, %v3895
        %v3897 = vrot.slane %v3895, 4
        %v3898 = vrot.slane %v3158, 5
        %v3899 = vsel %vm1180, %v3897, %v3898
        %v3900 = vrot.slane %v3806, 5
        %v3901 = vrot.slane %v3900, 4
        %v3902 = vrot.slane %v3160, 5
        %v3903 = vsel %vm1180, %v3901, %v3902
        %v3904 = vrot.slane %v3902, 4
        %v3905 = vrot.slane %v3161, 5
        %v3906 = vsel %vm1180, %v3904, %v3905
        %v3907 = vrot.slane %v3807, 5
        %v3908 = vrot.slane %v3907, 4
        %v3909 = vrot.slane %v3163, 5
        %v3910 = vsel %vm1180, %v3908, %v3909
        %v3911 = vrot.slane %v3909, 4
        %v3912 = vrot.slane %v3164, 5
        %v3913 = vsel %vm1180, %v3911, %v3912
        %v3914 = vrot.slane %v3808, 5
        %v3915 = vrot.slane %v3914, 4
        %v3916 = vrot.slane %v3166, 5
        %v3917 = vsel %vm1180, %v3915, %v3916
        %v3918 = vrot.slane %v3916, 4
        %v3919 = vrot.slane %v3167, 5
        %v3920 = vsel %vm1180, %v3918, %v3919
        %v3921 = vrot.slane %v3809, 5
        %v3922 = vrot.slane %v3921, 4
        %v3923 = vrot.slane %v3169, 5
        %v3924 = vsel %vm1180, %v3922, %v3923
        %v3925 = vrot.slane %v3923, 4
        %v3926 = vrot.slane %v3170, 5
        %v3927 = vsel %vm1180, %v3925, %v3926
        %v3928 = vrot.slane %v3810, 5
        %v3929 = vrot.slane %v3928, 4
        %v3930 = vrot.slane %v3172, 5
        %v3931 = vsel %vm1180, %v3929, %v3930
        %v3932 = vrot.slane %v3930, 4
        %v3933 = vrot.slane %v3173, 5
        %v3934 = vsel %vm1180, %v3932, %v3933
        %v3935 = vrot.slane %v3811, 5
        %v3936 = vrot.slane %v3935, 4
        %v3937 = vrot.slane %v3175, 5
        %v3938 = vsel %vm1180, %v3936, %v3937
        %v3939 = vrot.slane %v3937, 4
        %v3940 = vrot.slane %v3176, 5
        %v3941 = vsel %vm1180, %v3939, %v3940
        %v3942 = vrot.slane %v3812, 5
        %v3943 = vrot.slane %v3942, 4
        %v3944 = vrot.slane %v3178, 5
        %v3945 = vsel %vm1180, %v3943, %v3944
        %v3946 = vrot.slane %v3944, 4
        %v3947 = vrot.slane %v3179, 5
        %v3948 = vsel %vm1180, %v3946, %v3947
        %v3949 = vrot.slane %v3813, 5
        %v3950 = vrot.slane %v3949, 4
        %v3951 = vrot.slane %v3181, 5
        %v3952 = vsel %vm1180, %v3950, %v3951
        %v3953 = vrot.slane %v3951, 4
        %v3954 = vrot.slane %v3182, 5
        %v3955 = vsel %vm1180, %v3953, %v3954
        %v3956 = vrot.slane %v3814, 5
        %v3957 = vrot.slane %v3956, 4
        %v3958 = vrot.slane %v3184, 5
        %v3959 = vsel %vm1180, %v3957, %v3958
        %v3960 = vrot.slane %v3958, 4
        %v3961 = vrot.slane %v3185, 5
        %v3962 = vsel %vm1180, %v3960, %v3961
        %v3963 = vrot.slane %v3815, 5
        %v3964 = vrot.slane %v3963, 4
        %v3965 = vrot.slane %v3187, 5
        %v3966 = vsel %vm1180, %v3964, %v3965
        %v3967 = vrot.slane %v3965, 4
        %v3968 = vrot.slane %v3188, 5
        %v3969 = vsel %vm1180, %v3967, %v3968
        %v3970 = vrot.slane %v3816, 5
        %v3971 = vrot.slane %v3970, 4
        %v3972 = vrot.slane %v3190, 5
        %v3973 = vsel %vm1180, %v3971, %v3972
        %v3974 = vrot.slane %v3972, 4
        %v3975 = vrot.slane %v3191, 5
        %v3976 = vsel %vm1180, %v3974, %v3975
        %v3977 = vld [vmem:[%s1 + $0x10] sm:$0x3]
        %v3978 = vunpack.c.l.b16 %v3868
        %v3979 = vunpack.c.l.b16 %v3871
        %v3980 = vunpack.c.l.b16 %v3875
        %v3981 = vunpack.c.l.b16 %v3878
        %v3982 = vunpack.c.l.b16 %v3882
        %v3983 = vunpack.c.l.b16 %v3885
        %v3984 = vunpack.c.l.b16 %v3889
        %v3985 = vunpack.c.l.b16 %v3892
        %v3986 = vunpack.c.l.b16 %v3896
        %v3987 = vunpack.c.l.b16 %v3899
        %v3988 = vunpack.c.l.b16 %v3903
        %v3989 = vunpack.c.l.b16 %v3906
        %v3990 = vunpack.c.l.b16 %v3910
        %v3991 = vunpack.c.l.b16 %v3913
        %v3992 = vunpack.c.l.b16 %v3917
        %v3993 = vunpack.c.l.b16 %v3920
        %v3994 = vunpack.c.l.b16 %v3924
        %v3995 = vunpack.c.l.b16 %v3927
        %v3996 = vunpack.c.l.b16 %v3931
        %v3997 = vunpack.c.l.b16 %v3934
        %v3998 = vunpack.c.l.b16 %v3938
        %v3999 = vunpack.c.l.b16 %v3941
        %v4000 = vunpack.c.l.b16 %v3945
        %v4001 = vunpack.c.l.b16 %v3948
        %v4002 = vunpack.c.l.b16 %v3952
        %v4003 = vunpack.c.l.b16 %v3955
        %v4004 = vunpack.c.l.b16 %v3959
        %v4005 = vunpack.c.l.b16 %v3962
        %v4006 = vunpack.c.l.b16 %v3966
        %v4007 = vunpack.c.l.b16 %v3969
        %v4008 = vunpack.c.l.b16 %v3973
        %v4009 = vunpack.c.l.b16 %v3976
        %v4010 = vpack.c.b16 %v3979, %v3978
        %v4011 = vpack.c.b16 %v3981, %v3980
        %v4012 = vpack.c.b16 %v3983, %v3982
        %v4013 = vpack.c.b16 %v3985, %v3984
        %v4014 = vpack.c.b16 %v3987, %v3986
        %v4015 = vpack.c.b16 %v3989, %v3988
        %v4016 = vpack.c.b16 %v3991, %v3990
        %v4017 = vpack.c.b16 %v3993, %v3992
        %v4018 = vpack.c.b16 %v3995, %v3994
        %v4019 = vpack.c.b16 %v3997, %v3996
        %v4020 = vpack.c.b16 %v3999, %v3998
        %v4021 = vpack.c.b16 %v4001, %v4000
        %v4022 = vpack.c.b16 %v4003, %v4002
        %v4023 = vpack.c.b16 %v4005, %v4004
        %v4024 = vpack.c.b16 %v4007, %v4006
        %v4025 = vpack.c.b16 %v4009, %v4008
        %v4027 = vsel %vm768, %v4010, 0
        %v4030 = vsel %vm768, %v4011, 0
        %v4033 = vsel %vm768, %v4012, 0
        %v4036 = vsel %vm768, %v4013, 0
        %v4039 = vsel %vm768, %v4014, 0
        %v4042 = vsel %vm768, %v4015, 0
        %v4045 = vsel %vm768, %v4016, 0
        %v4048 = vsel %vm768, %v4017, 0
        %v4051 = vsel %vm768, %v4018, 0
        %v4054 = vsel %vm768, %v4019, 0
        %v4057 = vsel %vm768, %v4020, 0
        %v4060 = vsel %vm768, %v4021, 0
        %v4063 = vsel %vm768, %v4022, 0
        %v4066 = vsel %vm768, %v4023, 0
        %v4069 = vsel %vm768, %v4024, 0
        %v4072 = vsel %vm768, %v4025, 0
        %v4075 = vsel %vm817, %v3977, 0
        %4077 = vmatpush.bf16.msra.mxu0 0
        %4078 = vmatpush.bf16.msra.mxu0 0
        %4079 = vmatpush.bf16.msra.mxu0 0
        %4080 = vmatpush.bf16.msra.mxu0 0
        %4081 = vmatpush.bf16.msra.mxu0 0
        %4082 = vmatpush.bf16.msra.mxu0 0
        %4083 = vmatpush.bf16.msra.mxu0 0
        %4084 = vmatpush.bf16.msra.mxu0 %v4075
        %4085 = vmatmul.bf16.gmra.mxu0 %v4027
        %v4086 = vpop.f32.mrf.mxu0
        %v4087 = vadd.f32 0.0, %v4086
        %v4088 = vpop.f32.mrf.mxu0
        %v4089 = vadd.f32 0.0, %v4088
        %4090 = vmatmul.bf16.gmra.mxu0 %v4030
        %v4091 = vpop.f32.mrf.mxu0
        %v4092 = vadd.f32 0.0, %v4091
        %v4093 = vpop.f32.mrf.mxu0
        %v4094 = vadd.f32 0.0, %v4093
        %4095 = vmatmul.bf16.gmra.mxu0 %v4033
        %v4096 = vpop.f32.mrf.mxu0
        %v4097 = vadd.f32 0.0, %v4096
        %v4098 = vpop.f32.mrf.mxu0
        %v4099 = vadd.f32 0.0, %v4098
        %4100 = vmatmul.bf16.gmra.mxu0 %v4036
        %v4101 = vpop.f32.mrf.mxu0
        %v4102 = vadd.f32 0.0, %v4101
        %v4103 = vpop.f32.mrf.mxu0
        %v4104 = vadd.f32 0.0, %v4103
        %4105 = vmatmul.bf16.gmra.mxu0 %v4039
        %v4106 = vpop.f32.mrf.mxu0
        %v4107 = vadd.f32 0.0, %v4106
        %v4108 = vpop.f32.mrf.mxu0
        %v4109 = vadd.f32 0.0, %v4108
        %4110 = vmatmul.bf16.gmra.mxu0 %v4042
        %v4111 = vpop.f32.mrf.mxu0
        %v4112 = vadd.f32 0.0, %v4111
        %v4113 = vpop.f32.mrf.mxu0
        %v4114 = vadd.f32 0.0, %v4113
        %4115 = vmatmul.bf16.gmra.mxu0 %v4045
        %v4116 = vpop.f32.mrf.mxu0
        %v4117 = vadd.f32 0.0, %v4116
        %v4118 = vpop.f32.mrf.mxu0
        %v4119 = vadd.f32 0.0, %v4118
        %4120 = vmatmul.bf16.gmra.mxu0 %v4048
        %v4121 = vpop.f32.mrf.mxu0
        %v4122 = vadd.f32 0.0, %v4121
        %v4123 = vpop.f32.mrf.mxu0
        %v4124 = vadd.f32 0.0, %v4123
        %4125 = vmatmul.bf16.gmra.mxu0 %v4051
        %v4126 = vpop.f32.mrf.mxu0
        %v4127 = vadd.f32 0.0, %v4126
        %v4128 = vpop.f32.mrf.mxu0
        %v4129 = vadd.f32 0.0, %v4128
        %4130 = vmatmul.bf16.gmra.mxu0 %v4054
        %v4131 = vpop.f32.mrf.mxu0
        %v4132 = vadd.f32 0.0, %v4131
        %v4133 = vpop.f32.mrf.mxu0
        %v4134 = vadd.f32 0.0, %v4133
        %4135 = vmatmul.bf16.gmra.mxu0 %v4057
        %v4136 = vpop.f32.mrf.mxu0
        %v4137 = vadd.f32 0.0, %v4136
        %v4138 = vpop.f32.mrf.mxu0
        %v4139 = vadd.f32 0.0, %v4138
        %4140 = vmatmul.bf16.gmra.mxu0 %v4060
        %v4141 = vpop.f32.mrf.mxu0
        %v4142 = vadd.f32 0.0, %v4141
        %v4143 = vpop.f32.mrf.mxu0
        %v4144 = vadd.f32 0.0, %v4143
        %4145 = vmatmul.bf16.gmra.mxu0 %v4063
        %v4146 = vpop.f32.mrf.mxu0
        %v4147 = vadd.f32 0.0, %v4146
        %v4148 = vpop.f32.mrf.mxu0
        %v4149 = vadd.f32 0.0, %v4148
        %4150 = vmatmul.bf16.gmra.mxu0 %v4066
        %v4151 = vpop.f32.mrf.mxu0
        %v4152 = vadd.f32 0.0, %v4151
        %v4153 = vpop.f32.mrf.mxu0
        %v4154 = vadd.f32 0.0, %v4153
        %4155 = vmatmul.bf16.gmra.mxu0 %v4069
        %v4156 = vpop.f32.mrf.mxu0
        %v4157 = vadd.f32 0.0, %v4156
        %v4158 = vpop.f32.mrf.mxu0
        %v4159 = vadd.f32 0.0, %v4158
        %4160 = vmatmul.bf16.gmra.mxu0 %v4072
        %v4161 = vpop.f32.mrf.mxu0
        %v4162 = vadd.f32 0.0, %v4161
        %v4163 = vpop.f32.mrf.mxu0
        %v4164 = vadd.f32 0.0, %v4163
        %4165 = vdwg.mxu0
        %v4166 = vadd.f32 %v3769, %v4087
        %v4167 = vadd.f32 %v3770, %v4089
        %v4168 = vadd.f32 %v3771, %v4092
        %v4169 = vadd.f32 %v3772, %v4094
        %v4170 = vadd.f32 %v3773, %v4097
        %v4171 = vadd.f32 %v3774, %v4099
        %v4172 = vadd.f32 %v3775, %v4102
        %v4173 = vadd.f32 %v3776, %v4104
        %v4174 = vadd.f32 %v3777, %v4107
        %v4175 = vadd.f32 %v3778, %v4109
        %v4176 = vadd.f32 %v3779, %v4112
        %v4177 = vadd.f32 %v3780, %v4114
        %v4178 = vadd.f32 %v3781, %v4117
        %v4179 = vadd.f32 %v3782, %v4119
        %v4180 = vadd.f32 %v3783, %v4122
        %v4181 = vadd.f32 %v3784, %v4124
        %v4182 = vadd.f32 %v3785, %v4127
        %v4183 = vadd.f32 %v3786, %v4129
        %v4184 = vadd.f32 %v3787, %v4132
        %v4185 = vadd.f32 %v3788, %v4134
        %v4186 = vadd.f32 %v3789, %v4137
        %v4187 = vadd.f32 %v3790, %v4139
        %v4188 = vadd.f32 %v3791, %v4142
        %v4189 = vadd.f32 %v3792, %v4144
        %v4190 = vadd.f32 %v3793, %v4147
        %v4191 = vadd.f32 %v3794, %v4149
        %v4192 = vadd.f32 %v3795, %v4152
        %v4193 = vadd.f32 %v3796, %v4154
        %v4194 = vadd.f32 %v3797, %v4157
        %v4195 = vadd.f32 %v3798, %v4159
        %v4196 = vadd.f32 %v3799, %v4162
        %v4197 = vadd.f32 %v3800, %v4164
        %v4198 = vpack.c.bf16 %v4166, %v4166
        %v4199 = vpack.c.bf16 %v4167, %v4167
        %v4200 = vpack.c.bf16 %v4168, %v4168
        %v4201 = vpack.c.bf16 %v4169, %v4169
        %v4202 = vpack.c.bf16 %v4170, %v4170
        %v4203 = vpack.c.bf16 %v4171, %v4171
        %v4204 = vpack.c.bf16 %v4172, %v4172
        %v4205 = vpack.c.bf16 %v4173, %v4173
        %v4206 = vpack.c.bf16 %v4174, %v4174
        %v4207 = vpack.c.bf16 %v4175, %v4175
        %v4208 = vpack.c.bf16 %v4176, %v4176
        %v4209 = vpack.c.bf16 %v4177, %v4177
        %v4210 = vpack.c.bf16 %v4178, %v4178
        %v4211 = vpack.c.bf16 %v4179, %v4179
        %v4212 = vpack.c.bf16 %v4180, %v4180
        %v4213 = vpack.c.bf16 %v4181, %v4181
        %v4214 = vpack.c.bf16 %v4182, %v4182
        %v4215 = vpack.c.bf16 %v4183, %v4183
        %v4216 = vpack.c.bf16 %v4184, %v4184
        %v4217 = vpack.c.bf16 %v4185, %v4185
        %v4218 = vpack.c.bf16 %v4186, %v4186
        %v4219 = vpack.c.bf16 %v4187, %v4187
        %v4220 = vpack.c.bf16 %v4188, %v4188
        %v4221 = vpack.c.bf16 %v4189, %v4189
        %v4222 = vpack.c.bf16 %v4190, %v4190
        %v4223 = vpack.c.bf16 %v4191, %v4191
        %v4224 = vpack.c.bf16 %v4192, %v4192
        %v4225 = vpack.c.bf16 %v4193, %v4193
        %v4226 = vpack.c.bf16 %v4194, %v4194
        %v4227 = vpack.c.bf16 %v4195, %v4195
        %v4228 = vpack.c.bf16 %v4196, %v4196
        %v4229 = vpack.c.bf16 %v4197, %v4197
        %4230 = vst [vmem:[%s251] sm:$0xf] %v4198
        %4231 = vst [vmem:[%s251 + $0x4] sm:$0xf] %v4199
        %4232 = vst [vmem:[%s251 + $0x8] sm:$0xf] %v4200
        %4233 = vst [vmem:[%s251 + $0xc] sm:$0xf] %v4201
        %4234 = vst [vmem:[%s251 + $0x10] sm:$0xf] %v4202
        %4235 = vst [vmem:[%s251 + $0x14] sm:$0xf] %v4203
        %4236 = vst [vmem:[%s251 + $0x18] sm:$0xf] %v4204
        %4237 = vst [vmem:[%s251 + $0x1c] sm:$0xf] %v4205
        %4238 = vst [vmem:[%s251 + $0x20] sm:$0xf] %v4206
        %4239 = vst [vmem:[%s251 + $0x24] sm:$0xf] %v4207
        %4240 = vst [vmem:[%s251 + $0x28] sm:$0xf] %v4208
        %4241 = vst [vmem:[%s251 + $0x2c] sm:$0xf] %v4209
        %4242 = vst [vmem:[%s251 + $0x30] sm:$0xf] %v4210
        %4243 = vst [vmem:[%s251 + $0x34] sm:$0xf] %v4211
        %4244 = vst [vmem:[%s251 + $0x38] sm:$0xf] %v4212
        %4245 = vst [vmem:[%s251 + $0x3c] sm:$0xf] %v4213
        %4246 = vst [vmem:[%s251 + $0x40] sm:$0xf] %v4214
        %4247 = vst [vmem:[%s251 + $0x44] sm:$0xf] %v4215
        %4248 = vst [vmem:[%s251 + $0x48] sm:$0xf] %v4216
        %4249 = vst [vmem:[%s251 + $0x4c] sm:$0xf] %v4217
        %4250 = vst [vmem:[%s251 + $0x50] sm:$0xf] %v4218
        %4251 = vst [vmem:[%s251 + $0x54] sm:$0xf] %v4219
        %4252 = vst [vmem:[%s251 + $0x58] sm:$0xf] %v4220
        %4253 = vst [vmem:[%s251 + $0x5c] sm:$0xf] %v4221
        %4254 = vst [vmem:[%s251 + $0x60] sm:$0xf] %v4222
        %4255 = vst [vmem:[%s251 + $0x64] sm:$0xf] %v4223
        %4256 = vst [vmem:[%s251 + $0x68] sm:$0xf] %v4224
        %4257 = vst [vmem:[%s251 + $0x6c] sm:$0xf] %v4225
        %4258 = vst [vmem:[%s251 + $0x70] sm:$0xf] %v4226
        %4259 = vst [vmem:[%s251 + $0x74] sm:$0xf] %v4227
        %4260 = vst [vmem:[%s251 + $0x78] sm:$0xf] %v4228
        %4261 = vst [vmem:[%s251 + $0x7c] sm:$0xf] %v4229
        %v4262 = vadd.f32 %v4166, %v4167
        %v4263 = vadd.f32 %v4262, %v4168
        %v4264 = vadd.f32 %v4263, %v4169
        %v4265 = vadd.f32 %v4264, %v4170
        %v4266 = vadd.f32 %v4265, %v4171
        %v4267 = vadd.f32 %v4266, %v4172
        %v4268 = vadd.f32 %v4267, %v4173
        %v4269 = vadd.f32 %v4268, %v4174
        %v4270 = vadd.f32 %v4269, %v4175
        %v4271 = vadd.f32 %v4270, %v4176
        %v4272 = vadd.f32 %v4271, %v4177
        %v4273 = vadd.f32 %v4272, %v4178
        %v4274 = vadd.f32 %v4273, %v4179
        %v4275 = vadd.f32 %v4274, %v4180
        %v4276 = vadd.f32 %v4275, %v4181
        %v4277 = vadd.f32 %v4276, %v4182
        %v4278 = vadd.f32 %v4277, %v4183
        %v4279 = vadd.f32 %v4278, %v4184
        %v4280 = vadd.f32 %v4279, %v4185
        %v4281 = vadd.f32 %v4280, %v4186
        %v4282 = vadd.f32 %v4281, %v4187
        %v4283 = vadd.f32 %v4282, %v4188
        %v4284 = vadd.f32 %v4283, %v4189
        %v4285 = vadd.f32 %v4284, %v4190
        %v4286 = vadd.f32 %v4285, %v4191
        %v4287 = vadd.f32 %v4286, %v4192
        %v4288 = vadd.f32 %v4287, %v4193
        %v4289 = vadd.f32 %v4288, %v4194
        %v4290 = vadd.f32 %v4289, %v4195
        %v4291 = vadd.f32 %v4290, %v4196
        %v4292 = vadd.f32 %v4291, %v4197
        %v4293 = vrot.slane %v4292, 4
        %v4294 = vadd.f32 %v4292, %v4293
        %v4295 = vrot.slane %v4294, 2
        %v4296 = vadd.f32 %v4294, %v4295
        %v4297 = vrot.slane %v4296, 1
        %v4298 = vadd.f32 %v4296, %v4297
        %4299 = vst [vmem:[%s258] sm:$0x1] %v4298
        %v4300 = vmul.f32 %v4166, %v4166
        %v4301 = vmul.f32 %v4167, %v4167
        %v4302 = vmul.f32 %v4168, %v4168
        %v4303 = vmul.f32 %v4169, %v4169
        %v4304 = vmul.f32 %v4170, %v4170
        %v4305 = vmul.f32 %v4171, %v4171
        %v4306 = vmul.f32 %v4172, %v4172
        %v4307 = vmul.f32 %v4173, %v4173
        %v4308 = vmul.f32 %v4174, %v4174
        %v4309 = vmul.f32 %v4175, %v4175
        %v4310 = vmul.f32 %v4176, %v4176
        %v4311 = vmul.f32 %v4177, %v4177
        %v4312 = vmul.f32 %v4178, %v4178
        %v4313 = vmul.f32 %v4179, %v4179
        %v4314 = vmul.f32 %v4180, %v4180
        %v4315 = vmul.f32 %v4181, %v4181
        %v4316 = vmul.f32 %v4182, %v4182
        %v4317 = vmul.f32 %v4183, %v4183
        %v4318 = vmul.f32 %v4184, %v4184
        %v4319 = vmul.f32 %v4185, %v4185
        %v4320 = vmul.f32 %v4186, %v4186
        %v4321 = vmul.f32 %v4187, %v4187
        %v4322 = vmul.f32 %v4188, %v4188
        %v4323 = vmul.f32 %v4189, %v4189
        %v4324 = vmul.f32 %v4190, %v4190
        %v4325 = vmul.f32 %v4191, %v4191
        %v4326 = vmul.f32 %v4192, %v4192
        %v4327 = vmul.f32 %v4193, %v4193
        %v4328 = vmul.f32 %v4194, %v4194
        %v4329 = vmul.f32 %v4195, %v4195
        %v4330 = vmul.f32 %v4196, %v4196
        %v4331 = vmul.f32 %v4197, %v4197
        %v4332 = vadd.f32 %v4300, %v4301
        %v4333 = vadd.f32 %v4332, %v4302
        %v4334 = vadd.f32 %v4333, %v4303
        %v4335 = vadd.f32 %v4334, %v4304
        %v4336 = vadd.f32 %v4335, %v4305
        %v4337 = vadd.f32 %v4336, %v4306
        %v4338 = vadd.f32 %v4337, %v4307
        %v4339 = vadd.f32 %v4338, %v4308
        %v4340 = vadd.f32 %v4339, %v4309
        %v4341 = vadd.f32 %v4340, %v4310
        %v4342 = vadd.f32 %v4341, %v4311
        %v4343 = vadd.f32 %v4342, %v4312
        %v4344 = vadd.f32 %v4343, %v4313
        %v4345 = vadd.f32 %v4344, %v4314
        %v4346 = vadd.f32 %v4345, %v4315
        %v4347 = vadd.f32 %v4346, %v4316
        %v4348 = vadd.f32 %v4347, %v4317
        %v4349 = vadd.f32 %v4348, %v4318
        %v4350 = vadd.f32 %v4349, %v4319
        %v4351 = vadd.f32 %v4350, %v4320
        %v4352 = vadd.f32 %v4351, %v4321
        %v4353 = vadd.f32 %v4352, %v4322
        %v4354 = vadd.f32 %v4353, %v4323
        %v4355 = vadd.f32 %v4354, %v4324
        %v4356 = vadd.f32 %v4355, %v4325
        %v4357 = vadd.f32 %v4356, %v4326
        %v4358 = vadd.f32 %v4357, %v4327
        %v4359 = vadd.f32 %v4358, %v4328
        %v4360 = vadd.f32 %v4359, %v4329
        %v4361 = vadd.f32 %v4360, %v4330
        %v4362 = vadd.f32 %v4361, %v4331
        %v4363 = vrot.slane %v4362, 4
        %v4364 = vadd.f32 %v4362, %v4363
        %v4365 = vrot.slane %v4364, 2
        %v4366 = vadd.f32 %v4364, %v4365
        %v4367 = vrot.slane %v4366, 1
        %v4368 = vadd.f32 %v4366, %v4367
        %4369 = vst [vmem:[%s258 + $0x1] sm:$0x1] %v4368
        %v4370 = vld [vmem:[%s1514] sm:$0xf]
        %v4371 = vld [vmem:[%s1514 + $0x4] sm:$0xf]
        %v4372 = vld [vmem:[%s1514 + $0x8] sm:$0x1]
        %v4373 = vld [vmem:[%s1514 + $0xc] sm:$0xf]
        %v4374 = vld [vmem:[%s1514 + $0x10] sm:$0xf]
        %v4375 = vld [vmem:[%s1514 + $0x14] sm:$0x1]
        %v4376 = vld [vmem:[%s1514 + $0x18] sm:$0xf]
        %v4377 = vld [vmem:[%s1514 + $0x1c] sm:$0xf]
        %v4378 = vld [vmem:[%s1514 + $0x20] sm:$0x1]
        %v4379 = vld [vmem:[%s1514 + $0x24] sm:$0xf]
        %v4380 = vld [vmem:[%s1514 + $0x28] sm:$0xf]
        %v4381 = vld [vmem:[%s1514 + $0x2c] sm:$0x1]
        %v4382 = vld [vmem:[%s1514 + $0x30] sm:$0xf]
        %v4383 = vld [vmem:[%s1514 + $0x34] sm:$0xf]
        %v4384 = vld [vmem:[%s1514 + $0x38] sm:$0x1]
        %v4385 = vld [vmem:[%s1514 + $0x3c] sm:$0xf]
        %v4386 = vld [vmem:[%s1514 + $0x40] sm:$0xf]
        %v4387 = vld [vmem:[%s1514 + $0x44] sm:$0x1]
        %v4388 = vld [vmem:[%s1514 + $0x48] sm:$0xf]
        %v4389 = vld [vmem:[%s1514 + $0x4c] sm:$0xf]
        %v4390 = vld [vmem:[%s1514 + $0x50] sm:$0x1]
        %v4391 = vld [vmem:[%s1514 + $0x54] sm:$0xf]
        %v4392 = vld [vmem:[%s1514 + $0x58] sm:$0xf]
        %v4393 = vld [vmem:[%s1514 + $0x5c] sm:$0x1]
        %v4394 = vld [vmem:[%s1514 + $0x60] sm:$0xf]
        %v4395 = vld [vmem:[%s1514 + $0x64] sm:$0xf]
        %v4396 = vld [vmem:[%s1514 + $0x68] sm:$0x1]
        %v4397 = vld [vmem:[%s1514 + $0x6c] sm:$0xf]
        %v4398 = vld [vmem:[%s1514 + $0x70] sm:$0xf]
        %v4399 = vld [vmem:[%s1514 + $0x74] sm:$0x1]
        %v4400 = vld [vmem:[%s1514 + $0x78] sm:$0xf]
        %v4401 = vld [vmem:[%s1514 + $0x7c] sm:$0xf]
        %v4402 = vld [vmem:[%s1514 + $0x80] sm:$0x1]
        %v4403 = vld [vmem:[%s1514 + $0x84] sm:$0xf]
        %v4404 = vld [vmem:[%s1514 + $0x88] sm:$0xf]
        %v4405 = vld [vmem:[%s1514 + $0x8c] sm:$0x1]
        %v4406 = vld [vmem:[%s1514 + $0x90] sm:$0xf]
        %v4407 = vld [vmem:[%s1514 + $0x94] sm:$0xf]
        %v4408 = vld [vmem:[%s1514 + $0x98] sm:$0x1]
        %v4409 = vld [vmem:[%s1514 + $0x9c] sm:$0xf]
        %v4410 = vld [vmem:[%s1514 + $0xa0] sm:$0xf]
        %v4411 = vld [vmem:[%s1514 + $0xa4] sm:$0x1]
        %v4412 = vld [vmem:[%s1514 + $0xa8] sm:$0xf]
        %v4413 = vld [vmem:[%s1514 + $0xac] sm:$0xf]
        %v4414 = vld [vmem:[%s1514 + $0xb0] sm:$0x1]
        %v4415 = vld [vmem:[%s1514 + $0xb4] sm:$0xf]
        %v4416 = vld [vmem:[%s1514 + $0xb8] sm:$0xf]
        %v4417 = vld [vmem:[%s1514 + $0xbc] sm:$0x1]
        %v4419 = vshrl.u32 %v4370, 16
        %v4421 = vrot.slane %v4419, 4
        %v4422 = vshll.u32 %v4370, 16
        %v4424 = vrot.slane %v4422, 5
        %v4425 = vor.u32 %v4421, %v4424
        %v4426 = vrot.slane %v4425, 4
        %v4428 = vshll.u32 %v4371, 16
        %v4430 = vrot.slane %v4428, 5
        %v4431 = vsel %vm330, %v4426, %v4430
        %v4432 = vshrl.u32 %v4371, 16
        %v4434 = vrot.slane %v4432, 4
        %v4435 = vor.u32 %v4434, %v4430
        %v4436 = vrot.slane %v4435, 4
        %v4438 = vshll.u32 %v4372, 16
        %v4440 = vrot.slane %v4438, 5
        %v4441 = vsel %vm330, %v4436, %v4440
        %v4443 = vshrl.u32 %v4373, 16
        %v4445 = vrot.slane %v4443, 4
        %v4446 = vshll.u32 %v4373, 16
        %v4448 = vrot.slane %v4446, 5
        %v4449 = vor.u32 %v4445, %v4448
        %v4450 = vrot.slane %v4449, 4
        %v4452 = vshll.u32 %v4374, 16
        %v4454 = vrot.slane %v4452, 5
        %v4455 = vsel %vm330, %v4450, %v4454
        %v4456 = vshrl.u32 %v4374, 16
        %v4458 = vrot.slane %v4456, 4
        %v4459 = vor.u32 %v4458, %v4454
        %v4460 = vrot.slane %v4459, 4
        %v4462 = vshll.u32 %v4375, 16
        %v4464 = vrot.slane %v4462, 5
        %v4465 = vsel %vm330, %v4460, %v4464
        %v4467 = vshrl.u32 %v4376, 16
        %v4469 = vrot.slane %v4467, 4
        %v4470 = vshll.u32 %v4376, 16
        %v4472 = vrot.slane %v4470, 5
        %v4473 = vor.u32 %v4469, %v4472
        %v4474 = vrot.slane %v4473, 4
        %v4476 = vshll.u32 %v4377, 16
        %v4478 = vrot.slane %v4476, 5
        %v4479 = vsel %vm330, %v4474, %v4478
        %v4480 = vshrl.u32 %v4377, 16
        %v4482 = vrot.slane %v4480, 4
        %v4483 = vor.u32 %v4482, %v4478
        %v4484 = vrot.slane %v4483, 4
        %v4486 = vshll.u32 %v4378, 16
        %v4488 = vrot.slane %v4486, 5
        %v4489 = vsel %vm330, %v4484, %v4488
        %v4491 = vshrl.u32 %v4379, 16
        %v4493 = vrot.slane %v4491, 4
        %v4494 = vshll.u32 %v4379, 16
        %v4496 = vrot.slane %v4494, 5
        %v4497 = vor.u32 %v4493, %v4496
        %v4498 = vrot.slane %v4497, 4
        %v4500 = vshll.u32 %v4380, 16
        %v4502 = vrot.slane %v4500, 5
        %v4503 = vsel %vm330, %v4498, %v4502
        %v4504 = vshrl.u32 %v4380, 16
        %v4506 = vrot.slane %v4504, 4
        %v4507 = vor.u32 %v4506, %v4502
        %v4508 = vrot.slane %v4507, 4
        %v4510 = vshll.u32 %v4381, 16
        %v4512 = vrot.slane %v4510, 5
        %v4513 = vsel %vm330, %v4508, %v4512
        %v4515 = vshrl.u32 %v4382, 16
        %v4517 = vrot.slane %v4515, 4
        %v4518 = vshll.u32 %v4382, 16
        %v4520 = vrot.slane %v4518, 5
        %v4521 = vor.u32 %v4517, %v4520
        %v4522 = vrot.slane %v4521, 4
        %v4524 = vshll.u32 %v4383, 16
        %v4526 = vrot.slane %v4524, 5
        %v4527 = vsel %vm330, %v4522, %v4526
        %v4528 = vshrl.u32 %v4383, 16
        %v4530 = vrot.slane %v4528, 4
        %v4531 = vor.u32 %v4530, %v4526
        %v4532 = vrot.slane %v4531, 4
        %v4534 = vshll.u32 %v4384, 16
        %v4536 = vrot.slane %v4534, 5
        %v4537 = vsel %vm330, %v4532, %v4536
        %v4539 = vshrl.u32 %v4385, 16
        %v4541 = vrot.slane %v4539, 4
        %v4542 = vshll.u32 %v4385, 16
        %v4544 = vrot.slane %v4542, 5
        %v4545 = vor.u32 %v4541, %v4544
        %v4546 = vrot.slane %v4545, 4
        %v4548 = vshll.u32 %v4386, 16
        %v4550 = vrot.slane %v4548, 5
        %v4551 = vsel %vm330, %v4546, %v4550
        %v4552 = vshrl.u32 %v4386, 16
        %v4554 = vrot.slane %v4552, 4
        %v4555 = vor.u32 %v4554, %v4550
        %v4556 = vrot.slane %v4555, 4
        %v4558 = vshll.u32 %v4387, 16
        %v4560 = vrot.slane %v4558, 5
        %v4561 = vsel %vm330, %v4556, %v4560
        %v4563 = vshrl.u32 %v4388, 16
        %v4565 = vrot.slane %v4563, 4
        %v4566 = vshll.u32 %v4388, 16
        %v4568 = vrot.slane %v4566, 5
        %v4569 = vor.u32 %v4565, %v4568
        %v4570 = vrot.slane %v4569, 4
        %v4572 = vshll.u32 %v4389, 16
        %v4574 = vrot.slane %v4572, 5
        %v4575 = vsel %vm330, %v4570, %v4574
        %v4576 = vshrl.u32 %v4389, 16
        %v4578 = vrot.slane %v4576, 4
        %v4579 = vor.u32 %v4578, %v4574
        %v4580 = vrot.slane %v4579, 4
        %v4582 = vshll.u32 %v4390, 16
        %v4584 = vrot.slane %v4582, 5
        %v4585 = vsel %vm330, %v4580, %v4584
        %v4587 = vshrl.u32 %v4391, 16
        %v4589 = vrot.slane %v4587, 4
        %v4590 = vshll.u32 %v4391, 16
        %v4592 = vrot.slane %v4590, 5
        %v4593 = vor.u32 %v4589, %v4592
        %v4594 = vrot.slane %v4593, 4
        %v4596 = vshll.u32 %v4392, 16
        %v4598 = vrot.slane %v4596, 5
        %v4599 = vsel %vm330, %v4594, %v4598
        %v4600 = vshrl.u32 %v4392, 16
        %v4602 = vrot.slane %v4600, 4
        %v4603 = vor.u32 %v4602, %v4598
        %v4604 = vrot.slane %v4603, 4
        %v4606 = vshll.u32 %v4393, 16
        %v4608 = vrot.slane %v4606, 5
        %v4609 = vsel %vm330, %v4604, %v4608
        %v4611 = vshrl.u32 %v4394, 16
        %v4613 = vrot.slane %v4611, 4
        %v4614 = vshll.u32 %v4394, 16
        %v4616 = vrot.slane %v4614, 5
        %v4617 = vor.u32 %v4613, %v4616
        %v4618 = vrot.slane %v4617, 4
        %v4620 = vshll.u32 %v4395, 16
        %v4622 = vrot.slane %v4620, 5
        %v4623 = vsel %vm330, %v4618, %v4622
        %v4624 = vshrl.u32 %v4395, 16
        %v4626 = vrot.slane %v4624, 4
        %v4627 = vor.u32 %v4626, %v4622
        %v4628 = vrot.slane %v4627, 4
        %v4630 = vshll.u32 %v4396, 16
        %v4632 = vrot.slane %v4630, 5
        %v4633 = vsel %vm330, %v4628, %v4632
        %v4635 = vshrl.u32 %v4397, 16
        %v4637 = vrot.slane %v4635, 4
        %v4638 = vshll.u32 %v4397, 16
        %v4640 = vrot.slane %v4638, 5
        %v4641 = vor.u32 %v4637, %v4640
        %v4642 = vrot.slane %v4641, 4
        %v4644 = vshll.u32 %v4398, 16
        %v4646 = vrot.slane %v4644, 5
        %v4647 = vsel %vm330, %v4642, %v4646
        %v4648 = vshrl.u32 %v4398, 16
        %v4650 = vrot.slane %v4648, 4
        %v4651 = vor.u32 %v4650, %v4646
        %v4652 = vrot.slane %v4651, 4
        %v4654 = vshll.u32 %v4399, 16
        %v4656 = vrot.slane %v4654, 5
        %v4657 = vsel %vm330, %v4652, %v4656
        %v4659 = vshrl.u32 %v4400, 16
        %v4661 = vrot.slane %v4659, 4
        %v4662 = vshll.u32 %v4400, 16
        %v4664 = vrot.slane %v4662, 5
        %v4665 = vor.u32 %v4661, %v4664
        %v4666 = vrot.slane %v4665, 4
        %v4668 = vshll.u32 %v4401, 16
        %v4670 = vrot.slane %v4668, 5
        %v4671 = vsel %vm330, %v4666, %v4670
        %v4672 = vshrl.u32 %v4401, 16
        %v4674 = vrot.slane %v4672, 4
        %v4675 = vor.u32 %v4674, %v4670
        %v4676 = vrot.slane %v4675, 4
        %v4678 = vshll.u32 %v4402, 16
        %v4680 = vrot.slane %v4678, 5
        %v4681 = vsel %vm330, %v4676, %v4680
        %v4683 = vshrl.u32 %v4403, 16
        %v4685 = vrot.slane %v4683, 4
        %v4686 = vshll.u32 %v4403, 16
        %v4688 = vrot.slane %v4686, 5
        %v4689 = vor.u32 %v4685, %v4688
        %v4690 = vrot.slane %v4689, 4
        %v4692 = vshll.u32 %v4404, 16
        %v4694 = vrot.slane %v4692, 5
        %v4695 = vsel %vm330, %v4690, %v4694
        %v4696 = vshrl.u32 %v4404, 16
        %v4698 = vrot.slane %v4696, 4
        %v4699 = vor.u32 %v4698, %v4694
        %v4700 = vrot.slane %v4699, 4
        %v4702 = vshll.u32 %v4405, 16
        %v4704 = vrot.slane %v4702, 5
        %v4705 = vsel %vm330, %v4700, %v4704
        %v4707 = vshrl.u32 %v4406, 16
        %v4709 = vrot.slane %v4707, 4
        %v4710 = vshll.u32 %v4406, 16
        %v4712 = vrot.slane %v4710, 5
        %v4713 = vor.u32 %v4709, %v4712
        %v4714 = vrot.slane %v4713, 4
        %v4716 = vshll.u32 %v4407, 16
        %v4718 = vrot.slane %v4716, 5
        %v4719 = vsel %vm330, %v4714, %v4718
        %v4720 = vshrl.u32 %v4407, 16
        %v4722 = vrot.slane %v4720, 4
        %v4723 = vor.u32 %v4722, %v4718
        %v4724 = vrot.slane %v4723, 4
        %v4726 = vshll.u32 %v4408, 16
        %v4728 = vrot.slane %v4726, 5
        %v4729 = vsel %vm330, %v4724, %v4728
        %v4731 = vshrl.u32 %v4409, 16
        %v4733 = vrot.slane %v4731, 4
        %v4734 = vshll.u32 %v4409, 16
        %v4736 = vrot.slane %v4734, 5
        %v4737 = vor.u32 %v4733, %v4736
        %v4738 = vrot.slane %v4737, 4
        %v4740 = vshll.u32 %v4410, 16
        %v4742 = vrot.slane %v4740, 5
        %v4743 = vsel %vm330, %v4738, %v4742
        %v4744 = vshrl.u32 %v4410, 16
        %v4746 = vrot.slane %v4744, 4
        %v4747 = vor.u32 %v4746, %v4742
        %v4748 = vrot.slane %v4747, 4
        %v4750 = vshll.u32 %v4411, 16
        %v4752 = vrot.slane %v4750, 5
        %v4753 = vsel %vm330, %v4748, %v4752
        %v4755 = vshrl.u32 %v4412, 16
        %v4757 = vrot.slane %v4755, 4
        %v4758 = vshll.u32 %v4412, 16
        %v4760 = vrot.slane %v4758, 5
        %v4761 = vor.u32 %v4757, %v4760
        %v4762 = vrot.slane %v4761, 4
        %v4764 = vshll.u32 %v4413, 16
        %v4766 = vrot.slane %v4764, 5
        %v4767 = vsel %vm330, %v4762, %v4766
        %v4768 = vshrl.u32 %v4413, 16
        %v4770 = vrot.slane %v4768, 4
        %v4771 = vor.u32 %v4770, %v4766
        %v4772 = vrot.slane %v4771, 4
        %v4774 = vshll.u32 %v4414, 16
        %v4776 = vrot.slane %v4774, 5
        %v4777 = vsel %vm330, %v4772, %v4776
        %v4779 = vshrl.u32 %v4415, 16
        %v4781 = vrot.slane %v4779, 4
        %v4782 = vshll.u32 %v4415, 16
        %v4784 = vrot.slane %v4782, 5
        %v4785 = vor.u32 %v4781, %v4784
        %v4786 = vrot.slane %v4785, 4
        %v4788 = vshll.u32 %v4416, 16
        %v4790 = vrot.slane %v4788, 5
        %v4791 = vsel %vm330, %v4786, %v4790
        %v4792 = vshrl.u32 %v4416, 16
        %v4794 = vrot.slane %v4792, 4
        %v4795 = vor.u32 %v4794, %v4790
        %v4796 = vrot.slane %v4795, 4
        %v4798 = vshll.u32 %v4417, 16
        %v4800 = vrot.slane %v4798, 5
        %v4801 = vsel %vm330, %v4796, %v4800
        %v4802 = vld [vmem:[%s2] sm:$0x3]
        %v4803 = vunpack.c.l.b16 %v4431
        %v4804 = vunpack.c.l.b16 %v4441
        %v4805 = vunpack.c.l.b16 %v4455
        %v4806 = vunpack.c.l.b16 %v4465
        %v4807 = vunpack.c.l.b16 %v4479
        %v4808 = vunpack.c.l.b16 %v4489
        %v4809 = vunpack.c.l.b16 %v4503
        %v4810 = vunpack.c.l.b16 %v4513
        %v4811 = vunpack.c.l.b16 %v4527
        %v4812 = vunpack.c.l.b16 %v4537
        %v4813 = vunpack.c.l.b16 %v4551
        %v4814 = vunpack.c.l.b16 %v4561
        %v4815 = vunpack.c.l.b16 %v4575
        %v4816 = vunpack.c.l.b16 %v4585
        %v4817 = vunpack.c.l.b16 %v4599
        %v4818 = vunpack.c.l.b16 %v4609
        %v4819 = vunpack.c.l.b16 %v4623
        %v4820 = vunpack.c.l.b16 %v4633
        %v4821 = vunpack.c.l.b16 %v4647
        %v4822 = vunpack.c.l.b16 %v4657
        %v4823 = vunpack.c.l.b16 %v4671
        %v4824 = vunpack.c.l.b16 %v4681
        %v4825 = vunpack.c.l.b16 %v4695
        %v4826 = vunpack.c.l.b16 %v4705
        %v4827 = vunpack.c.l.b16 %v4719
        %v4828 = vunpack.c.l.b16 %v4729
        %v4829 = vunpack.c.l.b16 %v4743
        %v4830 = vunpack.c.l.b16 %v4753
        %v4831 = vunpack.c.l.b16 %v4767
        %v4832 = vunpack.c.l.b16 %v4777
        %v4833 = vunpack.c.l.b16 %v4791
        %v4834 = vunpack.c.l.b16 %v4801
        %v4835 = vpack.c.b16 %v4804, %v4803
        %v4836 = vpack.c.b16 %v4806, %v4805
        %v4837 = vpack.c.b16 %v4808, %v4807
        %v4838 = vpack.c.b16 %v4810, %v4809
        %v4839 = vpack.c.b16 %v4812, %v4811
        %v4840 = vpack.c.b16 %v4814, %v4813
        %v4841 = vpack.c.b16 %v4816, %v4815
        %v4842 = vpack.c.b16 %v4818, %v4817
        %v4843 = vpack.c.b16 %v4820, %v4819
        %v4844 = vpack.c.b16 %v4822, %v4821
        %v4845 = vpack.c.b16 %v4824, %v4823
        %v4846 = vpack.c.b16 %v4826, %v4825
        %v4847 = vpack.c.b16 %v4828, %v4827
        %v4848 = vpack.c.b16 %v4830, %v4829
        %v4849 = vpack.c.b16 %v4832, %v4831
        %v4850 = vpack.c.b16 %v4834, %v4833
        %v4852 = vsel %vm768, %v4835, 0
        %v4855 = vsel %vm768, %v4836, 0
        %v4858 = vsel %vm768, %v4837, 0
        %v4861 = vsel %vm768, %v4838, 0
        %v4864 = vsel %vm768, %v4839, 0
        %v4867 = vsel %vm768, %v4840, 0
        %v4870 = vsel %vm768, %v4841, 0
        %v4873 = vsel %vm768, %v4842, 0
        %v4876 = vsel %vm768, %v4843, 0
        %v4879 = vsel %vm768, %v4844, 0
        %v4882 = vsel %vm768, %v4845, 0
        %v4885 = vsel %vm768, %v4846, 0
        %v4888 = vsel %vm768, %v4847, 0
        %v4891 = vsel %vm768, %v4848, 0
        %v4894 = vsel %vm768, %v4849, 0
        %v4897 = vsel %vm768, %v4850, 0
        %v4900 = vsel %vm817, %v4802, 0
        %4902 = vmatpush.bf16.msra.mxu0 0
        %4903 = vmatpush.bf16.msra.mxu0 0
        %4904 = vmatpush.bf16.msra.mxu0 0
        %4905 = vmatpush.bf16.msra.mxu0 0
        %4906 = vmatpush.bf16.msra.mxu0 0
        %4907 = vmatpush.bf16.msra.mxu0 0
        %4908 = vmatpush.bf16.msra.mxu0 0
        %4909 = vmatpush.bf16.msra.mxu0 %v4900
        %4910 = vmatmul.bf16.gmra.mxu0 %v4852
        %v4911 = vpop.f32.mrf.mxu0
        %v4912 = vadd.f32 0.0, %v4911
        %v4913 = vpop.f32.mrf.mxu0
        %v4914 = vadd.f32 0.0, %v4913
        %4915 = vmatmul.bf16.gmra.mxu0 %v4855
        %v4916 = vpop.f32.mrf.mxu0
        %v4917 = vadd.f32 0.0, %v4916
        %v4918 = vpop.f32.mrf.mxu0
        %v4919 = vadd.f32 0.0, %v4918
        %4920 = vmatmul.bf16.gmra.mxu0 %v4858
        %v4921 = vpop.f32.mrf.mxu0
        %v4922 = vadd.f32 0.0, %v4921
        %v4923 = vpop.f32.mrf.mxu0
        %v4924 = vadd.f32 0.0, %v4923
        %4925 = vmatmul.bf16.gmra.mxu0 %v4861
        %v4926 = vpop.f32.mrf.mxu0
        %v4927 = vadd.f32 0.0, %v4926
        %v4928 = vpop.f32.mrf.mxu0
        %v4929 = vadd.f32 0.0, %v4928
        %4930 = vmatmul.bf16.gmra.mxu0 %v4864
        %v4931 = vpop.f32.mrf.mxu0
        %v4932 = vadd.f32 0.0, %v4931
        %v4933 = vpop.f32.mrf.mxu0
        %v4934 = vadd.f32 0.0, %v4933
        %4935 = vmatmul.bf16.gmra.mxu0 %v4867
        %v4936 = vpop.f32.mrf.mxu0
        %v4937 = vadd.f32 0.0, %v4936
        %v4938 = vpop.f32.mrf.mxu0
        %v4939 = vadd.f32 0.0, %v4938
        %4940 = vmatmul.bf16.gmra.mxu0 %v4870
        %v4941 = vpop.f32.mrf.mxu0
        %v4942 = vadd.f32 0.0, %v4941
        %v4943 = vpop.f32.mrf.mxu0
        %v4944 = vadd.f32 0.0, %v4943
        %4945 = vmatmul.bf16.gmra.mxu0 %v4873
        %v4946 = vpop.f32.mrf.mxu0
        %v4947 = vadd.f32 0.0, %v4946
        %v4948 = vpop.f32.mrf.mxu0
        %v4949 = vadd.f32 0.0, %v4948
        %4950 = vmatmul.bf16.gmra.mxu0 %v4876
        %v4951 = vpop.f32.mrf.mxu0
        %v4952 = vadd.f32 0.0, %v4951
        %v4953 = vpop.f32.mrf.mxu0
        %v4954 = vadd.f32 0.0, %v4953
        %4955 = vmatmul.bf16.gmra.mxu0 %v4879
        %v4956 = vpop.f32.mrf.mxu0
        %v4957 = vadd.f32 0.0, %v4956
        %v4958 = vpop.f32.mrf.mxu0
        %v4959 = vadd.f32 0.0, %v4958
        %4960 = vmatmul.bf16.gmra.mxu0 %v4882
        %v4961 = vpop.f32.mrf.mxu0
        %v4962 = vadd.f32 0.0, %v4961
        %v4963 = vpop.f32.mrf.mxu0
        %v4964 = vadd.f32 0.0, %v4963
        %4965 = vmatmul.bf16.gmra.mxu0 %v4885
        %v4966 = vpop.f32.mrf.mxu0
        %v4967 = vadd.f32 0.0, %v4966
        %v4968 = vpop.f32.mrf.mxu0
        %v4969 = vadd.f32 0.0, %v4968
        %4970 = vmatmul.bf16.gmra.mxu0 %v4888
        %v4971 = vpop.f32.mrf.mxu0
        %v4972 = vadd.f32 0.0, %v4971
        %v4973 = vpop.f32.mrf.mxu0
        %v4974 = vadd.f32 0.0, %v4973
        %4975 = vmatmul.bf16.gmra.mxu0 %v4891
        %v4976 = vpop.f32.mrf.mxu0
        %v4977 = vadd.f32 0.0, %v4976
        %v4978 = vpop.f32.mrf.mxu0
        %v4979 = vadd.f32 0.0, %v4978
        %4980 = vmatmul.bf16.gmra.mxu0 %v4894
        %v4981 = vpop.f32.mrf.mxu0
        %v4982 = vadd.f32 0.0, %v4981
        %v4983 = vpop.f32.mrf.mxu0
        %v4984 = vadd.f32 0.0, %v4983
        %4985 = vmatmul.bf16.gmra.mxu0 %v4897
        %v4986 = vpop.f32.mrf.mxu0
        %v4987 = vadd.f32 0.0, %v4986
        %v4988 = vpop.f32.mrf.mxu0
        %v4989 = vadd.f32 0.0, %v4988
        %4990 = vdwg.mxu0
        %v4991 = vpack.c.bf16 %v4912, %v4912
        %v4992 = vpack.c.bf16 %v4914, %v4914
        %v4993 = vpack.c.bf16 %v4917, %v4917
        %v4994 = vpack.c.bf16 %v4919, %v4919
        %v4995 = vpack.c.bf16 %v4922, %v4922
        %v4996 = vpack.c.bf16 %v4924, %v4924
        %v4997 = vpack.c.bf16 %v4927, %v4927
        %v4998 = vpack.c.bf16 %v4929, %v4929
        %v4999 = vpack.c.bf16 %v4932, %v4932
        %v5000 = vpack.c.bf16 %v4934, %v4934
        %v5001 = vpack.c.bf16 %v4937, %v4937
        %v5002 = vpack.c.bf16 %v4939, %v4939
        %v5003 = vpack.c.bf16 %v4942, %v4942
        %v5004 = vpack.c.bf16 %v4944, %v4944
        %v5005 = vpack.c.bf16 %v4947, %v4947
        %v5006 = vpack.c.bf16 %v4949, %v4949
        %v5007 = vpack.c.bf16 %v4952, %v4952
        %v5008 = vpack.c.bf16 %v4954, %v4954
        %v5009 = vpack.c.bf16 %v4957, %v4957
        %v5010 = vpack.c.bf16 %v4959, %v4959
        %v5011 = vpack.c.bf16 %v4962, %v4962
        %v5012 = vpack.c.bf16 %v4964, %v4964
        %v5013 = vpack.c.bf16 %v4967, %v4967
        %v5014 = vpack.c.bf16 %v4969, %v4969
        %v5015 = vpack.c.bf16 %v4972, %v4972
        %v5016 = vpack.c.bf16 %v4974, %v4974
        %v5017 = vpack.c.bf16 %v4977, %v4977
        %v5018 = vpack.c.bf16 %v4979, %v4979
        %v5019 = vpack.c.bf16 %v4982, %v4982
        %v5020 = vpack.c.bf16 %v4984, %v4984
        %v5021 = vpack.c.bf16 %v4987, %v4987
        %v5022 = vpack.c.bf16 %v4989, %v4989
        %5023 = vst [vmem:[%s265] sm:$0xf] %v4991
        %5024 = vst [vmem:[%s265 + $0x4] sm:$0xf] %v4992
        %5025 = vst [vmem:[%s265 + $0x8] sm:$0xf] %v4993
        %5026 = vst [vmem:[%s265 + $0xc] sm:$0xf] %v4994
        %5027 = vst [vmem:[%s265 + $0x10] sm:$0xf] %v4995
        %5028 = vst [vmem:[%s265 + $0x14] sm:$0xf] %v4996
        %5029 = vst [vmem:[%s265 + $0x18] sm:$0xf] %v4997
        %5030 = vst [vmem:[%s265 + $0x1c] sm:$0xf] %v4998
        %5031 = vst [vmem:[%s265 + $0x20] sm:$0xf] %v4999
        %5032 = vst [vmem:[%s265 + $0x24] sm:$0xf] %v5000
        %5033 = vst [vmem:[%s265 + $0x28] sm:$0xf] %v5001
        %5034 = vst [vmem:[%s265 + $0x2c] sm:$0xf] %v5002
        %5035 = vst [vmem:[%s265 + $0x30] sm:$0xf] %v5003
        %5036 = vst [vmem:[%s265 + $0x34] sm:$0xf] %v5004
        %5037 = vst [vmem:[%s265 + $0x38] sm:$0xf] %v5005
        %5038 = vst [vmem:[%s265 + $0x3c] sm:$0xf] %v5006
        %5039 = vst [vmem:[%s265 + $0x40] sm:$0xf] %v5007
        %5040 = vst [vmem:[%s265 + $0x44] sm:$0xf] %v5008
        %5041 = vst [vmem:[%s265 + $0x48] sm:$0xf] %v5009
        %5042 = vst [vmem:[%s265 + $0x4c] sm:$0xf] %v5010
        %5043 = vst [vmem:[%s265 + $0x50] sm:$0xf] %v5011
        %5044 = vst [vmem:[%s265 + $0x54] sm:$0xf] %v5012
        %5045 = vst [vmem:[%s265 + $0x58] sm:$0xf] %v5013
        %5046 = vst [vmem:[%s265 + $0x5c] sm:$0xf] %v5014
        %5047 = vst [vmem:[%s265 + $0x60] sm:$0xf] %v5015
        %5048 = vst [vmem:[%s265 + $0x64] sm:$0xf] %v5016
        %5049 = vst [vmem:[%s265 + $0x68] sm:$0xf] %v5017
        %5050 = vst [vmem:[%s265 + $0x6c] sm:$0xf] %v5018
        %5051 = vst [vmem:[%s265 + $0x70] sm:$0xf] %v5019
        %5052 = vst [vmem:[%s265 + $0x74] sm:$0xf] %v5020
        %5053 = vst [vmem:[%s265 + $0x78] sm:$0xf] %v5021
        %5054 = vst [vmem:[%s265 + $0x7c] sm:$0xf] %v5022
        %v5055 = vadd.f32 %v4912, %v4914
        %v5056 = vadd.f32 %v5055, %v4917
        %v5057 = vadd.f32 %v5056, %v4919
        %v5058 = vadd.f32 %v5057, %v4922
        %v5059 = vadd.f32 %v5058, %v4924
        %v5060 = vadd.f32 %v5059, %v4927
        %v5061 = vadd.f32 %v5060, %v4929
        %v5062 = vadd.f32 %v5061, %v4932
        %v5063 = vadd.f32 %v5062, %v4934
        %v5064 = vadd.f32 %v5063, %v4937
        %v5065 = vadd.f32 %v5064, %v4939
        %v5066 = vadd.f32 %v5065, %v4942
        %v5067 = vadd.f32 %v5066, %v4944
        %v5068 = vadd.f32 %v5067, %v4947
        %v5069 = vadd.f32 %v5068, %v4949
        %v5070 = vadd.f32 %v5069, %v4952
        %v5071 = vadd.f32 %v5070, %v4954
        %v5072 = vadd.f32 %v5071, %v4957
        %v5073 = vadd.f32 %v5072, %v4959
        %v5074 = vadd.f32 %v5073, %v4962
        %v5075 = vadd.f32 %v5074, %v4964
        %v5076 = vadd.f32 %v5075, %v4967
        %v5077 = vadd.f32 %v5076, %v4969
        %v5078 = vadd.f32 %v5077, %v4972
        %v5079 = vadd.f32 %v5078, %v4974
        %v5080 = vadd.f32 %v5079, %v4977
        %v5081 = vadd.f32 %v5080, %v4979
        %v5082 = vadd.f32 %v5081, %v4982
        %v5083 = vadd.f32 %v5082, %v4984
        %v5084 = vadd.f32 %v5083, %v4987
        %v5085 = vadd.f32 %v5084, %v4989
        %v5086 = vrot.slane %v5085, 4
        %v5087 = vadd.f32 %v5085, %v5086
        %v5088 = vrot.slane %v5087, 2
        %v5089 = vadd.f32 %v5087, %v5088
        %v5090 = vrot.slane %v5089, 1
        %v5091 = vadd.f32 %v5089, %v5090
        %5092 = vst [vmem:[%s272] sm:$0x1] %v5091
        %v5093 = vmul.f32 %v4912, %v4912
        %v5094 = vmul.f32 %v4914, %v4914
        %v5095 = vmul.f32 %v4917, %v4917
        %v5096 = vmul.f32 %v4919, %v4919
        %v5097 = vmul.f32 %v4922, %v4922
        %v5098 = vmul.f32 %v4924, %v4924
        %v5099 = vmul.f32 %v4927, %v4927
        %v5100 = vmul.f32 %v4929, %v4929
        %v5101 = vmul.f32 %v4932, %v4932
        %v5102 = vmul.f32 %v4934, %v4934
        %v5103 = vmul.f32 %v4937, %v4937
        %v5104 = vmul.f32 %v4939, %v4939
        %v5105 = vmul.f32 %v4942, %v4942
        %v5106 = vmul.f32 %v4944, %v4944
        %v5107 = vmul.f32 %v4947, %v4947
        %v5108 = vmul.f32 %v4949, %v4949
        %v5109 = vmul.f32 %v4952, %v4952
        %v5110 = vmul.f32 %v4954, %v4954
        %v5111 = vmul.f32 %v4957, %v4957
        %v5112 = vmul.f32 %v4959, %v4959
        %v5113 = vmul.f32 %v4962, %v4962
        %v5114 = vmul.f32 %v4964, %v4964
        %v5115 = vmul.f32 %v4967, %v4967
        %v5116 = vmul.f32 %v4969, %v4969
        %v5117 = vmul.f32 %v4972, %v4972
        %v5118 = vmul.f32 %v4974, %v4974
        %v5119 = vmul.f32 %v4977, %v4977
        %v5120 = vmul.f32 %v4979, %v4979
        %v5121 = vmul.f32 %v4982, %v4982
        %v5122 = vmul.f32 %v4984, %v4984
        %v5123 = vmul.f32 %v4987, %v4987
        %v5124 = vmul.f32 %v4989, %v4989
        %v5125 = vadd.f32 %v5093, %v5094
        %v5126 = vadd.f32 %v5125, %v5095
        %v5127 = vadd.f32 %v5126, %v5096
        %v5128 = vadd.f32 %v5127, %v5097
        %v5129 = vadd.f32 %v5128, %v5098
        %v5130 = vadd.f32 %v5129, %v5099
        %v5131 = vadd.f32 %v5130, %v5100
        %v5132 = vadd.f32 %v5131, %v5101
        %v5133 = vadd.f32 %v5132, %v5102
        %v5134 = vadd.f32 %v5133, %v5103
        %v5135 = vadd.f32 %v5134, %v5104
        %v5136 = vadd.f32 %v5135, %v5105
        %v5137 = vadd.f32 %v5136, %v5106
        %v5138 = vadd.f32 %v5137, %v5107
        %v5139 = vadd.f32 %v5138, %v5108
        %v5140 = vadd.f32 %v5139, %v5109
        %v5141 = vadd.f32 %v5140, %v5110
        %v5142 = vadd.f32 %v5141, %v5111
        %v5143 = vadd.f32 %v5142, %v5112
        %v5144 = vadd.f32 %v5143, %v5113
        %v5145 = vadd.f32 %v5144, %v5114
        %v5146 = vadd.f32 %v5145, %v5115
        %v5147 = vadd.f32 %v5146, %v5116
        %v5148 = vadd.f32 %v5147, %v5117
        %v5149 = vadd.f32 %v5148, %v5118
        %v5150 = vadd.f32 %v5149, %v5119
        %v5151 = vadd.f32 %v5150, %v5120
        %v5152 = vadd.f32 %v5151, %v5121
        %v5153 = vadd.f32 %v5152, %v5122
        %v5154 = vadd.f32 %v5153, %v5123
        %v5155 = vadd.f32 %v5154, %v5124
        %v5156 = vrot.slane %v5155, 4
        %v5157 = vadd.f32 %v5155, %v5156
        %v5158 = vrot.slane %v5157, 2
        %v5159 = vadd.f32 %v5157, %v5158
        %v5160 = vrot.slane %v5159, 1
        %v5161 = vadd.f32 %v5159, %v5160
        %5162 = vst [vmem:[%s272 + $0x1] sm:$0x1] %v5161
        %s5163 = sand.u32 %s103, 1
        %s5164 = scalar_lea.sflag [#allocation3], %s5163
        %s5165 = sand.u32 %s103, 1
        %s5166 = smul.addr %s5165, 128
        %s5167 = scalar_lea.vmem [#allocation2], %s5166
        %s5168 = sand.u32 %s27, 1
        %s5169 = scalar_lea.sflag [#allocation5], %s5168
        %s5170 = sand.u32 %s129, 1
        %s5171 = smul.addr %s5170, 2
        %s5172 = scalar_lea.vmem [#allocation4], %s5171
        %s5173 = sand.u32 %s27, 1
        %s5174 = scalar_lea.sflag [#allocation5], %s5173
        %s5175 = sand.u32 %s155, 1
        %s5176 = smul.addr %s5175, 128
        %s5177 = scalar_lea.vmem [#allocation6], %s5176
        %s5178 = sand.u32 %s181, 1
        %s5179 = scalar_lea.sflag [#allocation8], %s5178
        %s5180 = sand.u32 %s181, 1
        %s5181 = smul.addr %s5180, 2
        %s5182 = scalar_lea.vmem [#allocation7], %s5181
        // Predicated region
        $region33: #{tpu_custom_call.1} parent=31 // pred_check
          %p5183 = pneg %p113
        $region34: #{tpu_custom_call.1} parent=31 // pred_check_branch
          %5185 = sbr.rel (%p5183) target = $region36
        $region35: #{tpu_custom_call.1} parent=31 // pred_region
          %5187 = vsyncadd %s5164, 0
          %s5188 = smul.addr %s27, 32
          %s5189 = smul.addr %s5188, 4
          %s5190 = scalar_lea.hbm %s3, %s5189
          %s5191 = sshll.u32 %s5167, 4
          %s5192 = int_to_ptr.vmem [resolvable:$true] %s5191
          %s5193 = sshll.u32 %s5190, 4
          %s5194 = int_to_ptr.hbm [resolvable:$true] %s5193
          %5199 = dma.vmem_to_hbm [thread:$0]  %s5192, 2048, %s5194, %s5164, 64, 64, 4
        $region36: #{tpu_custom_call.1} parent=31 // pred_fallthru
          _
        // Predicated region
        $region37: #{tpu_custom_call.1} parent=31 // pred_check
          %p5200 = pneg %p139
        $region38: #{tpu_custom_call.1} parent=31 // pred_check_branch
          %5202 = sbr.rel (%p5200) target = $region40
        $region39: #{tpu_custom_call.1} parent=31 // pred_region
          %5204 = vsyncadd %s5169, 0
          %s5205 = smul.addr %s27, 2
          %s5206 = scalar_lea.hbm %s4, %s5205
          %s5208 = sshll.u32 %s5172, 4
          %s5209 = int_to_ptr.vmem [resolvable:$true] %s5208
          %s5210 = sshll.u32 %s5206, 4
          %s5211 = int_to_ptr.hbm [resolvable:$true] %s5210
          %5213 = dma.vmem_to_hbm [thread:$0]  %s5209, 32, %s5211, %s5169
        $region40: #{tpu_custom_call.1} parent=31 // pred_fallthru
          _
        // Predicated region
        $region41: #{tpu_custom_call.1} parent=31 // pred_check
          %p5214 = pneg %p165
        $region42: #{tpu_custom_call.1} parent=31 // pred_check_branch
          %5216 = sbr.rel (%p5214) target = $region44
        $region43: #{tpu_custom_call.1} parent=31 // pred_region
          %5218 = vsyncadd %s5174, 0
          %s5219 = smul.addr %s27, 32
          %s5220 = smul.addr %s5219, 4
          %s5221 = scalar_lea.hbm %s5, %s5220
          %s5222 = sshll.u32 %s5177, 4
          %s5223 = int_to_ptr.vmem [resolvable:$true] %s5222
          %s5224 = sshll.u32 %s5221, 4
          %s5225 = int_to_ptr.hbm [resolvable:$true] %s5224
          %5230 = dma.vmem_to_hbm [thread:$0]  %s5223, 2048, %s5225, %s5174, 64, 64, 4
        $region44: #{tpu_custom_call.1} parent=31 // pred_fallthru
          _
        // Predicated region
        $region45: #{tpu_custom_call.1} parent=31 // pred_check
          %p5231 = pneg %p191
        $region46: #{tpu_custom_call.1} parent=31 // pred_check_branch
          %5233 = sbr.rel (%p5231) target = $region48
        $region47: #{tpu_custom_call.1} parent=31 // pred_region
          %5235 = vsyncadd %s5179, 0
          %s5236 = smul.addr %s27, 2
          %s5237 = scalar_lea.hbm %s6, %s5236
          %s5239 = sshll.u32 %s5182, 4
          %s5240 = int_to_ptr.vmem [resolvable:$true] %s5239
          %s5241 = sshll.u32 %s5237, 4
          %s5242 = int_to_ptr.hbm [resolvable:$true] %s5241
          %5244 = dma.vmem_to_hbm [thread:$0]  %s5240, 32, %s5242, %s5179
        $region48: #{tpu_custom_call.1} parent=31 // pred_fallthru
          _
      $region32: #{tpu_custom_call.1} parent=5 // pred_fallthru
        _
      %p5245 = scmp.le.s32.totalorder 2, %s22
      // Predicated region
      $region49: #{tpu_custom_call.1} parent=5 // pred_check
        %p5246 = pneg %p5245
      $region50: #{tpu_custom_call.1} parent=5 // pred_check_branch
        %5248 = sbr.rel (%p5246) target = $region52
      $region51: #{tpu_custom_call.1} parent=5 // pred_region
        %s5249 = ssub.s32 %s22, 2
        // Predicated region
        $region53: #{tpu_custom_call.1} parent=51 // pred_check
          %p5250 = pneg %p119
        $region54: #{tpu_custom_call.1} parent=51 // pred_check_branch
          %5252 = sbr.rel (%p5250) target = $region56
        $region55: #{tpu_custom_call.1} parent=51 // pred_region
          %s5253 = sand.u32 %s104, 1
          %s5254 = scalar_lea.sflag [#allocation3], %s5253
          %s5255 = sand.u32 %s104, 1
          %s5256 = smul.addr %s5255, 128
          %s5257 = scalar_lea.vmem [#allocation2], %s5256
          %5259 = dma.done %s5254, 2048
        $region56: #{tpu_custom_call.1} parent=51 // pred_fallthru
          _
        // Predicated region
        $region57: #{tpu_custom_call.1} parent=51 // pred_check
          %p5260 = pneg %p145
        $region58: #{tpu_custom_call.1} parent=51 // pred_check_branch
          %5262 = sbr.rel (%p5260) target = $region60
        $region59: #{tpu_custom_call.1} parent=51 // pred_region
          %s5263 = sand.u32 %s28, 1
          %s5264 = scalar_lea.sflag [#allocation5], %s5263
          %s5265 = sand.u32 %s130, 1
          %s5266 = smul.addr %s5265, 2
          %s5267 = scalar_lea.vmem [#allocation4], %s5266
          %5269 = dma.done %s5264, 32
        $region60: #{tpu_custom_call.1} parent=51 // pred_fallthru
          _
        // Predicated region
        $region61: #{tpu_custom_call.1} parent=51 // pred_check
          %p5270 = pneg %p171
        $region62: #{tpu_custom_call.1} parent=51 // pred_check_branch
          %5272 = sbr.rel (%p5270) target = $region64
        $region63: #{tpu_custom_call.1} parent=51 // pred_region
          %s5273 = sand.u32 %s28, 1
          %s5274 = scalar_lea.sflag [#allocation5], %s5273
          %s5275 = sand.u32 %s156, 1
          %s5276 = smul.addr %s5275, 128
          %s5277 = scalar_lea.vmem [#allocation6], %s5276
          %5279 = dma.done %s5274, 2048
        $region64: #{tpu_custom_call.1} parent=51 // pred_fallthru
          _
        // Predicated region
        $region65: #{tpu_custom_call.1} parent=51 // pred_check
          %p5280 = pneg %p197
        $region66: #{tpu_custom_call.1} parent=51 // pred_check_branch
          %5282 = sbr.rel (%p5280) target = $region68
        $region67: #{tpu_custom_call.1} parent=51 // pred_region
          %s5283 = sand.u32 %s182, 1
          %s5284 = scalar_lea.sflag [#allocation8], %s5283
          %s5285 = sand.u32 %s182, 1
          %s5286 = smul.addr %s5285, 2
          %s5287 = scalar_lea.vmem [#allocation7], %s5286
          %5289 = dma.done %s5284, 32
        $region68: #{tpu_custom_call.1} parent=51 // pred_fallthru
          _
      $region52: #{tpu_custom_call.1} parent=5 // pred_fallthru
        _
    $region6: #{tpu_custom_call.1} parent=1 // loop_footer
      %s26 = sadd.s32 1, %s22
    $region7: #{tpu_custom_call.1} parent=1 // loop_footer_branch
      %21 = sbr.rel target = $region3
    $region8: #{tpu_custom_call.1} parent=1 // loop_exit
      _
    %5290 = vsyncpa [#allocation3], 1
    %s5291 = scalar_lea.sflag [#allocation3], 1
    %5292 = vsyncpa %s5291, 1
    %5293 = vsyncpa [#allocation5], 1
    %s5294 = scalar_lea.sflag [#allocation5], 1
    %5295 = vsyncpa %s5294, 1
    %5296 = vsyncpa [#allocation8], 1
    %s5297 = scalar_lea.sflag [#allocation8], 1
    %5298 = vsyncpa %s5297, 1

</llo_original>
